<compile_context>
chip_gen: v7x
topology: tpu7x:2x2x1
jax: 0.10.0
libtpu: 0.0.40
codegen_flags: <defaults>
</compile_context>

<pallas_src>
import functools

import jax
import jax.numpy as jnp
from jax import lax
from jax.experimental import pallas as pl
from jax.experimental.pallas import tpu as pltpu

MXU_DTYPE = jnp.bfloat16   # matmul operand dtype (accumulation is always f32)


# ----------------------------------------------------------------------------- helpers
def conv1d_ele_size(length, k, s, p, d):
    # mirrors helper.conv1d_ele_size
    return (length + 2 * p - d * (k - 1) - 1) // s + 1


def _round_up(n, m):
    return ((n + m - 1) // m) * m


def _im2col(xpad, K, L):
    """xpad: (B, C, L+K-1) padded input -> (K*C, B*L) im2col matrix.

    Rows are k-major / c-minor; columns are b-major / l-minor.  All shifting happens
    here in XLA so the Pallas kernels only see aligned slabs + matmuls.
    """
    cols = jnp.stack([xpad[:, :, k:k + L] for k in range(K)], axis=1)    # (B, K, C, L)
    KC = cols.shape[1] * cols.shape[2]
    return jnp.transpose(cols, (1, 2, 0, 3)).reshape(KC, -1)


# ----------------------------------------------------------------------------- conv kernel (matmul + bias + ReLU)
def matmul_bias_relu_kernel(w_ref, x_ref, b_ref, o_ref):
    # w: (M, Kc) bf16, x: (Kc, Npad) bf16, b: (M, 1) f32, o: (M, Npad) f32
    acc = jnp.dot(w_ref[...], x_ref[...], preferred_element_type=jnp.float32)
    o_ref[...] = jnp.maximum(acc + b_ref[...], 0.0)      # BasicConv1d ReLU (assumed)


def _conv_matmul(wm, rhs, bias, cout, npad):
    return pl.pallas_call(
        matmul_bias_relu_kernel,
        out_shape=jax.ShapeDtypeStruct((cout, npad), jnp.float32),
    )(wm, rhs, bias)


def prelstm_conv_time_major(x, w, b):
    # x: (B, Cin, L); w: (Cout, Cin, K); b: (Cout,).  stride=1, 'same' padding.
    # Returns time-major (T=Cout, B, Din=L) for the LSTM (free reshape, no HBM transpose).
    B, Cin, L = x.shape
    Cout, _, K = w.shape
    pad = (K - 1) // 2
    xpad = jnp.pad(x.astype(jnp.float32), ((0, 0), (0, 0), (pad, pad)))
    N = B * L
    Npad = _round_up(N, 128)                                 # lane-dense output store
    rhs = jnp.pad(_im2col(xpad, K, L), ((0, 0), (0, Npad - N))).astype(MXU_DTYPE)
    wm = jnp.transpose(w, (0, 2, 1)).reshape(Cout, K * Cin).astype(MXU_DTYPE)
    bias = b.reshape(Cout, 1).astype(jnp.float32)
    out = _conv_matmul(wm, rhs, bias, Cout, Npad)            # (Cout, Npad)
    return out[:, :N].reshape(Cout, B, L)                    # (T, B, Din)


# ----------------------------------------------------------------------------- fused 2-layer LSTM
def lstm2_kernel(xp_ref, whh0_ref, w1_ref, b1_ref, y_ref,
                 h0_scr, c0_scr, h1_scr, c1_scr):
    # xp:   (T_CHUNK, B, 4H)  layer-0 x@W_ih0^T + fused layer-0 bias (hoisted, lane-dense)
    # whh0: (H, 4H)  bf16     layer-0 recurrent weight, gate-fused (i|f|g|o)
    # w1:   (2H, 4H) bf16     layer-1 [W_ih1^T ; W_hh1^T], gate-fused
    # b1:   (1, 4H)  f32      layer-1 fused bias
    # y:    (T_CHUNK, B, H)   layer-1 hidden states, time-major
    H = h0_scr.shape[1]
    t_chunk = xp_ref.shape[0]

    @pl.when(pl.program_id(0) == 0)
    def _init():
        h0_scr[...] = jnp.zeros_like(h0_scr)
        c0_scr[...] = jnp.zeros_like(c0_scr)
        h1_scr[...] = jnp.zeros_like(h1_scr)
        c1_scr[...] = jnp.zeros_like(c1_scr)

    whh0 = whh0_ref[...]
    w1 = w1_ref[...]
    b1 = b1_ref[...]

    def step(tl, carry):
        h0, c0, h1, c1 = carry
        # ---- layer 0: ONE fused-gate recurrent dot ----
        g0 = xp_ref[tl] + jnp.dot(h0.astype(MXU_DTYPE), whh0,
                                  preferred_element_type=jnp.float32)
        i0 = jax.nn.sigmoid(g0[:, 0 * H:1 * H])
        f0 = jax.nn.sigmoid(g0[:, 1 * H:2 * H])
        n0 = jnp.tanh(g0[:, 2 * H:3 * H])
        o0 = jax.nn.sigmoid(g0[:, 3 * H:4 * H])
        c0 = f0 * c0 + i0 * n0
        h0 = o0 * jnp.tanh(c0)
        # ---- layer 1: ONE fused-gate dot on [h0, h1] ----
        hcat = jnp.concatenate([h0, h1], axis=1).astype(MXU_DTYPE)
        g1 = jnp.dot(hcat, w1, preferred_element_type=jnp.float32) + b1
        i1 = jax.nn.sigmoid(g1[:, 0 * H:1 * H])
        f1 = jax.nn.sigmoid(g1[:, 1 * H:2 * H])
        n1 = jnp.tanh(g1[:, 2 * H:3 * H])
        o1 = jax.nn.sigmoid(g1[:, 3 * H:4 * H])
        c1 = f1 * c1 + i1 * n1
        h1 = o1 * jnp.tanh(c1)
        y_ref[tl] = h1
        return h0, c0, h1, c1

    carry = (h0_scr[...], c0_scr[...], h1_scr[...], c1_scr[...])
    h0, c0, h1, c1 = lax.fori_loop(0, t_chunk, step, carry,
                                   unroll=min(8, t_chunk))
    h0_scr[...] = h0
    c0_scr[...] = c0
    h1_scr[...] = h1
    c1_scr[...] = c1


def lstm2_forward(x_tm, wih0, whh0, bih0, bhh0, wih1, whh1, bih1, bhh1,
                  t_chunk=None):
    # x_tm: (T, B, Din) time-major.  Returns time-major (T, B, H).
    T, B, Din = x_tm.shape
    H = whh0.shape[1]

    # Hoisted layer-0 input projection: one large XLA matmul, lane-dense (T, B, 4H).
    b0 = (bih0 + bhh0).reshape(1, 1, 4 * H)
    xp0 = (jnp.einsum("tbd,gd->tbg", x_tm, wih0) + b0).astype(jnp.float32)

    whh0_f = jnp.transpose(whh0).astype(MXU_DTYPE)                       # (H, 4H)
    w1_f = jnp.concatenate([jnp.transpose(wih1), jnp.transpose(whh1)],
                           axis=0).astype(MXU_DTYPE)                     # (2H, 4H)
    b1 = (bih1 + bhh1).reshape(1, 4 * H).astype(jnp.float32)

    if t_chunk is None:
        t_chunk = min(128, T)
    n_chunks = pl.cdiv(T, t_chunk)
    Tpad = n_chunks * t_chunk
    if Tpad != T:                                # remainder via zero-padding, not tiny chunks
        xp0 = jnp.pad(xp0, ((0, Tpad - T), (0, 0), (0, 0)))

    y = pl.pallas_call(
        lstm2_kernel,
        out_shape=jax.ShapeDtypeStruct((Tpad, B, H), jnp.float32),
        grid_spec=pltpu.PrefetchScalarGridSpec(
            num_scalar_prefetch=0,
            grid=(n_chunks,),
            in_specs=[
                pl.BlockSpec((t_chunk, B, 4 * H), lambda t: (t, 0, 0)),
                pl.BlockSpec((H, 4 * H), lambda t: (0, 0)),
                pl.BlockSpec((2 * H, 4 * H), lambda t: (0, 0)),
                pl.BlockSpec((1, 4 * H), lambda t: (0, 0)),
            ],
            out_specs=pl.BlockSpec((t_chunk, B, H), lambda t: (t, 0, 0)),
            scratch_shapes=[pltpu.VMEM((B, H), jnp.float32)] * 4,
        ),
        compiler_params=pltpu.CompilerParams(
            dimension_semantics=("arbitrary",),      # sequential time recurrence
            vmem_limit_bytes=32 * 1024 * 1024),
    )(xp0, whh0_f, w1_f, b1)
    return y[:T]                                           # (T, B, H), time-major


# ----------------------------------------------------------------------------- fused post-convs + PReLU + head
def post_and_head(y_tm, w1, b1, w2, b2, alpha, fcn_w, fcn_b):
    # y_tm: (T, B, H) LSTM output; Conv1d sees channels = T, length = H.
    T, B, H = y_tm.shape
    C1, _, K1 = w1.shape
    C2, _, K2 = w2.shape
    N = B * H
    Npad = _round_up(N, 128)

    # ---- post conv 1: im2col in XLA, single batch-flattened matmul in Pallas ----
    p1 = (K1 - 1) // 2
    yb = jnp.transpose(y_tm, (1, 0, 2))                                   # (B, T, H)
    rhs1 = _im2col(jnp.pad(yb, ((0, 0), (0, 0), (p1, p1))), K1, H)        # (K1*T, B*H)
    rhs1 = jnp.pad(rhs1, ((0, 0), (0, Npad - N))).astype(MXU_DTYPE)
    w1m = jnp.transpose(w1, (0, 2, 1)).reshape(C1, K1 * T).astype(MXU_DTYPE)
    z1 = _conv_matmul(w1m, rhs1, b1.reshape(C1, 1).astype(jnp.float32), C1, Npad)

    # ---- post conv 2 + PReLU + 1x1-conv head + sigmoid (fused pallas_call) ----
    p2 = (K2 - 1) // 2
    z1b = jnp.transpose(z1[:, :N].reshape(C1, B, H), (1, 0, 2))           # (B, C1, H)
    rhs2 = _im2col(jnp.pad(z1b, ((0, 0), (0, 0), (p2, p2))), K2, H)       # (K2*C1, B*H)
    rhs2 = jnp.pad(rhs2, ((0, 0), (0, Npad - N))).astype(MXU_DTYPE)
    w2m = jnp.transpose(w2, (0, 2, 1)).reshape(C2, K2 * C1).astype(MXU_DTYPE)
    # head weight tiled per batch so the kernel does a pure elementwise mul + reduce
    fw = jnp.tile(fcn_w.reshape(C2, H), (1, B))                           # (C2, B*H)
    fw = jnp.pad(fw, ((0, 0), (0, Npad - N))).astype(jnp.float32)

    def conv2_head_kernel(w_ref, x_ref, b_ref, a_ref, fw_ref, fb_ref, o_ref):
        z2 = jnp.dot(w_ref[...], x_ref[...], preferred_element_type=jnp.float32)
        z2 = jnp.maximum(z2 + b_ref[...], 0.0)              # BasicConv1d ReLU (assumed)
        z2 = jnp.maximum(z2, 0.0) + a_ref[...] * jnp.minimum(z2, 0.0)     # PReLU
        # TODO(synk): nn.Dropout(0.3) is identity in eval mode; training-mode dropout
        # is not implemented.
        prod = z2 * fw_ref[...]                             # (C2, Npad); pad cols unused
        parts = [jnp.sum(prod[:, b * H:(b + 1) * H], keepdims=True)
                 for b in range(B)]                         # B is tiny & static
        logits = jnp.concatenate(parts, axis=0) + fb_ref[...]             # (B, 1)
        o_ref[...] = jax.nn.sigmoid(logits)

    return pl.pallas_call(
        conv2_head_kernel,
        out_shape=jax.ShapeDtypeStruct((B, 1), jnp.float32),
    )(w2m, rhs2, b2.reshape(C2, 1).astype(jnp.float32),
      alpha.reshape(1, 1).astype(jnp.float32),
      fw, fcn_b.reshape(1, 1).astype(jnp.float32))


# ----------------------------------------------------------------------------- full forward
def discriminator_forward(x, params, t_chunk=None):
    # prelstm: BasicConv1d(Cin -> Cpre, k=3, pad=1) (+ReLU), emitted time-major.
    y_tm = prelstm_conv_time_major(x, params["pre_w"], params["pre_b"])    # (T, B, Din)
    # 2-layer unidirectional LSTM (batch_first in PyTorch); fused, time-major out.
    y_tm = lstm2_forward(y_tm,
                         params["wih0"], params["whh0"], params["bih0"], params["bhh0"],
                         params["wih1"], params["whh1"], params["bih1"], params["bhh1"],
                         t_chunk=t_chunk)                                  # (T, B, H)
    # postlstm convs + reshape + PReLU + Dropout(eval) + Conv1d(1x1) + Sigmoid.
    return post_and_head(y_tm, params["post1_w"], params["post1_b"],
                         params["post2_w"], params["post2_b"],
                         params["prelu_a"], params["fcn_w"], params["fcn_b"])


# ----------------------------------------------------------------------------- main
if __name__ == "__main__":
    # Small configuration consistent with the module (original: input_size=(27,100),
    # Cpre=500, hidden=256, post 500->256->128).  Here: input_size=(4,16), Cpre=20,
    # hidden=32, post 20->8->4.  T=20 with t_chunk=8 exercises both the cross-grid-step
    # LSTM state carry and the time-padding remainder path.
    B, Cin, L = 2, 4, 16           # x: (batch, input_size[0], input_size[1])
    Cpre, H = 20, 32               # prelstm out channels (= LSTM seq len), LSTM hidden
    C1, C2 = 8, 4                  # postlstm channels
    element = conv1d_ele_size(conv1d_ele_size(H, 3, 1, 1, 1), 3, 1, 1, 1)
    assert element == H

    key = jax.random.PRNGKey(0)
    ks = jax.random.split(key, 17)
    s = 0.1

    params = {
        # prelstm conv
        "pre_w": s * jax.random.normal(ks[0], (Cpre, Cin, 3), jnp.float32),
        "pre_b": s * jax.random.normal(ks[1], (Cpre,), jnp.float32),
        # LSTM layer 0 (input_size = L)
        "wih0": s * jax.random.normal(ks[2], (4 * H, L), jnp.float32),
        "whh0": s * jax.random.normal(ks[3], (4 * H, H), jnp.float32),
        "bih0": s * jax.random.normal(ks[4], (4 * H,), jnp.float32),
        "bhh0": s * jax.random.normal(ks[5], (4 * H,), jnp.float32),
        # LSTM layer 1 (input_size = H)
        "wih1": s * jax.random.normal(ks[6], (4 * H, H), jnp.float32),
        "whh1": s * jax.random.normal(ks[7], (4 * H, H), jnp.float32),
        "bih1": s * jax.random.normal(ks[8], (4 * H,), jnp.float32),
        "bhh1": s * jax.random.normal(ks[9], (4 * H,), jnp.float32),
        # postlstm convs (in_channels = seq len = Cpre; length = H)
        "post1_w": s * jax.random.normal(ks[10], (C1, Cpre, 3), jnp.float32),
        "post1_b": s * jax.random.normal(ks[11], (C1,), jnp.float32),
        "post2_w": s * jax.random.normal(ks[12], (C2, C1, 3), jnp.float32),
        "post2_b": s * jax.random.normal(ks[13], (C2,), jnp.float32),
        # fcn head: PReLU alpha (default 0.25), Conv1d(C2*element, 1, 1)
        "prelu_a": jnp.full((1, 1), 0.25, jnp.float32),
        "fcn_w": s * jax.random.normal(ks[14], (C2 * element, 1), jnp.float32),
        "fcn_b": s * jax.random.normal(ks[15], (1, 1), jnp.float32),
    }

    x = jax.random.normal(ks[16], (B, Cin, L), jnp.float32)

    fwd = jax.jit(functools.partial(discriminator_forward, t_chunk=8))
    out = jax.block_until_ready(fwd(x, params))
    assert out.shape == (B, 1)
    assert bool(jnp.all(jnp.isfinite(out)))
    print("KERNEL_OK")
</pallas_src>

<mosaic_0001>
module attributes {stable_mosaic.version = 11 : i64} {
  func.func @matmul_bias_relu_kernel(%arg0: memref<20x12xbf16, #tpu.memory_space<vmem>>, %arg1: memref<12x128xbf16, #tpu.memory_space<vmem>>, %arg2: memref<20x1xf32, #tpu.memory_space<vmem>>, %arg3: memref<20x128xf32, #tpu.memory_space<vmem>>) attributes {dimension_semantics = [], scalar_prefetch = 0 : i64, scratch_operands = 0 : i64, tpu.core_type = #tpu.core_type<tc>} {
    %c0 = arith.constant 0 : index
    %c0_0 = arith.constant 0 : index
    %0 = vector.load %arg0[%c0, %c0_0] : memref<20x12xbf16, #tpu.memory_space<vmem>>, vector<20x12xbf16>
    %c0_1 = arith.constant 0 : index
    %c0_2 = arith.constant 0 : index
    %1 = vector.load %arg1[%c0_1, %c0_2] : memref<12x128xbf16, #tpu.memory_space<vmem>>, vector<12x128xbf16>
    %cst = arith.constant dense<0.000000e+00> : vector<20x128xf32>
    %2 = tpu.matmul %0, %1, %cst {dimension_numbers = #tpu.dot_dimension_numbers<[1], [0], [0], [1], [0, 0, 1, 1], [], []>} : vector<20x12xbf16>, vector<12x128xbf16>, vector<20x128xf32> -> vector<20x128xf32>
    %c0_3 = arith.constant 0 : index
    %c0_4 = arith.constant 0 : index
    %3 = vector.load %arg2[%c0_3, %c0_4] : memref<20x1xf32, #tpu.memory_space<vmem>>, vector<20x1xf32>
    %4 = vector.broadcast %3 : vector<20x1xf32> to vector<20x128xf32>
    %5 = arith.addf %2, %4 : vector<20x128xf32>
    %cst_5 = arith.constant 0.000000e+00 : f32
    %6 = vector.broadcast %cst_5 : f32 to vector<20x128xf32>
    %7 = arith.maximumf %5, %6 : vector<20x128xf32>
    %c0_6 = arith.constant 0 : index
    %c0_7 = arith.constant 0 : index
    %8 = vector.load %arg3[%c0_6, %c0_7] : memref<20x128xf32, #tpu.memory_space<vmem>>, vector<20x128xf32>
    tpu.vector_store %arg3[%c0_6, %c0_7], %7 {strides = array<i32>} : memref<20x128xf32, #tpu.memory_space<vmem>>, vector<20x128xf32>,
    return
  }
}

module attributes {stable_mosaic.version = 11 : i64} {
  func.func @lstm2_kernel(%arg0: i32, %arg1: memref<8x2x128xf32, #tpu.memory_space<vmem>>, %arg2: memref<32x128xbf16, #tpu.memory_space<vmem>>, %arg3: memref<64x128xbf16, #tpu.memory_space<vmem>>, %arg4: memref<1x128xf32, #tpu.memory_space<vmem>>, %arg5: memref<8x2x32xf32, #tpu.memory_space<vmem>>, %arg6: memref<2x32xf32, #tpu.memory_space<vmem>>, %arg7: memref<2x32xf32, #tpu.memory_space<vmem>>, %arg8: memref<2x32xf32, #tpu.memory_space<vmem>>, %arg9: memref<2x32xf32, #tpu.memory_space<vmem>>) attributes {dimension_semantics = [#tpu.dimension_semantics<arbitrary>], iteration_bounds = array<i64: 3>, scalar_prefetch = 0 : i64, scratch_operands = 4 : i64, tpu.core_type = #tpu.core_type<tc>, window_params = [{transform_indices = @transform_0, window_bounds = array<i64: 8, 2, 128>}, {pipeline_mode = #tpu.pipeline_mode<synchronous>, transform_indices = @transform_1, window_bounds = array<i64: 32, 128>}, {pipeline_mode = #tpu.pipeline_mode<synchronous>, transform_indices = @transform_2, window_bounds = array<i64: 64, 128>}, {pipeline_mode = #tpu.pipeline_mode<synchronous>, transform_indices = @transform_3, window_bounds = array<i64: 1, 128>}, {transform_indices = @transform_4, window_bounds = array<i64: 8, 2, 32>}]} {
    %c0_i32 = arith.constant 0 : i32
    %0 = arith.cmpi eq, %arg0, %c0_i32 : i32
    %1 = arith.extui %0 : i1 to i32
    %c0_i32_0 = arith.constant 0 : i32
    %2 = arith.cmpi ne, %1, %c0_i32_0 : i32
    scf.if %2 {
      %cst_118 = arith.constant 0.000000e+00 : f32
      %534 = vector.broadcast %cst_118 : f32 to vector<2x32xf32>
      %c0_119 = arith.constant 0 : index
      %c0_120 = arith.constant 0 : index
      %535 = vector.load %arg6[%c0_119, %c0_120] : memref<2x32xf32, #tpu.memory_space<vmem>>, vector<2x32xf32>
      tpu.vector_store %arg6[%c0_119, %c0_120], %534 {strides = array<i32>} : memref<2x32xf32, #tpu.memory_space<vmem>>, vector<2x32xf32>,
      %cst_121 = arith.constant 0.000000e+00 : f32
      %536 = vector.broadcast %cst_121 : f32 to vector<2x32xf32>
      %c0_122 = arith.constant 0 : index
      %c0_123 = arith.constant 0 : index
      %537 = vector.load %arg7[%c0_122, %c0_123] : memref<2x32xf32, #tpu.memory_space<vmem>>, vector<2x32xf32>
      tpu.vector_store %arg7[%c0_122, %c0_123], %536 {strides = array<i32>} : memref<2x32xf32, #tpu.memory_space<vmem>>, vector<2x32xf32>,
      %cst_124 = arith.constant 0.000000e+00 : f32
      %538 = vector.broadcast %cst_124 : f32 to vector<2x32xf32>
      %c0_125 = arith.constant 0 : index
      %c0_126 = arith.constant 0 : index
      %539 = vector.load %arg8[%c0_125, %c0_126] : memref<2x32xf32, #tpu.memory_space<vmem>>, vector<2x32xf32>
      tpu.vector_store %arg8[%c0_125, %c0_126], %538 {strides = array<i32>} : memref<2x32xf32, #tpu.memory_space<vmem>>, vector<2x32xf32>,
      %cst_127 = arith.constant 0.000000e+00 : f32
      %540 = vector.broadcast %cst_127 : f32 to vector<2x32xf32>
      %c0_128 = arith.constant 0 : index
      %c0_129 = arith.constant 0 : index
      %541 = vector.load %arg9[%c0_128, %c0_129] : memref<2x32xf32, #tpu.memory_space<vmem>>, vector<2x32xf32>
      tpu.vector_store %arg9[%c0_128, %c0_129], %540 {strides = array<i32>} : memref<2x32xf32, #tpu.memory_space<vmem>>, vector<2x32xf32>,
    } else {
    }
    %c0 = arith.constant 0 : index
    %c0_1 = arith.constant 0 : index
    %3 = vector.load %arg2[%c0, %c0_1] : memref<32x128xbf16, #tpu.memory_space<vmem>>, vector<32x128xbf16>
    %c0_2 = arith.constant 0 : index
    %c0_3 = arith.constant 0 : index
    %4 = vector.load %arg3[%c0_2, %c0_3] : memref<64x128xbf16, #tpu.memory_space<vmem>>, vector<64x128xbf16>
    %c0_4 = arith.constant 0 : index
    %c0_5 = arith.constant 0 : index
    %5 = vector.load %arg4[%c0_4, %c0_5] : memref<1x128xf32, #tpu.memory_space<vmem>>, vector<1x128xf32>
    %c0_6 = arith.constant 0 : index
    %c0_7 = arith.constant 0 : index
    %6 = vector.load %arg6[%c0_6, %c0_7] : memref<2x32xf32, #tpu.memory_space<vmem>>, vector<2x32xf32>
    %c0_8 = arith.constant 0 : index
    %c0_9 = arith.constant 0 : index
    %7 = vector.load %arg7[%c0_8, %c0_9] : memref<2x32xf32, #tpu.memory_space<vmem>>, vector<2x32xf32>
    %c0_10 = arith.constant 0 : index
    %c0_11 = arith.constant 0 : index
    %8 = vector.load %arg8[%c0_10, %c0_11] : memref<2x32xf32, #tpu.memory_space<vmem>>, vector<2x32xf32>
    %c0_12 = arith.constant 0 : index
    %c0_13 = arith.constant 0 : index
    %9 = vector.load %arg9[%c0_12, %c0_13] : memref<2x32xf32, #tpu.memory_space<vmem>>, vector<2x32xf32>
    %c0_i32_14 = arith.constant 0 : i32
    %10 = arith.index_cast %c0_i32_14 : i32 to index
    %c0_15 = arith.constant 0 : index
    %c0_16 = arith.constant 0 : index
    %11 = vector.load %arg1[%10, %c0_15, %c0_16] : memref<8x2x128xf32, #tpu.memory_space<vmem>>, vector<1x2x128xf32>
    %12 = vector.shape_cast %11 : vector<1x2x128xf32> to vector<2x128xf32>
    %13 = arith.truncf %6 : vector<2x32xf32> to vector<2x32xbf16>
    %cst = arith.constant dense<0.000000e+00> : vector<2x128xf32>
    %14 = tpu.matmul %13, %3, %cst {dimension_numbers = #tpu.dot_dimension_numbers<[1], [0], [0], [1], [0, 0, 1, 1], [], []>} : vector<2x32xbf16>, vector<32x128xbf16>, vector<2x128xf32> -> vector<2x128xf32>
    %15 = arith.addf %12, %14 : vector<2x128xf32>
    %16 = vector.extract_strided_slice %15 {offsets = [0, 0], sizes = [2, 32], strides = [1, 1]} : vector<2x128xf32> to vector<2x32xf32>
    %17 = arith.negf %16 : vector<2x32xf32>
    %18 = math.exp %17 : vector<2x32xf32>
    %cst_17 = arith.constant 1.000000e+00 : f32
    %19 = vector.broadcast %cst_17 : f32 to vector<2x32xf32>
    %20 = arith.addf %19, %18 : vector<2x32xf32>
    %21 = arith.divf %19, %20 : vector<2x32xf32>
    %22 = vector.extract_strided_slice %15 {offsets = [0, 32], sizes = [2, 32], strides = [1, 1]} : vector<2x128xf32> to vector<2x32xf32>
    %23 = arith.negf %22 : vector<2x32xf32>
    %24 = math.exp %23 : vector<2x32xf32>
    %cst_18 = arith.constant 1.000000e+00 : f32
    %25 = vector.broadcast %cst_18 : f32 to vector<2x32xf32>
    %26 = arith.addf %25, %24 : vector<2x32xf32>
    %27 = arith.divf %25, %26 : vector<2x32xf32>
    %28 = vector.extract_strided_slice %15 {offsets = [0, 64], sizes = [2, 32], strides = [1, 1]} : vector<2x128xf32> to vector<2x32xf32>
    %29 = math.tanh %28 : vector<2x32xf32>
    %30 = vector.extract_strided_slice %15 {offsets = [0, 96], sizes = [2, 32], strides = [1, 1]} : vector<2x128xf32> to vector<2x32xf32>
    %31 = arith.negf %30 : vector<2x32xf32>
    %32 = math.exp %31 : vector<2x32xf32>
    %cst_19 = arith.constant 1.000000e+00 : f32
    %33 = vector.broadcast %cst_19 : f32 to vector<2x32xf32>
    %34 = arith.addf %33, %32 : vector<2x32xf32>
    %35 = arith.divf %33, %34 : vector<2x32xf32>
    %36 = arith.mulf %27, %7 : vector<2x32xf32>
    %37 = arith.mulf %21, %29 : vector<2x32xf32>
    %38 = arith.addf %36, %37 : vector<2x32xf32>
    %39 = math.tanh %38 : vector<2x32xf32>
    %40 = arith.mulf %35, %39 : vector<2x32xf32>
    %41 = tpu.concatenate %40, %8 in 1 : vector<2x32xf32>, vector<2x32xf32> -> vector<2x64xf32>
    %42 = arith.truncf %41 : vector<2x64xf32> to vector<2x64xbf16>
    %cst_20 = arith.constant dense<0.000000e+00> : vector<2x128xf32>
    %43 = tpu.matmul %42, %4, %cst_20 {dimension_numbers = #tpu.dot_dimension_numbers<[1], [0], [0], [1], [0, 0, 1, 1], [], []>} : vector<2x64xbf16>, vector<64x128xbf16>, vector<2x128xf32> -> vector<2x128xf32>
    %44 = vector.broadcast %5 : vector<1x128xf32> to vector<2x128xf32>
    %45 = arith.addf %43, %44 : vector<2x128xf32>
    %46 = vector.extract_strided_slice %45 {offsets = [0, 0], sizes = [2, 32], strides = [1, 1]} : vector<2x128xf32> to vector<2x32xf32>
    %47 = arith.negf %46 : vector<2x32xf32>
    %48 = math.exp %47 : vector<2x32xf32>
    %cst_21 = arith.constant 1.000000e+00 : f32
    %49 = vector.broadcast %cst_21 : f32 to vector<2x32xf32>
    %50 = arith.addf %49, %48 : vector<2x32xf32>
    %51 = arith.divf %49, %50 : vector<2x32xf32>
    %52 = vector.extract_strided_slice %45 {offsets = [0, 32], sizes = [2, 32], strides = [1, 1]} : vector<2x128xf32> to vector<2x32xf32>
    %53 = arith.negf %52 : vector<2x32xf32>
    %54 = math.exp %53 : vector<2x32xf32>
    %cst_22 = arith.constant 1.000000e+00 : f32
    %55 = vector.broadcast %cst_22 : f32 to vector<2x32xf32>
    %56 = arith.addf %55, %54 : vector<2x32xf32>
    %57 = arith.divf %55, %56 : vector<2x32xf32>
    %58 = vector.extract_strided_slice %45 {offsets = [0, 64], sizes = [2, 32], strides = [1, 1]} : vector<2x128xf32> to vector<2x32xf32>
    %59 = math.tanh %58 : vector<2x32xf32>
    %60 = vector.extract_strided_slice %45 {offsets = [0, 96], sizes = [2, 32], strides = [1, 1]} : vector<2x128xf32> to vector<2x32xf32>
    %61 = arith.negf %60 : vector<2x32xf32>
    %62 = math.exp %61 : vector<2x32xf32>
    %cst_23 = arith.constant 1.000000e+00 : f32
    %63 = vector.broadcast %cst_23 : f32 to vector<2x32xf32>
    %64 = arith.addf %63, %62 : vector<2x32xf32>
    %65 = arith.divf %63, %64 : vector<2x32xf32>
    %66 = arith.mulf %57, %9 : vector<2x32xf32>
    %67 = arith.mulf %51, %59 : vector<2x32xf32>
    %68 = arith.addf %66, %67 : vector<2x32xf32>
    %69 = math.tanh %68 : vector<2x32xf32>
    %70 = arith.mulf %65, %69 : vector<2x32xf32>
    %71 = arith.index_cast %c0_i32_14 : i32 to index
    %c0_24 = arith.constant 0 : index
    %c0_25 = arith.constant 0 : index
    %72 = vector.load %arg5[%71, %c0_24, %c0_25] : memref<8x2x32xf32, #tpu.memory_space<vmem>>, vector<1x2x32xf32>
    %73 = vector.shape_cast %72 : vector<1x2x32xf32> to vector<2x32xf32>
    %74 = vector.shape_cast %70 : vector<2x32xf32> to vector<1x2x32xf32>
    tpu.vector_store %arg5[%71, %c0_24, %c0_25], %74 {strides = array<i32>} : memref<8x2x32xf32, #tpu.memory_space<vmem>>, vector<1x2x32xf32>,
    %c1_i32 = arith.constant 1 : i32
    %75 = arith.index_cast %c1_i32 : i32 to index
    %c0_26 = arith.constant 0 : index
    %c0_27 = arith.constant 0 : index
    %76 = vector.load %arg1[%75, %c0_26, %c0_27] : memref<8x2x128xf32, #tpu.memory_space<vmem>>, vector<1x2x128xf32>
    %77 = vector.shape_cast %76 : vector<1x2x128xf32> to vector<2x128xf32>
    %78 = arith.truncf %40 : vector<2x32xf32> to vector<2x32xbf16>
    %cst_28 = arith.constant dense<0.000000e+00> : vector<2x128xf32>
    %79 = tpu.matmul %78, %3, %cst_28 {dimension_numbers = #tpu.dot_dimension_numbers<[1], [0], [0], [1], [0, 0, 1, 1], [], []>} : vector<2x32xbf16>, vector<32x128xbf16>, vector<2x128xf32> -> vector<2x128xf32>
    %80 = arith.addf %77, %79 : vector<2x128xf32>
    %81 = vector.extract_strided_slice %80 {offsets = [0, 0], sizes = [2, 32], strides = [1, 1]} : vector<2x128xf32> to vector<2x32xf32>
    %82 = arith.negf %81 : vector<2x32xf32>
    %83 = math.exp %82 : vector<2x32xf32>
    %cst_29 = arith.constant 1.000000e+00 : f32
    %84 = vector.broadcast %cst_29 : f32 to vector<2x32xf32>
    %85 = arith.addf %84, %83 : vector<2x32xf32>
    %86 = arith.divf %84, %85 : vector<2x32xf32>
    %87 = vector.extract_strided_slice %80 {offsets = [0, 32], sizes = [2, 32], strides = [1, 1]} : vector<2x128xf32> to vector<2x32xf32>
    %88 = arith.negf %87 : vector<2x32xf32>
    %89 = math.exp %88 : vector<2x32xf32>
    %cst_30 = arith.constant 1.000000e+00 : f32
    %90 = vector.broadcast %cst_30 : f32 to vector<2x32xf32>
    %91 = arith.addf %90, %89 : vector<2x32xf32>
    %92 = arith.divf %90, %91 : vector<2x32xf32>
    %93 = vector.extract_strided_slice %80 {offsets = [0, 64], sizes = [2, 32], strides = [1, 1]} : vector<2x128xf32> to vector<2x32xf32>
    %94 = math.tanh %93 : vector<2x32xf32>
    %95 = vector.extract_strided_slice %80 {offsets = [0, 96], sizes = [2, 32], strides = [1, 1]} : vector<2x128xf32> to vector<2x32xf32>
    %96 = arith.negf %95 : vector<2x32xf32>
    %97 = math.exp %96 : vector<2x32xf32>
    %cst_31 = arith.constant 1.000000e+00 : f32
    %98 = vector.broadcast %cst_31 : f32 to vector<2x32xf32>
    %99 = arith.addf %98, %97 : vector<2x32xf32>
    %100 = arith.divf %98, %99 : vector<2x32xf32>
    %101 = arith.mulf %92, %38 : vector<2x32xf32>
    %102 = arith.mulf %86, %94 : vector<2x32xf32>
    %103 = arith.addf %101, %102 : vector<2x32xf32>
    %104 = math.tanh %103 : vector<2x32xf32>
    %105 = arith.mulf %100, %104 : vector<2x32xf32>
    %106 = tpu.concatenate %105, %70 in 1 : vector<2x32xf32>, vector<2x32xf32> -> vector<2x64xf32>
    %107 = arith.truncf %106 : vector<2x64xf32> to vector<2x64xbf16>
    %cst_32 = arith.constant dense<0.000000e+00> : vector<2x128xf32>
    %108 = tpu.matmul %107, %4, %cst_32 {dimension_numbers = #tpu.dot_dimension_numbers<[1], [0], [0], [1], [0, 0, 1, 1], [], []>} : vector<2x64xbf16>, vector<64x128xbf16>, vector<2x128xf32> -> vector<2x128xf32>
    %109 = vector.broadcast %5 : vector<1x128xf32> to vector<2x128xf32>
    %110 = arith.addf %108, %109 : vector<2x128xf32>
    %111 = vector.extract_strided_slice %110 {offsets = [0, 0], sizes = [2, 32], strides = [1, 1]} : vector<2x128xf32> to vector<2x32xf32>
    %112 = arith.negf %111 : vector<2x32xf32>
    %113 = math.exp %112 : vector<2x32xf32>
    %cst_33 = arith.constant 1.000000e+00 : f32
    %114 = vector.broadcast %cst_33 : f32 to vector<2x32xf32>
    %115 = arith.addf %114, %113 : vector<2x32xf32>
    %116 = arith.divf %114, %115 : vector<2x32xf32>
    %117 = vector.extract_strided_slice %110 {offsets = [0, 32], sizes = [2, 32], strides = [1, 1]} : vector<2x128xf32> to vector<2x32xf32>
    %118 = arith.negf %117 : vector<2x32xf32>
    %119 = math.exp %118 : vector<2x32xf32>
    %cst_34 = arith.constant 1.000000e+00 : f32
    %120 = vector.broadcast %cst_34 : f32 to vector<2x32xf32>
    %121 = arith.addf %120, %119 : vector<2x32xf32>
    %122 = arith.divf %120, %121 : vector<2x32xf32>
    %123 = vector.extract_strided_slice %110 {offsets = [0, 64], sizes = [2, 32], strides = [1, 1]} : vector<2x128xf32> to vector<2x32xf32>
    %124 = math.tanh %123 : vector<2x32xf32>
    %125 = vector.extract_strided_slice %110 {offsets = [0, 96], sizes = [2, 32], strides = [1, 1]} : vector<2x128xf32> to vector<2x32xf32>
    %126 = arith.negf %125 : vector<2x32xf32>
    %127 = math.exp %126 : vector<2x32xf32>
    %cst_35 = arith.constant 1.000000e+00 : f32
    %128 = vector.broadcast %cst_35 : f32 to vector<2x32xf32>
    %129 = arith.addf %128, %127 : vector<2x32xf32>
    %130 = arith.divf %128, %129 : vector<2x32xf32>
    %131 = arith.mulf %122, %68 : vector<2x32xf32>
    %132 = arith.mulf %116, %124 : vector<2x32xf32>
    %133 = arith.addf %131, %132 : vector<2x32xf32>
    %134 = math.tanh %133 : vector<2x32xf32>
    %135 = arith.mulf %130, %134 : vector<2x32xf32>
    %136 = arith.index_cast %c1_i32 : i32 to index
    %c0_36 = arith.constant 0 : index
    %c0_37 = arith.constant 0 : index
    %137 = vector.load %arg5[%136, %c0_36, %c0_37] : memref<8x2x32xf32, #tpu.memory_space<vmem>>, vector<1x2x32xf32>
    %138 = vector.shape_cast %137 : vector<1x2x32xf32> to vector<2x32xf32>
    %139 = vector.shape_cast %135 : vector<2x32xf32> to vector<1x2x32xf32>
    tpu.vector_store %arg5[%136, %c0_36, %c0_37], %139 {strides = array<i32>} : memref<8x2x32xf32, #tpu.memory_space<vmem>>, vector<1x2x32xf32>,
    %c2_i32 = arith.constant 2 : i32
    %140 = arith.index_cast %c2_i32 : i32 to index
    %c0_38 = arith.constant 0 : index
    %c0_39 = arith.constant 0 : index
    %141 = vector.load %arg1[%140, %c0_38, %c0_39] : memref<8x2x128xf32, #tpu.memory_space<vmem>>, vector<1x2x128xf32>
    %142 = vector.shape_cast %141 : vector<1x2x128xf32> to vector<2x128xf32>
    %143 = arith.truncf %105 : vector<2x32xf32> to vector<2x32xbf16>
    %cst_40 = arith.constant dense<0.000000e+00> : vector<2x128xf32>
    %144 = tpu.matmul %143, %3, %cst_40 {dimension_numbers = #tpu.dot_dimension_numbers<[1], [0], [0], [1], [0, 0, 1, 1], [], []>} : vector<2x32xbf16>, vector<32x128xbf16>, vector<2x128xf32> -> vector<2x128xf32>
    %145 = arith.addf %142, %144 : vector<2x128xf32>
    %146 = vector.extract_strided_slice %145 {offsets = [0, 0], sizes = [2, 32], strides = [1, 1]} : vector<2x128xf32> to vector<2x32xf32>
    %147 = arith.negf %146 : vector<2x32xf32>
    %148 = math.exp %147 : vector<2x32xf32>
    %cst_41 = arith.constant 1.000000e+00 : f32
    %149 = vector.broadcast %cst_41 : f32 to vector<2x32xf32>
    %150 = arith.addf %149, %148 : vector<2x32xf32>
    %151 = arith.divf %149, %150 : vector<2x32xf32>
    %152 = vector.extract_strided_slice %145 {offsets = [0, 32], sizes = [2, 32], strides = [1, 1]} : vector<2x128xf32> to vector<2x32xf32>
    %153 = arith.negf %152 : vector<2x32xf32>
    %154 = math.exp %153 : vector<2x32xf32>
    %cst_42 = arith.constant 1.000000e+00 : f32
    %155 = vector.broadcast %cst_42 : f32 to vector<2x32xf32>
    %156 = arith.addf %155, %154 : vector<2x32xf32>
    %157 = arith.divf %155, %156 : vector<2x32xf32>
    %158 = vector.extract_strided_slice %145 {offsets = [0, 64], sizes = [2, 32], strides = [1, 1]} : vector<2x128xf32> to vector<2x32xf32>
    %159 = math.tanh %158 : vector<2x32xf32>
    %160 = vector.extract_strided_slice %145 {offsets = [0, 96], sizes = [2, 32], strides = [1, 1]} : vector<2x128xf32> to vector<2x32xf32>
    %161 = arith.negf %160 : vector<2x32xf32>
    %162 = math.exp %161 : vector<2x32xf32>
    %cst_43 = arith.constant 1.000000e+00 : f32
    %163 = vector.broadcast %cst_43 : f32 to vector<2x32xf32>
    %164 = arith.addf %163, %162 : vector<2x32xf32>
    %165 = arith.divf %163, %164 : vector<2x32xf32>
    %166 = arith.mulf %157, %103 : vector<2x32xf32>
    %167 = arith.mulf %151, %159 : vector<2x32xf32>
    %168 = arith.addf %166, %167 : vector<2x32xf32>
    %169 = math.tanh %168 : vector<2x32xf32>
    %170 = arith.mulf %165, %169 : vector<2x32xf32>
    %171 = tpu.concatenate %170, %135 in 1 : vector<2x32xf32>, vector<2x32xf32> -> vector<2x64xf32>
    %172 = arith.truncf %171 : vector<2x64xf32> to vector<2x64xbf16>
    %cst_44 = arith.constant dense<0.000000e+00> : vector<2x128xf32>
    %173 = tpu.matmul %172, %4, %cst_44 {dimension_numbers = #tpu.dot_dimension_numbers<[1], [0], [0], [1], [0, 0, 1, 1], [], []>} : vector<2x64xbf16>, vector<64x128xbf16>, vector<2x128xf32> -> vector<2x128xf32>
    %174 = vector.broadcast %5 : vector<1x128xf32> to vector<2x128xf32>
    %175 = arith.addf %173, %174 : vector<2x128xf32>
    %176 = vector.extract_strided_slice %175 {offsets = [0, 0], sizes = [2, 32], strides = [1, 1]} : vector<2x128xf32> to vector<2x32xf32>
    %177 = arith.negf %176 : vector<2x32xf32>
    %178 = math.exp %177 : vector<2x32xf32>
    %cst_45 = arith.constant 1.000000e+00 : f32
    %179 = vector.broadcast %cst_45 : f32 to vector<2x32xf32>
    %180 = arith.addf %179, %178 : vector<2x32xf32>
    %181 = arith.divf %179, %180 : vector<2x32xf32>
    %182 = vector.extract_strided_slice %175 {offsets = [0, 32], sizes = [2, 32], strides = [1, 1]} : vector<2x128xf32> to vector<2x32xf32>
    %183 = arith.negf %182 : vector<2x32xf32>
    %184 = math.exp %183 : vector<2x32xf32>
    %cst_46 = arith.constant 1.000000e+00 : f32
    %185 = vector.broadcast %cst_46 : f32 to vector<2x32xf32>
    %186 = arith.addf %185, %184 : vector<2x32xf32>
    %187 = arith.divf %185, %186 : vector<2x32xf32>
    %188 = vector.extract_strided_slice %175 {offsets = [0, 64], sizes = [2, 32], strides = [1, 1]} : vector<2x128xf32> to vector<2x32xf32>
    %189 = math.tanh %188 : vector<2x32xf32>
    %190 = vector.extract_strided_slice %175 {offsets = [0, 96], sizes = [2, 32], strides = [1, 1]} : vector<2x128xf32> to vector<2x32xf32>
    %191 = arith.negf %190 : vector<2x32xf32>
    %192 = math.exp %191 : vector<2x32xf32>
    %cst_47 = arith.constant 1.000000e+00 : f32
    %193 = vector.broadcast %cst_47 : f32 to vector<2x32xf32>
    %194 = arith.addf %193, %192 : vector<2x32xf32>
    %195 = arith.divf %193, %194 : vector<2x32xf32>
    %196 = arith.mulf %187, %133 : vector<2x32xf32>
    %197 = arith.mulf %181, %189 : vector<2x32xf32>
    %198 = arith.addf %196, %197 : vector<2x32xf32>
    %199 = math.tanh %198 : vector<2x32xf32>
    %200 = arith.mulf %195, %199 : vector<2x32xf32>
    %201 = arith.index_cast %c2_i32 : i32 to index
    %c0_48 = arith.constant 0 : index
    %c0_49 = arith.constant 0 : index
    %202 = vector.load %arg5[%201, %c0_48, %c0_49] : memref<8x2x32xf32, #tpu.memory_space<vmem>>, vector<1x2x32xf32>
    %203 = vector.shape_cast %202 : vector<1x2x32xf32> to vector<2x32xf32>
    %204 = vector.shape_cast %200 : vector<2x32xf32> to vector<1x2x32xf32>
    tpu.vector_store %arg5[%201, %c0_48, %c0_49], %204 {strides = array<i32>} : memref<8x2x32xf32, #tpu.memory_space<vmem>>, vector<1x2x32xf32>,
    %c3_i32 = arith.constant 3 : i32
    %205 = arith.index_cast %c3_i32 : i32 to index
    %c0_50 = arith.constant 0 : index
    %c0_51 = arith.constant 0 : index
    %206 = vector.load %arg1[%205, %c0_50, %c0_51] : memref<8x2x128xf32, #tpu.memory_space<vmem>>, vector<1x2x128xf32>
    %207 = vector.shape_cast %206 : vector<1x2x128xf32> to vector<2x128xf32>
    %208 = arith.truncf %170 : vector<2x32xf32> to vector<2x32xbf16>
    %cst_52 = arith.constant dense<0.000000e+00> : vector<2x128xf32>
    %209 = tpu.matmul %208, %3, %cst_52 {dimension_numbers = #tpu.dot_dimension_numbers<[1], [0], [0], [1], [0, 0, 1, 1], [], []>} : vector<2x32xbf16>, vector<32x128xbf16>, vector<2x128xf32> -> vector<2x128xf32>
    %210 = arith.addf %207, %209 : vector<2x128xf32>
    %211 = vector.extract_strided_slice %210 {offsets = [0, 0], sizes = [2, 32], strides = [1, 1]} : vector<2x128xf32> to vector<2x32xf32>
    %212 = arith.negf %211 : vector<2x32xf32>
    %213 = math.exp %212 : vector<2x32xf32>
    %cst_53 = arith.constant 1.000000e+00 : f32
    %214 = vector.broadcast %cst_53 : f32 to vector<2x32xf32>
    %215 = arith.addf %214, %213 : vector<2x32xf32>
    %216 = arith.divf %214, %215 : vector<2x32xf32>
    %217 = vector.extract_strided_slice %210 {offsets = [0, 32], sizes = [2, 32], strides = [1, 1]} : vector<2x128xf32> to vector<2x32xf32>
    %218 = arith.negf %217 : vector<2x32xf32>
    %219 = math.exp %218 : vector<2x32xf32>
    %cst_54 = arith.constant 1.000000e+00 : f32
    %220 = vector.broadcast %cst_54 : f32 to vector<2x32xf32>
    %221 = arith.addf %220, %219 : vector<2x32xf32>
    %222 = arith.divf %220, %221 : vector<2x32xf32>
    %223 = vector.extract_strided_slice %210 {offsets = [0, 64], sizes = [2, 32], strides = [1, 1]} : vector<2x128xf32> to vector<2x32xf32>
    %224 = math.tanh %223 : vector<2x32xf32>
    %225 = vector.extract_strided_slice %210 {offsets = [0, 96], sizes = [2, 32], strides = [1, 1]} : vector<2x128xf32> to vector<2x32xf32>
    %226 = arith.negf %225 : vector<2x32xf32>
    %227 = math.exp %226 : vector<2x32xf32>
    %cst_55 = arith.constant 1.000000e+00 : f32
    %228 = vector.broadcast %cst_55 : f32 to vector<2x32xf32>
    %229 = arith.addf %228, %227 : vector<2x32xf32>
    %230 = arith.divf %228, %229 : vector<2x32xf32>
    %231 = arith.mulf %222, %168 : vector<2x32xf32>
    %232 = arith.mulf %216, %224 : vector<2x32xf32>
    %233 = arith.addf %231, %232 : vector<2x32xf32>
    %234 = math.tanh %233 : vector<2x32xf32>
    %235 = arith.mulf %230, %234 : vector<2x32xf32>
    %236 = tpu.concatenate %235, %200 in 1 : vector<2x32xf32>, vector<2x32xf32> -> vector<2x64xf32>
    %237 = arith.truncf %236 : vector<2x64xf32> to vector<2x64xbf16>
    %cst_56 = arith.constant dense<0.000000e+00> : vector<2x128xf32>
    %238 = tpu.matmul %237, %4, %cst_56 {dimension_numbers = #tpu.dot_dimension_numbers<[1], [0], [0], [1], [0, 0, 1, 1], [], []>} : vector<2x64xbf16>, vector<64x128xbf16>, vector<2x128xf32> -> vector<2x128xf32>
    %239 = vector.broadcast %5 : vector<1x128xf32> to vector<2x128xf32>
    %240 = arith.addf %238, %239 : vector<2x128xf32>
    %241 = vector.extract_strided_slice %240 {offsets = [0, 0], sizes = [2, 32], strides = [1, 1]} : vector<2x128xf32> to vector<2x32xf32>
    %242 = arith.negf %241 : vector<2x32xf32>
    %243 = math.exp %242 : vector<2x32xf32>
    %cst_57 = arith.constant 1.000000e+00 : f32
    %244 = vector.broadcast %cst_57 : f32 to vector<2x32xf32>
    %245 = arith.addf %244, %243 : vector<2x32xf32>
    %246 = arith.divf %244, %245 : vector<2x32xf32>
    %247 = vector.extract_strided_slice %240 {offsets = [0, 32], sizes = [2, 32], strides = [1, 1]} : vector<2x128xf32> to vector<2x32xf32>
    %248 = arith.negf %247 : vector<2x32xf32>
    %249 = math.exp %248 : vector<2x32xf32>
    %cst_58 = arith.constant 1.000000e+00 : f32
    %250 = vector.broadcast %cst_58 : f32 to vector<2x32xf32>
    %251 = arith.addf %250, %249 : vector<2x32xf32>
    %252 = arith.divf %250, %251 : vector<2x32xf32>
    %253 = vector.extract_strided_slice %240 {offsets = [0, 64], sizes = [2, 32], strides = [1, 1]} : vector<2x128xf32> to vector<2x32xf32>
    %254 = math.tanh %253 : vector<2x32xf32>
    %255 = vector.extract_strided_slice %240 {offsets = [0, 96], sizes = [2, 32], strides = [1, 1]} : vector<2x128xf32> to vector<2x32xf32>
    %256 = arith.negf %255 : vector<2x32xf32>
    %257 = math.exp %256 : vector<2x32xf32>
    %cst_59 = arith.constant 1.000000e+00 : f32
    %258 = vector.broadcast %cst_59 : f32 to vector<2x32xf32>
    %259 = arith.addf %258, %257 : vector<2x32xf32>
    %260 = arith.divf %258, %259 : vector<2x32xf32>
    %261 = arith.mulf %252, %198 : vector<2x32xf32>
    %262 = arith.mulf %246, %254 : vector<2x32xf32>
    %263 = arith.addf %261, %262 : vector<2x32xf32>
    %264 = math.tanh %263 : vector<2x32xf32>
    %265 = arith.mulf %260, %264 : vector<2x32xf32>
    %266 = arith.index_cast %c3_i32 : i32 to index
    %c0_60 = arith.constant 0 : index
    %c0_61 = arith.constant 0 : index
    %267 = vector.load %arg5[%266, %c0_60, %c0_61] : memref<8x2x32xf32, #tpu.memory_space<vmem>>, vector<1x2x32xf32>
    %268 = vector.shape_cast %267 : vector<1x2x32xf32> to vector<2x32xf32>
    %269 = vector.shape_cast %265 : vector<2x32xf32> to vector<1x2x32xf32>
    tpu.vector_store %arg5[%266, %c0_60, %c0_61], %269 {strides = array<i32>} : memref<8x2x32xf32, #tpu.memory_space<vmem>>, vector<1x2x32xf32>,
    %c4_i32 = arith.constant 4 : i32
    %270 = arith.index_cast %c4_i32 : i32 to index
    %c0_62 = arith.constant 0 : index
    %c0_63 = arith.constant 0 : index
    %271 = vector.load %arg1[%270, %c0_62, %c0_63] : memref<8x2x128xf32, #tpu.memory_space<vmem>>, vector<1x2x128xf32>
    %272 = vector.shape_cast %271 : vector<1x2x128xf32> to vector<2x128xf32>
    %273 = arith.truncf %235 : vector<2x32xf32> to vector<2x32xbf16>
    %cst_64 = arith.constant dense<0.000000e+00> : vector<2x128xf32>
    %274 = tpu.matmul %273, %3, %cst_64 {dimension_numbers = #tpu.dot_dimension_numbers<[1], [0], [0], [1], [0, 0, 1, 1], [], []>} : vector<2x32xbf16>, vector<32x128xbf16>, vector<2x128xf32> -> vector<2x128xf32>
    %275 = arith.addf %272, %274 : vector<2x128xf32>
    %276 = vector.extract_strided_slice %275 {offsets = [0, 0], sizes = [2, 32], strides = [1, 1]} : vector<2x128xf32> to vector<2x32xf32>
    %277 = arith.negf %276 : vector<2x32xf32>
    %278 = math.exp %277 : vector<2x32xf32>
    %cst_65 = arith.constant 1.000000e+00 : f32
    %279 = vector.broadcast %cst_65 : f32 to vector<2x32xf32>
    %280 = arith.addf %279, %278 : vector<2x32xf32>
    %281 = arith.divf %279, %280 : vector<2x32xf32>
    %282 = vector.extract_strided_slice %275 {offsets = [0, 32], sizes = [2, 32], strides = [1, 1]} : vector<2x128xf32> to vector<2x32xf32>
    %283 = arith.negf %282 : vector<2x32xf32>
    %284 = math.exp %283 : vector<2x32xf32>
    %cst_66 = arith.constant 1.000000e+00 : f32
    %285 = vector.broadcast %cst_66 : f32 to vector<2x32xf32>
    %286 = arith.addf %285, %284 : vector<2x32xf32>
    %287 = arith.divf %285, %286 : vector<2x32xf32>
    %288 = vector.extract_strided_slice %275 {offsets = [0, 64], sizes = [2, 32], strides = [1, 1]} : vector<2x128xf32> to vector<2x32xf32>
    %289 = math.tanh %288 : vector<2x32xf32>
    %290 = vector.extract_strided_slice %275 {offsets = [0, 96], sizes = [2, 32], strides = [1, 1]} : vector<2x128xf32> to vector<2x32xf32>
    %291 = arith.negf %290 : vector<2x32xf32>
    %292 = math.exp %291 : vector<2x32xf32>
    %cst_67 = arith.constant 1.000000e+00 : f32
    %293 = vector.broadcast %cst_67 : f32 to vector<2x32xf32>
    %294 = arith.addf %293, %292 : vector<2x32xf32>
    %295 = arith.divf %293, %294 : vector<2x32xf32>
    %296 = arith.mulf %287, %233 : vector<2x32xf32>
    %297 = arith.mulf %281, %289 : vector<2x32xf32>
    %298 = arith.addf %296, %297 : vector<2x32xf32>
    %299 = math.tanh %298 : vector<2x32xf32>
    %300 = arith.mulf %295, %299 : vector<2x32xf32>
    %301 = tpu.concatenate %300, %265 in 1 : vector<2x32xf32>, vector<2x32xf32> -> vector<2x64xf32>
    %302 = arith.truncf %301 : vector<2x64xf32> to vector<2x64xbf16>
    %cst_68 = arith.constant dense<0.000000e+00> : vector<2x128xf32>
    %303 = tpu.matmul %302, %4, %cst_68 {dimension_numbers = #tpu.dot_dimension_numbers<[1], [0], [0], [1], [0, 0, 1, 1], [], []>} : vector<2x64xbf16>, vector<64x128xbf16>, vector<2x128xf32> -> vector<2x128xf32>
    %304 = vector.broadcast %5 : vector<1x128xf32> to vector<2x128xf32>
    %305 = arith.addf %303, %304 : vector<2x128xf32>
    %306 = vector.extract_strided_slice %305 {offsets = [0, 0], sizes = [2, 32], strides = [1, 1]} : vector<2x128xf32> to vector<2x32xf32>
    %307 = arith.negf %306 : vector<2x32xf32>
    %308 = math.exp %307 : vector<2x32xf32>
    %cst_69 = arith.constant 1.000000e+00 : f32
    %309 = vector.broadcast %cst_69 : f32 to vector<2x32xf32>
    %310 = arith.addf %309, %308 : vector<2x32xf32>
    %311 = arith.divf %309, %310 : vector<2x32xf32>
    %312 = vector.extract_strided_slice %305 {offsets = [0, 32], sizes = [2, 32], strides = [1, 1]} : vector<2x128xf32> to vector<2x32xf32>
    %313 = arith.negf %312 : vector<2x32xf32>
    %314 = math.exp %313 : vector<2x32xf32>
    %cst_70 = arith.constant 1.000000e+00 : f32
    %315 = vector.broadcast %cst_70 : f32 to vector<2x32xf32>
    %316 = arith.addf %315, %314 : vector<2x32xf32>
    %317 = arith.divf %315, %316 : vector<2x32xf32>
    %318 = vector.extract_strided_slice %305 {offsets = [0, 64], sizes = [2, 32], strides = [1, 1]} : vector<2x128xf32> to vector<2x32xf32>
    %319 = math.tanh %318 : vector<2x32xf32>
    %320 = vector.extract_strided_slice %305 {offsets = [0, 96], sizes = [2, 32], strides = [1, 1]} : vector<2x128xf32> to vector<2x32xf32>
    %321 = arith.negf %320 : vector<2x32xf32>
    %322 = math.exp %321 : vector<2x32xf32>
    %cst_71 = arith.constant 1.000000e+00 : f32
    %323 = vector.broadcast %cst_71 : f32 to vector<2x32xf32>
    %324 = arith.addf %323, %322 : vector<2x32xf32>
    %325 = arith.divf %323, %324 : vector<2x32xf32>
    %326 = arith.mulf %317, %263 : vector<2x32xf32>
    %327 = arith.mulf %311, %319 : vector<2x32xf32>
    %328 = arith.addf %326, %327 : vector<2x32xf32>
    %329 = math.tanh %328 : vector<2x32xf32>
    %330 = arith.mulf %325, %329 : vector<2x32xf32>
    %331 = arith.index_cast %c4_i32 : i32 to index
    %c0_72 = arith.constant 0 : index
    %c0_73 = arith.constant 0 : index
    %332 = vector.load %arg5[%331, %c0_72, %c0_73] : memref<8x2x32xf32, #tpu.memory_space<vmem>>, vector<1x2x32xf32>
    %333 = vector.shape_cast %332 : vector<1x2x32xf32> to vector<2x32xf32>
    %334 = vector.shape_cast %330 : vector<2x32xf32> to vector<1x2x32xf32>
    tpu.vector_store %arg5[%331, %c0_72, %c0_73], %334 {strides = array<i32>} : memref<8x2x32xf32, #tpu.memory_space<vmem>>, vector<1x2x32xf32>,
    %c5_i32 = arith.constant 5 : i32
    %335 = arith.index_cast %c5_i32 : i32 to index
    %c0_74 = arith.constant 0 : index
    %c0_75 = arith.constant 0 : index
    %336 = vector.load %arg1[%335, %c0_74, %c0_75] : memref<8x2x128xf32, #tpu.memory_space<vmem>>, vector<1x2x128xf32>
    %337 = vector.shape_cast %336 : vector<1x2x128xf32> to vector<2x128xf32>
    %338 = arith.truncf %300 : vector<2x32xf32> to vector<2x32xbf16>
    %cst_76 = arith.constant dense<0.000000e+00> : vector<2x128xf32>
    %339 = tpu.matmul %338, %3, %cst_76 {dimension_numbers = #tpu.dot_dimension_numbers<[1], [0], [0], [1], [0, 0, 1, 1], [], []>} : vector<2x32xbf16>, vector<32x128xbf16>, vector<2x128xf32> -> vector<2x128xf32>
    %340 = arith.addf %337, %339 : vector<2x128xf32>
    %341 = vector.extract_strided_slice %340 {offsets = [0, 0], sizes = [2, 32], strides = [1, 1]} : vector<2x128xf32> to vector<2x32xf32>
    %342 = arith.negf %341 : vector<2x32xf32>
    %343 = math.exp %342 : vector<2x32xf32>
    %cst_77 = arith.constant 1.000000e+00 : f32
    %344 = vector.broadcast %cst_77 : f32 to vector<2x32xf32>
    %345 = arith.addf %344, %343 : vector<2x32xf32>
    %346 = arith.divf %344, %345 : vector<2x32xf32>
    %347 = vector.extract_strided_slice %340 {offsets = [0, 32], sizes = [2, 32], strides = [1, 1]} : vector<2x128xf32> to vector<2x32xf32>
    %348 = arith.negf %347 : vector<2x32xf32>
    %349 = math.exp %348 : vector<2x32xf32>
    %cst_78 = arith.constant 1.000000e+00 : f32
    %350 = vector.broadcast %cst_78 : f32 to vector<2x32xf32>
    %351 = arith.addf %350, %349 : vector<2x32xf32>
    %352 = arith.divf %350, %351 : vector<2x32xf32>
    %353 = vector.extract_strided_slice %340 {offsets = [0, 64], sizes = [2, 32], strides = [1, 1]} : vector<2x128xf32> to vector<2x32xf32>
    %354 = math.tanh %353 : vector<2x32xf32>
    %355 = vector.extract_strided_slice %340 {offsets = [0, 96], sizes = [2, 32], strides = [1, 1]} : vector<2x128xf32> to vector<2x32xf32>
    %356 = arith.negf %355 : vector<2x32xf32>
    %357 = math.exp %356 : vector<2x32xf32>
    %cst_79 = arith.constant 1.000000e+00 : f32
    %358 = vector.broadcast %cst_79 : f32 to vector<2x32xf32>
    %359 = arith.addf %358, %357 : vector<2x32xf32>
    %360 = arith.divf %358, %359 : vector<2x32xf32>
    %361 = arith.mulf %352, %298 : vector<2x32xf32>
    %362 = arith.mulf %346, %354 : vector<2x32xf32>
    %363 = arith.addf %361, %362 : vector<2x32xf32>
    %364 = math.tanh %363 : vector<2x32xf32>
    %365 = arith.mulf %360, %364 : vector<2x32xf32>
    %366 = tpu.concatenate %365, %330 in 1 : vector<2x32xf32>, vector<2x32xf32> -> vector<2x64xf32>
    %367 = arith.truncf %366 : vector<2x64xf32> to vector<2x64xbf16>
    %cst_80 = arith.constant dense<0.000000e+00> : vector<2x128xf32>
    %368 = tpu.matmul %367, %4, %cst_80 {dimension_numbers = #tpu.dot_dimension_numbers<[1], [0], [0], [1], [0, 0, 1, 1], [], []>} : vector<2x64xbf16>, vector<64x128xbf16>, vector<2x128xf32> -> vector<2x128xf32>
    %369 = vector.broadcast %5 : vector<1x128xf32> to vector<2x128xf32>
    %370 = arith.addf %368, %369 : vector<2x128xf32>
    %371 = vector.extract_strided_slice %370 {offsets = [0, 0], sizes = [2, 32], strides = [1, 1]} : vector<2x128xf32> to vector<2x32xf32>
    %372 = arith.negf %371 : vector<2x32xf32>
    %373 = math.exp %372 : vector<2x32xf32>
    %cst_81 = arith.constant 1.000000e+00 : f32
    %374 = vector.broadcast %cst_81 : f32 to vector<2x32xf32>
    %375 = arith.addf %374, %373 : vector<2x32xf32>
    %376 = arith.divf %374, %375 : vector<2x32xf32>
    %377 = vector.extract_strided_slice %370 {offsets = [0, 32], sizes = [2, 32], strides = [1, 1]} : vector<2x128xf32> to vector<2x32xf32>
    %378 = arith.negf %377 : vector<2x32xf32>
    %379 = math.exp %378 : vector<2x32xf32>
    %cst_82 = arith.constant 1.000000e+00 : f32
    %380 = vector.broadcast %cst_82 : f32 to vector<2x32xf32>
    %381 = arith.addf %380, %379 : vector<2x32xf32>
    %382 = arith.divf %380, %381 : vector<2x32xf32>
    %383 = vector.extract_strided_slice %370 {offsets = [0, 64], sizes = [2, 32], strides = [1, 1]} : vector<2x128xf32> to vector<2x32xf32>
    %384 = math.tanh %383 : vector<2x32xf32>
    %385 = vector.extract_strided_slice %370 {offsets = [0, 96], sizes = [2, 32], strides = [1, 1]} : vector<2x128xf32> to vector<2x32xf32>
    %386 = arith.negf %385 : vector<2x32xf32>
    %387 = math.exp %386 : vector<2x32xf32>
    %cst_83 = arith.constant 1.000000e+00 : f32
    %388 = vector.broadcast %cst_83 : f32 to vector<2x32xf32>
    %389 = arith.addf %388, %387 : vector<2x32xf32>
    %390 = arith.divf %388, %389 : vector<2x32xf32>
    %391 = arith.mulf %382, %328 : vector<2x32xf32>
    %392 = arith.mulf %376, %384 : vector<2x32xf32>
    %393 = arith.addf %391, %392 : vector<2x32xf32>
    %394 = math.tanh %393 : vector<2x32xf32>
    %395 = arith.mulf %390, %394 : vector<2x32xf32>
    %396 = arith.index_cast %c5_i32 : i32 to index
    %c0_84 = arith.constant 0 : index
    %c0_85 = arith.constant 0 : index
    %397 = vector.load %arg5[%396, %c0_84, %c0_85] : memref<8x2x32xf32, #tpu.memory_space<vmem>>, vector<1x2x32xf32>
    %398 = vector.shape_cast %397 : vector<1x2x32xf32> to vector<2x32xf32>
    %399 = vector.shape_cast %395 : vector<2x32xf32> to vector<1x2x32xf32>
    tpu.vector_store %arg5[%396, %c0_84, %c0_85], %399 {strides = array<i32>} : memref<8x2x32xf32, #tpu.memory_space<vmem>>, vector<1x2x32xf32>,
    %c6_i32 = arith.constant 6 : i32
    %400 = arith.index_cast %c6_i32 : i32 to index
    %c0_86 = arith.constant 0 : index
    %c0_87 = arith.constant 0 : index
    %401 = vector.load %arg1[%400, %c0_86, %c0_87] : memref<8x2x128xf32, #tpu.memory_space<vmem>>, vector<1x2x128xf32>
    %402 = vector.shape_cast %401 : vector<1x2x128xf32> to vector<2x128xf32>
    %403 = arith.truncf %365 : vector<2x32xf32> to vector<2x32xbf16>
    %cst_88 = arith.constant dense<0.000000e+00> : vector<2x128xf32>
    %404 = tpu.matmul %403, %3, %cst_88 {dimension_numbers = #tpu.dot_dimension_numbers<[1], [0], [0], [1], [0, 0, 1, 1], [], []>} : vector<2x32xbf16>, vector<32x128xbf16>, vector<2x128xf32> -> vector<2x128xf32>
    %405 = arith.addf %402, %404 : vector<2x128xf32>
    %406 = vector.extract_strided_slice %405 {offsets = [0, 0], sizes = [2, 32], strides = [1, 1]} : vector<2x128xf32> to vector<2x32xf32>
    %407 = arith.negf %406 : vector<2x32xf32>
    %408 = math.exp %407 : vector<2x32xf32>
    %cst_89 = arith.constant 1.000000e+00 : f32
    %409 = vector.broadcast %cst_89 : f32 to vector<2x32xf32>
    %410 = arith.addf %409, %408 : vector<2x32xf32>
    %411 = arith.divf %409, %410 : vector<2x32xf32>
    %412 = vector.extract_strided_slice %405 {offsets = [0, 32], sizes = [2, 32], strides = [1, 1]} : vector<2x128xf32> to vector<2x32xf32>
    %413 = arith.negf %412 : vector<2x32xf32>
    %414 = math.exp %413 : vector<2x32xf32>
    %cst_90 = arith.constant 1.000000e+00 : f32
    %415 = vector.broadcast %cst_90 : f32 to vector<2x32xf32>
    %416 = arith.addf %415, %414 : vector<2x32xf32>
    %417 = arith.divf %415, %416 : vector<2x32xf32>
    %418 = vector.extract_strided_slice %405 {offsets = [0, 64], sizes = [2, 32], strides = [1, 1]} : vector<2x128xf32> to vector<2x32xf32>
    %419 = math.tanh %418 : vector<2x32xf32>
    %420 = vector.extract_strided_slice %405 {offsets = [0, 96], sizes = [2, 32], strides = [1, 1]} : vector<2x128xf32> to vector<2x32xf32>
    %421 = arith.negf %420 : vector<2x32xf32>
    %422 = math.exp %421 : vector<2x32xf32>
    %cst_91 = arith.constant 1.000000e+00 : f32
    %423 = vector.broadcast %cst_91 : f32 to vector<2x32xf32>
    %424 = arith.addf %423, %422 : vector<2x32xf32>
    %425 = arith.divf %423, %424 : vector<2x32xf32>
    %426 = arith.mulf %417, %363 : vector<2x32xf32>
    %427 = arith.mulf %411, %419 : vector<2x32xf32>
    %428 = arith.addf %426, %427 : vector<2x32xf32>
    %429 = math.tanh %428 : vector<2x32xf32>
    %430 = arith.mulf %425, %429 : vector<2x32xf32>
    %431 = tpu.concatenate %430, %395 in 1 : vector<2x32xf32>, vector<2x32xf32> -> vector<2x64xf32>
    %432 = arith.truncf %431 : vector<2x64xf32> to vector<2x64xbf16>
    %cst_92 = arith.constant dense<0.000000e+00> : vector<2x128xf32>
    %433 = tpu.matmul %432, %4, %cst_92 {dimension_numbers = #tpu.dot_dimension_numbers<[1], [0], [0], [1], [0, 0, 1, 1], [], []>} : vector<2x64xbf16>, vector<64x128xbf16>, vector<2x128xf32> -> vector<2x128xf32>
    %434 = vector.broadcast %5 : vector<1x128xf32> to vector<2x128xf32>
    %435 = arith.addf %433, %434 : vector<2x128xf32>
    %436 = vector.extract_strided_slice %435 {offsets = [0, 0], sizes = [2, 32], strides = [1, 1]} : vector<2x128xf32> to vector<2x32xf32>
    %437 = arith.negf %436 : vector<2x32xf32>
    %438 = math.exp %437 : vector<2x32xf32>
    %cst_93 = arith.constant 1.000000e+00 : f32
    %439 = vector.broadcast %cst_93 : f32 to vector<2x32xf32>
    %440 = arith.addf %439, %438 : vector<2x32xf32>
    %441 = arith.divf %439, %440 : vector<2x32xf32>
    %442 = vector.extract_strided_slice %435 {offsets = [0, 32], sizes = [2, 32], strides = [1, 1]} : vector<2x128xf32> to vector<2x32xf32>
    %443 = arith.negf %442 : vector<2x32xf32>
    %444 = math.exp %443 : vector<2x32xf32>
    %cst_94 = arith.constant 1.000000e+00 : f32
    %445 = vector.broadcast %cst_94 : f32 to vector<2x32xf32>
    %446 = arith.addf %445, %444 : vector<2x32xf32>
    %447 = arith.divf %445, %446 : vector<2x32xf32>
    %448 = vector.extract_strided_slice %435 {offsets = [0, 64], sizes = [2, 32], strides = [1, 1]} : vector<2x128xf32> to vector<2x32xf32>
    %449 = math.tanh %448 : vector<2x32xf32>
    %450 = vector.extract_strided_slice %435 {offsets = [0, 96], sizes = [2, 32], strides = [1, 1]} : vector<2x128xf32> to vector<2x32xf32>
    %451 = arith.negf %450 : vector<2x32xf32>
    %452 = math.exp %451 : vector<2x32xf32>
    %cst_95 = arith.constant 1.000000e+00 : f32
    %453 = vector.broadcast %cst_95 : f32 to vector<2x32xf32>
    %454 = arith.addf %453, %452 : vector<2x32xf32>
    %455 = arith.divf %453, %454 : vector<2x32xf32>
    %456 = arith.mulf %447, %393 : vector<2x32xf32>
    %457 = arith.mulf %441, %449 : vector<2x32xf32>
    %458 = arith.addf %456, %457 : vector<2x32xf32>
    %459 = math.tanh %458 : vector<2x32xf32>
    %460 = arith.mulf %455, %459 : vector<2x32xf32>
    %461 = arith.index_cast %c6_i32 : i32 to index
    %c0_96 = arith.constant 0 : index
    %c0_97 = arith.constant 0 : index
    %462 = vector.load %arg5[%461, %c0_96, %c0_97] : memref<8x2x32xf32, #tpu.memory_space<vmem>>, vector<1x2x32xf32>
    %463 = vector.shape_cast %462 : vector<1x2x32xf32> to vector<2x32xf32>
    %464 = vector.shape_cast %460 : vector<2x32xf32> to vector<1x2x32xf32>
    tpu.vector_store %arg5[%461, %c0_96, %c0_97], %464 {strides = array<i32>} : memref<8x2x32xf32, #tpu.memory_space<vmem>>, vector<1x2x32xf32>,
    %c7_i32 = arith.constant 7 : i32
    %465 = arith.index_cast %c7_i32 : i32 to index
    %c0_98 = arith.constant 0 : index
    %c0_99 = arith.constant 0 : index
    %466 = vector.load %arg1[%465, %c0_98, %c0_99] : memref<8x2x128xf32, #tpu.memory_space<vmem>>, vector<1x2x128xf32>
    %467 = vector.shape_cast %466 : vector<1x2x128xf32> to vector<2x128xf32>
    %468 = arith.truncf %430 : vector<2x32xf32> to vector<2x32xbf16>
    %cst_100 = arith.constant dense<0.000000e+00> : vector<2x128xf32>
    %469 = tpu.matmul %468, %3, %cst_100 {dimension_numbers = #tpu.dot_dimension_numbers<[1], [0], [0], [1], [0, 0, 1, 1], [], []>} : vector<2x32xbf16>, vector<32x128xbf16>, vector<2x128xf32> -> vector<2x128xf32>
    %470 = arith.addf %467, %469 : vector<2x128xf32>
    %471 = vector.extract_strided_slice %470 {offsets = [0, 0], sizes = [2, 32], strides = [1, 1]} : vector<2x128xf32> to vector<2x32xf32>
    %472 = arith.negf %471 : vector<2x32xf32>
    %473 = math.exp %472 : vector<2x32xf32>
    %cst_101 = arith.constant 1.000000e+00 : f32
    %474 = vector.broadcast %cst_101 : f32 to vector<2x32xf32>
    %475 = arith.addf %474, %473 : vector<2x32xf32>
    %476 = arith.divf %474, %475 : vector<2x32xf32>
    %477 = vector.extract_strided_slice %470 {offsets = [0, 32], sizes = [2, 32], strides = [1, 1]} : vector<2x128xf32> to vector<2x32xf32>
    %478 = arith.negf %477 : vector<2x32xf32>
    %479 = math.exp %478 : vector<2x32xf32>
    %cst_102 = arith.constant 1.000000e+00 : f32
    %480 = vector.broadcast %cst_102 : f32 to vector<2x32xf32>
    %481 = arith.addf %480, %479 : vector<2x32xf32>
    %482 = arith.divf %480, %481 : vector<2x32xf32>
    %483 = vector.extract_strided_slice %470 {offsets = [0, 64], sizes = [2, 32], strides = [1, 1]} : vector<2x128xf32> to vector<2x32xf32>
    %484 = math.tanh %483 : vector<2x32xf32>
    %485 = vector.extract_strided_slice %470 {offsets = [0, 96], sizes = [2, 32], strides = [1, 1]} : vector<2x128xf32> to vector<2x32xf32>
    %486 = arith.negf %485 : vector<2x32xf32>
    %487 = math.exp %486 : vector<2x32xf32>
    %cst_103 = arith.constant 1.000000e+00 : f32
    %488 = vector.broadcast %cst_103 : f32 to vector<2x32xf32>
    %489 = arith.addf %488, %487 : vector<2x32xf32>
    %490 = arith.divf %488, %489 : vector<2x32xf32>
    %491 = arith.mulf %482, %428 : vector<2x32xf32>
    %492 = arith.mulf %476, %484 : vector<2x32xf32>
    %493 = arith.addf %491, %492 : vector<2x32xf32>
    %494 = math.tanh %493 : vector<2x32xf32>
    %495 = arith.mulf %490, %494 : vector<2x32xf32>
    %496 = tpu.concatenate %495, %460 in 1 : vector<2x32xf32>, vector<2x32xf32> -> vector<2x64xf32>
    %497 = arith.truncf %496 : vector<2x64xf32> to vector<2x64xbf16>
    %cst_104 = arith.constant dense<0.000000e+00> : vector<2x128xf32>
    %498 = tpu.matmul %497, %4, %cst_104 {dimension_numbers = #tpu.dot_dimension_numbers<[1], [0], [0], [1], [0, 0, 1, 1], [], []>} : vector<2x64xbf16>, vector<64x128xbf16>, vector<2x128xf32> -> vector<2x128xf32>
    %499 = vector.broadcast %5 : vector<1x128xf32> to vector<2x128xf32>
    %500 = arith.addf %498, %499 : vector<2x128xf32>
    %501 = vector.extract_strided_slice %500 {offsets = [0, 0], sizes = [2, 32], strides = [1, 1]} : vector<2x128xf32> to vector<2x32xf32>
    %502 = arith.negf %501 : vector<2x32xf32>
    %503 = math.exp %502 : vector<2x32xf32>
    %cst_105 = arith.constant 1.000000e+00 : f32
    %504 = vector.broadcast %cst_105 : f32 to vector<2x32xf32>
    %505 = arith.addf %504, %503 : vector<2x32xf32>
    %506 = arith.divf %504, %505 : vector<2x32xf32>
    %507 = vector.extract_strided_slice %500 {offsets = [0, 32], sizes = [2, 32], strides = [1, 1]} : vector<2x128xf32> to vector<2x32xf32>
    %508 = arith.negf %507 : vector<2x32xf32>
    %509 = math.exp %508 : vector<2x32xf32>
    %cst_106 = arith.constant 1.000000e+00 : f32
    %510 = vector.broadcast %cst_106 : f32 to vector<2x32xf32>
    %511 = arith.addf %510, %509 : vector<2x32xf32>
    %512 = arith.divf %510, %511 : vector<2x32xf32>
    %513 = vector.extract_strided_slice %500 {offsets = [0, 64], sizes = [2, 32], strides = [1, 1]} : vector<2x128xf32> to vector<2x32xf32>
    %514 = math.tanh %513 : vector<2x32xf32>
    %515 = vector.extract_strided_slice %500 {offsets = [0, 96], sizes = [2, 32], strides = [1, 1]} : vector<2x128xf32> to vector<2x32xf32>
    %516 = arith.negf %515 : vector<2x32xf32>
    %517 = math.exp %516 : vector<2x32xf32>
    %cst_107 = arith.constant 1.000000e+00 : f32
    %518 = vector.broadcast %cst_107 : f32 to vector<2x32xf32>
    %519 = arith.addf %518, %517 : vector<2x32xf32>
    %520 = arith.divf %518, %519 : vector<2x32xf32>
    %521 = arith.mulf %512, %458 : vector<2x32xf32>
    %522 = arith.mulf %506, %514 : vector<2x32xf32>
    %523 = arith.addf %521, %522 : vector<2x32xf32>
    %524 = math.tanh %523 : vector<2x32xf32>
    %525 = arith.mulf %520, %524 : vector<2x32xf32>
    %526 = arith.index_cast %c7_i32 : i32 to index
    %c0_108 = arith.constant 0 : index
    %c0_109 = arith.constant 0 : index
    %527 = vector.load %arg5[%526, %c0_108, %c0_109] : memref<8x2x32xf32, #tpu.memory_space<vmem>>, vector<1x2x32xf32>
    %528 = vector.shape_cast %527 : vector<1x2x32xf32> to vector<2x32xf32>
    %529 = vector.shape_cast %525 : vector<2x32xf32> to vector<1x2x32xf32>
    tpu.vector_store %arg5[%526, %c0_108, %c0_109], %529 {strides = array<i32>} : memref<8x2x32xf32, #tpu.memory_space<vmem>>, vector<1x2x32xf32>,
    %c8_i32 = arith.constant 8 : i32
    %c0_110 = arith.constant 0 : index
    %c0_111 = arith.constant 0 : index
    %530 = vector.load %arg6[%c0_110, %c0_111] : memref<2x32xf32, #tpu.memory_space<vmem>>, vector<2x32xf32>
    tpu.vector_store %arg6[%c0_110, %c0_111], %495 {strides = array<i32>} : memref<2x32xf32, #tpu.memory_space<vmem>>, vector<2x32xf32>,
    %c0_112 = arith.constant 0 : index
    %c0_113 = arith.constant 0 : index
    %531 = vector.load %arg7[%c0_112, %c0_113] : memref<2x32xf32, #tpu.memory_space<vmem>>, vector<2x32xf32>
    tpu.vector_store %arg7[%c0_112, %c0_113], %493 {strides = array<i32>} : memref<2x32xf32, #tpu.memory_space<vmem>>, vector<2x32xf32>,
    %c0_114 = arith.constant 0 : index
    %c0_115 = arith.constant 0 : index
    %532 = vector.load %arg8[%c0_114, %c0_115] : memref<2x32xf32, #tpu.memory_space<vmem>>, vector<2x32xf32>
    tpu.vector_store %arg8[%c0_114, %c0_115], %525 {strides = array<i32>} : memref<2x32xf32, #tpu.memory_space<vmem>>, vector<2x32xf32>,
    %c0_116 = arith.constant 0 : index
    %c0_117 = arith.constant 0 : index
    %533 = vector.load %arg9[%c0_116, %c0_117] : memref<2x32xf32, #tpu.memory_space<vmem>>, vector<2x32xf32>
    tpu.vector_store %arg9[%c0_116, %c0_117], %523 {strides = array<i32>} : memref<2x32xf32, #tpu.memory_space<vmem>>, vector<2x32xf32>,
    return
  }
  func.func @transform_0(%arg0: i32) -> (i32, i32, i32) {
    %c0_i32 = arith.constant 0 : i32
    %c0_i32_0 = arith.constant 0 : i32
    %c0_i32_1 = arith.constant 0 : i32
    return %arg0, %c0_i32, %c0_i32_0 : i32, i32, i32
  }
  func.func @transform_1(%arg0: i32) -> (i32, i32) {
    %c0_i32 = arith.constant 0 : i32
    %c0_i32_0 = arith.constant 0 : i32
    %c0_i32_1 = arith.constant 0 : i32
    return %c0_i32, %c0_i32_0 : i32, i32
  }
  func.func @transform_2(%arg0: i32) -> (i32, i32) {
    %c0_i32 = arith.constant 0 : i32
    %c0_i32_0 = arith.constant 0 : i32
    %c0_i32_1 = arith.constant 0 : i32
    return %c0_i32, %c0_i32_0 : i32, i32
  }
  func.func @transform_3(%arg0: i32) -> (i32, i32) {
    %c0_i32 = arith.constant 0 : i32
    %c0_i32_0 = arith.constant 0 : i32
    %c0_i32_1 = arith.constant 0 : i32
    return %c0_i32, %c0_i32_0 : i32, i32
  }
  func.func @transform_4(%arg0: i32) -> (i32, i32, i32) {
    %c0_i32 = arith.constant 0 : i32
    %c0_i32_0 = arith.constant 0 : i32
    %c0_i32_1 = arith.constant 0 : i32
    return %arg0, %c0_i32, %c0_i32_0 : i32, i32, i32
  }
}

module attributes {stable_mosaic.version = 11 : i64} {
  func.func @matmul_bias_relu_kernel(%arg0: memref<8x60xbf16, #tpu.memory_space<vmem>>, %arg1: memref<60x128xbf16, #tpu.memory_space<vmem>>, %arg2: memref<8x1xf32, #tpu.memory_space<vmem>>, %arg3: memref<8x128xf32, #tpu.memory_space<vmem>>) attributes {dimension_semantics = [], scalar_prefetch = 0 : i64, scratch_operands = 0 : i64, tpu.core_type = #tpu.core_type<tc>} {
    %c0 = arith.constant 0 : index
    %c0_0 = arith.constant 0 : index
    %0 = vector.load %arg0[%c0, %c0_0] : memref<8x60xbf16, #tpu.memory_space<vmem>>, vector<8x60xbf16>
    %c0_1 = arith.constant 0 : index
    %c0_2 = arith.constant 0 : index
    %1 = vector.load %arg1[%c0_1, %c0_2] : memref<60x128xbf16, #tpu.memory_space<vmem>>, vector<60x128xbf16>
    %cst = arith.constant dense<0.000000e+00> : vector<8x128xf32>
    %2 = tpu.matmul %0, %1, %cst {dimension_numbers = #tpu.dot_dimension_numbers<[1], [0], [0], [1], [0, 0, 1, 1], [], []>} : vector<8x60xbf16>, vector<60x128xbf16>, vector<8x128xf32> -> vector<8x128xf32>
    %c0_3 = arith.constant 0 : index
    %c0_4 = arith.constant 0 : index
    %3 = vector.load %arg2[%c0_3, %c0_4] : memref<8x1xf32, #tpu.memory_space<vmem>>, vector<8x1xf32>
    %4 = vector.broadcast %3 : vector<8x1xf32> to vector<8x128xf32>
    %5 = arith.addf %2, %4 : vector<8x128xf32>
    %cst_5 = arith.constant 0.000000e+00 : f32
    %6 = vector.broadcast %cst_5 : f32 to vector<8x128xf32>
    %7 = arith.maximumf %5, %6 : vector<8x128xf32>
    %c0_6 = arith.constant 0 : index
    %c0_7 = arith.constant 0 : index
    %8 = vector.load %arg3[%c0_6, %c0_7] : memref<8x128xf32, #tpu.memory_space<vmem>>, vector<8x128xf32>
    tpu.vector_store %arg3[%c0_6, %c0_7], %7 {strides = array<i32>} : memref<8x128xf32, #tpu.memory_space<vmem>>, vector<8x128xf32>,
    return
  }
}

module attributes {stable_mosaic.version = 11 : i64} {
  func.func @conv2_head_kernel(%arg0: memref<4x24xbf16, #tpu.memory_space<vmem>>, %arg1: memref<24x128xbf16, #tpu.memory_space<vmem>>, %arg2: memref<4x1xf32, #tpu.memory_space<vmem>>, %arg3: memref<1x1xf32, #tpu.memory_space<vmem>>, %arg4: memref<4x128xf32, #tpu.memory_space<vmem>>, %arg5: memref<1x1xf32, #tpu.memory_space<vmem>>, %arg6: memref<2x1xf32, #tpu.memory_space<vmem>>) attributes {dimension_semantics = [], scalar_prefetch = 0 : i64, scratch_operands = 0 : i64, tpu.core_type = #tpu.core_type<tc>} {
    %c0 = arith.constant 0 : index
    %c0_0 = arith.constant 0 : index
    %0 = vector.load %arg0[%c0, %c0_0] : memref<4x24xbf16, #tpu.memory_space<vmem>>, vector<4x24xbf16>
    %c0_1 = arith.constant 0 : index
    %c0_2 = arith.constant 0 : index
    %1 = vector.load %arg1[%c0_1, %c0_2] : memref<24x128xbf16, #tpu.memory_space<vmem>>, vector<24x128xbf16>
    %cst = arith.constant dense<0.000000e+00> : vector<4x128xf32>
    %2 = tpu.matmul %0, %1, %cst {dimension_numbers = #tpu.dot_dimension_numbers<[1], [0], [0], [1], [0, 0, 1, 1], [], []>} : vector<4x24xbf16>, vector<24x128xbf16>, vector<4x128xf32> -> vector<4x128xf32>
    %c0_3 = arith.constant 0 : index
    %c0_4 = arith.constant 0 : index
    %3 = vector.load %arg2[%c0_3, %c0_4] : memref<4x1xf32, #tpu.memory_space<vmem>>, vector<4x1xf32>
    %4 = vector.broadcast %3 : vector<4x1xf32> to vector<4x128xf32>
    %5 = arith.addf %2, %4 : vector<4x128xf32>
    %cst_5 = arith.constant 0.000000e+00 : f32
    %6 = vector.broadcast %cst_5 : f32 to vector<4x128xf32>
    %7 = arith.maximumf %5, %6 : vector<4x128xf32>
    %cst_6 = arith.constant 0.000000e+00 : f32
    %8 = vector.broadcast %cst_6 : f32 to vector<4x128xf32>
    %9 = arith.maximumf %7, %8 : vector<4x128xf32>
    %c0_7 = arith.constant 0 : index
    %c0_8 = arith.constant 0 : index
    %10 = vector.load %arg3[%c0_7, %c0_8] : memref<1x1xf32, #tpu.memory_space<vmem>>, vector<1x1xf32>
    %cst_9 = arith.constant 0.000000e+00 : f32
    %11 = vector.broadcast %cst_9 : f32 to vector<4x128xf32>
    %12 = arith.minimumf %7, %11 : vector<4x128xf32>
    %13 = vector.broadcast %10 : vector<1x1xf32> to vector<4x128xf32>
    %14 = arith.mulf %13, %12 : vector<4x128xf32>
    %15 = arith.addf %9, %14 : vector<4x128xf32>
    %c0_10 = arith.constant 0 : index
    %c0_11 = arith.constant 0 : index
    %16 = vector.load %arg4[%c0_10, %c0_11] : memref<4x128xf32, #tpu.memory_space<vmem>>, vector<4x128xf32>
    %17 = arith.mulf %15, %16 : vector<4x128xf32>
    %18 = vector.extract_strided_slice %17 {offsets = [0, 0], sizes = [4, 32], strides = [1, 1]} : vector<4x128xf32> to vector<4x32xf32>
    %19 = vector.shape_cast %18 : vector<4x32xf32> to vector<1x4x32xf32>
    %cst_12 = arith.constant dense<0.000000e+00> : vector<1xf32>
    %20 = vector.multi_reduction <add>, %19, %cst_12 [1, 2] : vector<1x4x32xf32> to vector<1xf32>
    %21 = vector.shape_cast %20 : vector<1xf32> to vector<1x1x1xf32>
    %22 = vector.extract %21[0, 0, 0] : f32 from vector<1x1x1xf32>
    %23 = vector.broadcast %22 : f32 to vector<1x1xf32>
    %24 = vector.extract_strided_slice %17 {offsets = [0, 32], sizes = [4, 32], strides = [1, 1]} : vector<4x128xf32> to vector<4x32xf32>
    %25 = vector.shape_cast %24 : vector<4x32xf32> to vector<1x4x32xf32>
    %cst_13 = arith.constant dense<0.000000e+00> : vector<1xf32>
    %26 = vector.multi_reduction <add>, %25, %cst_13 [1, 2] : vector<1x4x32xf32> to vector<1xf32>
    %27 = vector.shape_cast %26 : vector<1xf32> to vector<1x1x1xf32>
    %28 = vector.extract %27[0, 0, 0] : f32 from vector<1x1x1xf32>
    %29 = vector.broadcast %28 : f32 to vector<1x1xf32>
    %30 = tpu.concatenate %23, %29 in 0 : vector<1x1xf32>, vector<1x1xf32> -> vector<2x1xf32>
    %c0_14 = arith.constant 0 : index
    %c0_15 = arith.constant 0 : index
    %31 = vector.load %arg5[%c0_14, %c0_15] : memref<1x1xf32, #tpu.memory_space<vmem>>, vector<1x1xf32>
    %32 = vector.broadcast %31 : vector<1x1xf32> to vector<2x1xf32>
    %33 = arith.addf %30, %32 : vector<2x1xf32>
    %34 = arith.negf %33 : vector<2x1xf32>
    %35 = math.exp %34 : vector<2x1xf32>
    %cst_16 = arith.constant 1.000000e+00 : f32
    %36 = vector.broadcast %cst_16 : f32 to vector<2x1xf32>
    %37 = arith.addf %36, %35 : vector<2x1xf32>
    %38 = arith.divf %36, %37 : vector<2x1xf32>
    %c0_17 = arith.constant 0 : index
    %c0_18 = arith.constant 0 : index
    %39 = vector.load %arg6[%c0_17, %c0_18] : memref<2x1xf32, #tpu.memory_space<vmem>>, vector<2x1xf32>
    tpu.vector_store %arg6[%c0_17, %c0_18], %38 {strides = array<i32>} : memref<2x1xf32, #tpu.memory_space<vmem>>, vector<2x1xf32>,
    return
  }
}

</mosaic_0001>

<llo_original>
// kernel: discriminator_forward.4
$region0: #{discriminator_forward.4}
  #allocation0 [shape = 'u32[]', space=smem, size = 0x4, offset = 0x4, fixed_abs, tag = 'smem constant byte address 0x4 - core index']
  #allocation1 [shape = 'u32[144,128]{1,0:T(1,128)}', space=vmem, size = 0x12000, scoped, tag = 'internal scratch']
  %s0 = inlined_call_operand.vmem [shape: bf16[20,12], index: 0, kind: input, shape index: {}]
  %s1 = inlined_call_operand.vmem [shape: bf16[12,128], index: 1, kind: input, shape index: {}]
  %s2 = inlined_call_operand.vmem [shape: f32[20,1], index: 2, kind: input, shape index: {}]
  %s3 = inlined_call_operand.vmem [shape: f32[20,128], index: 3, kind: output, shape index: {}]
  %s4 = sld [smem:[#allocation0]]
  $region22: #{discriminator_forward.4} parent=0
    _
  %s6 = ssub.s32 1, %s4
  %s7 = scalar_select 0, %s6, %s4
  // Predicated region
  $region2: #{discriminator_forward.4} parent=0 // pred_check
    _
  $region3: #{discriminator_forward.4} parent=0 // pred_check_branch
    %9 = sbr.rel (0) target = $region5
  $region4: #{discriminator_forward.4} parent=0 // pred_region
    _
  $region5: #{discriminator_forward.4} parent=0 // pred_fallthru
    _
  // Predicated region
  $region6: #{discriminator_forward.4} parent=0 // pred_check
    _
  $region7: #{discriminator_forward.4} parent=0 // pred_check_branch
    %11 = sbr.rel (0) target = $region9
  $region8: #{discriminator_forward.4} parent=0 // pred_region
    _
  $region9: #{discriminator_forward.4} parent=0 // pred_fallthru
    _
  // Predicated region
  $region10: #{discriminator_forward.4} parent=0 // pred_check
    _
  $region11: #{discriminator_forward.4} parent=0 // pred_check_branch
    %13 = sbr.rel (0) target = $region13
  $region12: #{discriminator_forward.4} parent=0 // pred_region
    _
  $region13: #{discriminator_forward.4} parent=0 // pred_fallthru
    _
  %v15 = vld [vmem:[%s0] sm:$0xf]
  %v16 = vld [vmem:[%s0 + $0x4] sm:$0xf]
  %v17 = vld [vmem:[%s0 + $0x8] sm:$0x3]
  %v18 = vld [vmem:[%s1] sm:$0xf]
  %v19 = vld [vmem:[%s1 + $0x4] sm:$0x3]
  %v20 = vld [vmem:[%s2] sm:$0xff]
  %v21 = vld [vmem:[%s2 + $0x8] sm:$0xff]
  %v22 = vld [vmem:[%s2 + $0x10] sm:$0xf]
  %24 = vset.pattern.permute.xlu0 0
  %25 = vperm.xlu0 %24, %v20
  %v26 = vpop.permute.xlu0 %25
  %29 = vset.pattern.permute.xlu0 0
  %30 = vperm.xlu0 %29, %v21
  %v31 = vpop.permute.xlu0 %30
  %34 = vset.pattern.permute.xlu0 0
  %35 = vperm.xlu0 %34, %v22
  %v36 = vpop.permute.xlu0 %35
  %v41 = vunpack.c.l.b16 %v15
  %v42 = vunpack.c.l.b16 %v16
  %v43 = vunpack.c.l.b16 %v17
  %v44 = vpack.c.b16 %v42, %v41
  %v45 = vpack.c.b16 %v43, %v43
  %v48 = vunpack.c.l.b16 %v18
  %v49 = vunpack.c.l.b16 %v19
  %v50 = vpack.c.b16 %v49, %v48
  %vm51 = vcmask 97280
  %v53 = vsel %vm51, %v44, 0
  %v56 = vsel %vm51, %v45, 0
  %vm58 = vcmask 1045504
  %v60 = vsel %vm58, %v50, 0
  %62 = vmatprep.subr.bf16.mxu0 0
  %63 = vmatpush1.bf16.msra.mxu0 %v60
  %64 = vmatprep.subr.bf16.mxu0 0
  %65 = vmatpush1.bf16.msra.mxu0 0
  %66 = vmatprep.subr.bf16.mxu0 0
  %67 = vmatpush1.bf16.msra.mxu0 0
  %68 = vmatprep.subr.bf16.mxu0 0
  %69 = vmatpush1.bf16.msra.mxu0 0
  %70 = vmatprep.subr.bf16.mxu0 0
  %71 = vmatpush1.bf16.msra.mxu0 0
  %72 = vmatprep.subr.bf16.mxu0 0
  %73 = vmatpush1.bf16.msra.mxu0 0
  %74 = vmatprep.subr.bf16.mxu0 0
  %75 = vmatpush1.bf16.msra.mxu0 0
  %76 = vmatprep.subr.bf16.mxu0 0
  %77 = vmatpush1.bf16.msra.mxu0 0
  %78 = vmatprep.subr.bf16.mxu0 0
  %79 = vmatpush1.bf16.msra.mxu0 0
  %80 = vmatprep.subr.bf16.mxu0 0
  %81 = vmatpush1.bf16.msra.mxu0 0
  %82 = vmatprep.subr.bf16.mxu0 0
  %83 = vmatpush1.bf16.msra.mxu0 0
  %84 = vmatprep.subr.bf16.mxu0 0
  %85 = vmatpush1.bf16.msra.mxu0 0
  %86 = vmatprep.subr.bf16.mxu0 0
  %87 = vmatpush1.bf16.msra.mxu0 0
  %88 = vmatprep.subr.bf16.mxu0 0
  %89 = vmatpush1.bf16.msra.mxu0 0
  %90 = vmatprep.subr.bf16.mxu0 0
  %91 = vmatpush1.bf16.msra.mxu0 0
  %92 = vmatprep.subr.bf16.mxu0 0
  %93 = vmatpush1.bf16.msra.mxu0 0
  %94 = vmatprep.mubr.bf16.mxu0 0
  %95 = vmatmul.mubr.bf16.gmra.mrb[0].mxu0 %v53
  %v96 = vpop.f32.mrb[0].mxu0
  %v97 = vadd.f32 %v26, %v96
  %v98 = vpop.f32.mrb[0].mxu0
  %v99 = vpop.f32.mrb[0].mxu0
  %v100 = vadd.f32 %v31, %v99
  %v101 = vpop.f32.mrb[0].mxu0
  %102 = vmatprep.mubr.bf16.mxu0 0
  %103 = vmatmul.mubr.bf16.gmra.mrb[0].mxu0 %v56
  %v104 = vpop.f32.mrb[0].mxu0
  %v105 = vadd.f32 %v36, %v104
  %v106 = vpop.f32.mrb[0].mxu0
  %v107 = vpop.f32.mrb[0].mxu0
  %v108 = vpop.f32.mrb[0].mxu0
  %109 = vdwg.mxu0
  %v110 = vmax.f32 %v97, 0.0
  %v111 = vmax.f32 %v100, 0.0
  %v112 = vmax.f32 %v105, 0.0
  %113 = vst [vmem:[%s3] sm:$0xff] %v110
  %114 = vst [vmem:[%s3 + $0x8] sm:$0xff] %v111
  %115 = vst [vmem:[%s3 + $0x10] sm:$0xf] %v112
  // Predicated region
  $region14: #{discriminator_forward.4} parent=0 // pred_check
    _
  $region15: #{discriminator_forward.4} parent=0 // pred_check_branch
    %117 = sbr.rel (0) target = $region17
  $region16: #{discriminator_forward.4} parent=0 // pred_region
    _
  $region17: #{discriminator_forward.4} parent=0 // pred_fallthru
    _
  // Predicated region
  $region18: #{discriminator_forward.4} parent=0 // pred_check
    _
  $region19: #{discriminator_forward.4} parent=0 // pred_check_branch
    %119 = sbr.rel (0) target = $region21
  $region20: #{discriminator_forward.4} parent=0 // pred_region
    _
  $region21: #{discriminator_forward.4} parent=0 // pred_fallthru
    _

// kernel: tile.7
$region0: #{tile.7}
  %s0 = inlined_call_operand.vmem [shape: f32[4,2,32], index: 0, kind: input, shape index: {}]
  %s1 = inlined_call_operand.vmem [shape: f32[4,64], index: 1, kind: output, shape index: {}]
  $region1: #{tile.7} parent=0
    #allocation0 [shape = 'u8[4096]{0}', space=vmem, size = 0x1000, scoped, tag = 'scoped mem for output reshape']
    #allocation1 [shape = 'u8[16384]{0}', space=vmem, size = 0x4000, scoped, tag = 'scoped mem for input reshape']
    %s3 = sshllo.u32 0, 2
    %s4 = smul.addr 2, 3
    %s5 = scalar_lea.vmem %s0, %s4
    %v6 = vld [vmem:[%s5] sm:%s3]
    %s7 = scalar_lea.vmem [#allocation1], 24
    %8 = vst [vmem:[%s7] sm:%s3] %v6
    %s9 = smul.addr 2, 2
    %s10 = scalar_lea.vmem %s0, %s9
    %v11 = vld [vmem:[%s10] sm:%s3]
    %s12 = scalar_lea.vmem [#allocation1], 16
    %13 = vst [vmem:[%s12] sm:%s3] %v11
    %s14 = scalar_lea.vmem %s0, 2
    %v15 = vld [vmem:[%s14] sm:%s3]
    %s16 = scalar_lea.vmem [#allocation1], 8
    %17 = vst [vmem:[%s16] sm:%s3] %v15
    %v18 = vld [vmem:[%s0] sm:%s3]
    %19 = vst [vmem:[#allocation1] sm:%s3] %v18
    %v20 = vld [vmem:[#allocation1] ss:$8 sm:$0xf]
    %vm21 = vcmask 261120
    %22 = vst.msk [vmem:[#allocation0] sm:$0xf] %vm21, %v20
    %s23 = scalar_lea.vmem [#allocation1], 1
    %v24 = vld [vmem:[%s23] ss:$8 sm:$0xf]
    %25 = vrot.lane.b32.xlu0 %v24, 32
    %v26 = vpop.permute.xlu0 %25
    %vm27 = vcmask 523520
    %28 = vst.msk [vmem:[#allocation0] sm:$0xf] %vm27, %v26
    %s30 = sshllo.u32 0, 4
    %v32 = vld [vmem:[#allocation0] sm:%s30]
    %s33 = sshllo.u32 0, 4
    %34 = vst [vmem:[%s1] sm:%s33] %v32

// kernel: discriminator_forward.6
$region0: #{discriminator_forward.6}
  #allocation0 [shape = 'u32[]', space=smem, size = 0x4, offset = 0x4, fixed_abs, tag = 'smem constant byte address 0x4 - core index']
  #allocation1 [shape = 'u32[144,128]{1,0:T(1,128)}', space=vmem, size = 0x12000, scoped, tag = 'internal scratch']
  %s0 = inlined_call_operand.vmem [shape: bf16[8,60], index: 0, kind: input, shape index: {}]
  %s1 = inlined_call_operand.vmem [shape: bf16[60,128], index: 1, kind: input, shape index: {}]
  %s2 = inlined_call_operand.vmem [shape: f32[8,1], index: 2, kind: input, shape index: {}]
  %s3 = inlined_call_operand.vmem [shape: f32[8,128], index: 3, kind: output, shape index: {}]
  %s4 = sld [smem:[#allocation0]]
  $region22: #{discriminator_forward.6} parent=0
    _
  %s6 = ssub.s32 1, %s4
  %s7 = scalar_select 0, %s6, %s4
  // Predicated region
  $region2: #{discriminator_forward.6} parent=0 // pred_check
    _
  $region3: #{discriminator_forward.6} parent=0 // pred_check_branch
    %9 = sbr.rel (0) target = $region5
  $region4: #{discriminator_forward.6} parent=0 // pred_region
    _
  $region5: #{discriminator_forward.6} parent=0 // pred_fallthru
    _
  // Predicated region
  $region6: #{discriminator_forward.6} parent=0 // pred_check
    _
  $region7: #{discriminator_forward.6} parent=0 // pred_check_branch
    %11 = sbr.rel (0) target = $region9
  $region8: #{discriminator_forward.6} parent=0 // pred_region
    _
  $region9: #{discriminator_forward.6} parent=0 // pred_fallthru
    _
  // Predicated region
  $region10: #{discriminator_forward.6} parent=0 // pred_check
    _
  $region11: #{discriminator_forward.6} parent=0 // pred_check_branch
    %13 = sbr.rel (0) target = $region13
  $region12: #{discriminator_forward.6} parent=0 // pred_region
    _
  $region13: #{discriminator_forward.6} parent=0 // pred_fallthru
    _
  %v15 = vld [vmem:[%s0] sm:$0xf]
  %v16 = vld [vmem:[%s1] sm:$0xf]
  %v17 = vld [vmem:[%s1 + $0x4] sm:$0xf]
  %v18 = vld [vmem:[%s1 + $0x8] sm:$0xf]
  %v19 = vld [vmem:[%s1 + $0xc] sm:$0xf]
  %v20 = vld [vmem:[%s1 + $0x10] sm:$0xf]
  %v21 = vld [vmem:[%s1 + $0x14] sm:$0xf]
  %v22 = vld [vmem:[%s1 + $0x18] sm:$0xf]
  %v23 = vld [vmem:[%s1 + $0x1c] sm:$0x3]
  %v24 = vld [vmem:[%s2] sm:$0xff]
  %26 = vset.pattern.permute.xlu0 0
  %27 = vperm.xlu0 %26, %v24
  %v28 = vpop.permute.xlu0 %27
  %v38 = vunpack.c.l.b16 %v16
  %v39 = vunpack.c.l.b16 %v17
  %v40 = vunpack.c.l.b16 %v18
  %v41 = vunpack.c.l.b16 %v19
  %v42 = vunpack.c.l.b16 %v20
  %v43 = vunpack.c.l.b16 %v21
  %v44 = vunpack.c.l.b16 %v22
  %v45 = vunpack.c.l.b16 %v23
  %v46 = vpack.c.b16 %v39, %v38
  %v47 = vpack.c.b16 %v41, %v40
  %v48 = vpack.c.b16 %v43, %v42
  %v49 = vpack.c.b16 %v45, %v44
  %vm53 = vcmask 490496
  %v55 = vsel %vm53, %v15, 0
  %vm57 = vcmask 1045504
  %v59 = vsel %vm57, %v49, 0
  %61 = vmatprep.subr.bf16.mxu0 0
  %62 = vmatpush1.bf16.msra.mxu0 %v46
  %63 = vmatprep.subr.bf16.mxu0 0
  %64 = vmatpush1.bf16.msra.mxu0 %v47
  %65 = vmatprep.subr.bf16.mxu0 0
  %66 = vmatpush1.bf16.msra.mxu0 %v48
  %67 = vmatprep.subr.bf16.mxu0 0
  %68 = vmatpush1.bf16.msra.mxu0 %v59
  %69 = vmatprep.subr.bf16.mxu0 0
  %70 = vmatpush1.bf16.msra.mxu0 0
  %71 = vmatprep.subr.bf16.mxu0 0
  %72 = vmatpush1.bf16.msra.mxu0 0
  %73 = vmatprep.subr.bf16.mxu0 0
  %74 = vmatpush1.bf16.msra.mxu0 0
  %75 = vmatprep.subr.bf16.mxu0 0
  %76 = vmatpush1.bf16.msra.mxu0 0
  %77 = vmatprep.subr.bf16.mxu0 0
  %78 = vmatpush1.bf16.msra.mxu0 0
  %79 = vmatprep.subr.bf16.mxu0 0
  %80 = vmatpush1.bf16.msra.mxu0 0
  %81 = vmatprep.subr.bf16.mxu0 0
  %82 = vmatpush1.bf16.msra.mxu0 0
  %83 = vmatprep.subr.bf16.mxu0 0
  %84 = vmatpush1.bf16.msra.mxu0 0
  %85 = vmatprep.subr.bf16.mxu0 0
  %86 = vmatpush1.bf16.msra.mxu0 0
  %87 = vmatprep.subr.bf16.mxu0 0
  %88 = vmatpush1.bf16.msra.mxu0 0
  %89 = vmatprep.subr.bf16.mxu0 0
  %90 = vmatpush1.bf16.msra.mxu0 0
  %91 = vmatprep.subr.bf16.mxu0 0
  %92 = vmatpush1.bf16.msra.mxu0 0
  %93 = vmatprep.mubr.bf16.mxu0 0
  %94 = vmatmul.mubr.bf16.gmra.mrb[0].mxu0 %v55
  %v95 = vpop.f32.mrb[0].mxu0
  %v96 = vadd.f32 %v28, %v95
  %v97 = vpop.f32.mrb[0].mxu0
  %v98 = vpop.f32.mrb[0].mxu0
  %v99 = vpop.f32.mrb[0].mxu0
  %100 = vdwg.mxu0
  %v101 = vmax.f32 %v96, 0.0
  %102 = vst [vmem:[%s3] sm:$0xff] %v101
  // Predicated region
  $region14: #{discriminator_forward.6} parent=0 // pred_check
    _
  $region15: #{discriminator_forward.6} parent=0 // pred_check_branch
    %104 = sbr.rel (0) target = $region17
  $region16: #{discriminator_forward.6} parent=0 // pred_region
    _
  $region17: #{discriminator_forward.6} parent=0 // pred_fallthru
    _
  // Predicated region
  $region18: #{discriminator_forward.6} parent=0 // pred_check
    _
  $region19: #{discriminator_forward.6} parent=0 // pred_check_branch
    %106 = sbr.rel (0) target = $region21
  $region20: #{discriminator_forward.6} parent=0 // pred_region
    _
  $region21: #{discriminator_forward.6} parent=0 // pred_fallthru
    _

// kernel: discriminator_forward.5
$region0: #{discriminator_forward.5}
  #allocation0 [shape = 'u32[]', space=smem, size = 0x4, offset = 0x4, fixed_abs, tag = 'smem constant byte address 0x4 - core index']
  #allocation1 [shape = 'u32[144,128]{1,0:T(1,128)}', space=vmem, size = 0x12000, scoped, tag = 'internal scratch']
  #allocation2 [shape = 'f32[2,32]{1,0:T(2,128)}', space=vmem, size = 0x400, scoped, tag = 'scratch operand']
  #allocation3 [shape = 'f32[2,32]{1,0:T(2,128)}', space=vmem, size = 0x400, scoped, tag = 'scratch operand']
  #allocation4 [shape = 'f32[2,32]{1,0:T(2,128)}', space=vmem, size = 0x400, scoped, tag = 'scratch operand']
  #allocation5 [shape = 'f32[2,32]{1,0:T(2,128)}', space=vmem, size = 0x400, scoped, tag = 'scratch operand']
  %s0 = inlined_call_operand.vmem [shape: f32[24,2,128], index: 0, kind: input, shape index: {}]
  %s1 = inlined_call_operand.vmem [shape: bf16[32,128], index: 1, kind: input, shape index: {}]
  %s2 = inlined_call_operand.vmem [shape: bf16[64,128], index: 2, kind: input, shape index: {}]
  %s3 = inlined_call_operand.vmem [shape: f32[1,128], index: 3, kind: input, shape index: {}]
  %s4 = inlined_call_operand.vmem [shape: f32[24,2,32], index: 4, kind: output, shape index: {}]
  %s5 = sld [smem:[#allocation0]]
  $region53: #{discriminator_forward.5} parent=0
    _
  %s7 = ssub.s32 1, %s5
  %s8 = scalar_select 0, %s7, %s5
  loop: start=0, step=1, limit=5
  $region2: #{discriminator_forward.5} parent=0 // loop_pre_header
    _
  $region3: #{discriminator_forward.5} parent=0 // loop_header
    %s10 = sphi 0, %s14
    %p11 = scmp.ge.s32.totalorder %s10, 5
    %s20 = sphi 0, %s22
    %s23 = sphi 0, %s20
    %s24 = sphi 0, %s23
    %s40 = sphi 0, %s24
    %s44 = sphi 0, %s44
    %s46 = sphi 0, %s44
    %s47 = sphi 0, %s46
    %s61 = sphi 0, %s47
    %s65 = sphi 0, %s65
    %s67 = sphi 0, %s65
    %s68 = sphi 0, %s67
    %s82 = sphi 0, %s68
    %s86 = sphi 0, %s86
    %s88 = sphi 0, %s86
    %s89 = sphi 0, %s88
    %s103 = sphi 0, %s89
    %s109 = sphi 0, %s111
    %s112 = sphi 0, %s109
    %s113 = sphi 0, %s112
    %s129 = sphi 0, %s113
  $region4: #{discriminator_forward.5} parent=0 // loop_header_branch
    %13 = sbr.rel (%p11) target = $region8
  $region5: #{discriminator_forward.5} parent=0 // loop_body
    %s15 = ssub.s32 %s10, 1
    %s16 = ssub.s32 %s10, 2
    %s17 = sadd.s32 %s10, 1
    %s18 = ssub.s32 %s10, %s17
    %p19 = scmp.eq.s32.totalorder %s18, 0
    %s21 = sadd.s32 %s20, 1
    %s22 = scalar_select %p19, %s20, %s21
    %p25 = pneg %p19
    %p26 = scmp.eq.s32.totalorder %s10, 2
    %p27 = por %p25, %p26
    %p28 = scmp.ne.s32.totalorder %s20, %s23
    %p29 = scmp.eq.s32.totalorder %s10, 0
    %p30 = por %p28, %p29
    %p31 = scmp.ne.s32.totalorder %s20, %s23
    %p32 = scmp.eq.s32.totalorder %s15, 2
    %p33 = por %p31, %p32
    %p34 = scmp.ne.s32.totalorder %s23, %s24
    %p35 = scmp.eq.s32.totalorder %s15, 0
    %p36 = por %p34, %p35
    %p37 = scmp.ne.s32.totalorder %s23, %s24
    %p38 = scmp.eq.s32.totalorder %s16, 2
    %p39 = por %p37, %p38
    %p41 = scmp.ne.s32.totalorder %s24, %s40
    %p42 = scmp.eq.s32.totalorder %s16, 0
    %p43 = por %p41, %p42
    %s45 = sadd.s32 %s44, 1
    %p48 = scmp.eq.s32.totalorder %s10, 2
    %p49 = scmp.ne.s32.totalorder %s44, %s46
    %p50 = scmp.eq.s32.totalorder %s10, 0
    %p51 = por %p49, %p50
    %p52 = scmp.ne.s32.totalorder %s44, %s46
    %p53 = scmp.eq.s32.totalorder %s15, 2
    %p54 = por %p52, %p53
    %p55 = scmp.ne.s32.totalorder %s46, %s47
    %p56 = scmp.eq.s32.totalorder %s15, 0
    %p57 = por %p55, %p56
    %p58 = scmp.ne.s32.totalorder %s46, %s47
    %p59 = scmp.eq.s32.totalorder %s16, 2
    %p60 = por %p58, %p59
    %p62 = scmp.ne.s32.totalorder %s47, %s61
    %p63 = scmp.eq.s32.totalorder %s16, 0
    %p64 = por %p62, %p63
    %s66 = sadd.s32 %s65, 1
    %p69 = scmp.eq.s32.totalorder %s10, 2
    %p70 = scmp.ne.s32.totalorder %s65, %s67
    %p71 = scmp.eq.s32.totalorder %s10, 0
    %p72 = por %p70, %p71
    %p73 = scmp.ne.s32.totalorder %s65, %s67
    %p74 = scmp.eq.s32.totalorder %s15, 2
    %p75 = por %p73, %p74
    %p76 = scmp.ne.s32.totalorder %s67, %s68
    %p77 = scmp.eq.s32.totalorder %s15, 0
    %p78 = por %p76, %p77
    %p79 = scmp.ne.s32.totalorder %s67, %s68
    %p80 = scmp.eq.s32.totalorder %s16, 2
    %p81 = por %p79, %p80
    %p83 = scmp.ne.s32.totalorder %s68, %s82
    %p84 = scmp.eq.s32.totalorder %s16, 0
    %p85 = por %p83, %p84
    %s87 = sadd.s32 %s86, 1
    %p90 = scmp.eq.s32.totalorder %s10, 2
    %p91 = scmp.ne.s32.totalorder %s86, %s88
    %p92 = scmp.eq.s32.totalorder %s10, 0
    %p93 = por %p91, %p92
    %p94 = scmp.ne.s32.totalorder %s86, %s88
    %p95 = scmp.eq.s32.totalorder %s15, 2
    %p96 = por %p94, %p95
    %p97 = scmp.ne.s32.totalorder %s88, %s89
    %p98 = scmp.eq.s32.totalorder %s15, 0
    %p99 = por %p97, %p98
    %p100 = scmp.ne.s32.totalorder %s88, %s89
    %p101 = scmp.eq.s32.totalorder %s16, 2
    %p102 = por %p100, %p101
    %p104 = scmp.ne.s32.totalorder %s89, %s103
    %p105 = scmp.eq.s32.totalorder %s16, 0
    %p106 = por %p104, %p105
    %s107 = ssub.s32 %s10, %s17
    %p108 = scmp.eq.s32.totalorder %s107, 0
    %s110 = sadd.s32 %s109, 1
    %s111 = scalar_select %p108, %s109, %s110
    %p114 = pneg %p108
    %p115 = scmp.eq.s32.totalorder %s10, 2
    %p116 = por %p114, %p115
    %p117 = scmp.ne.s32.totalorder %s109, %s112
    %p118 = scmp.eq.s32.totalorder %s10, 0
    %p119 = por %p117, %p118
    %p120 = scmp.ne.s32.totalorder %s109, %s112
    %p121 = scmp.eq.s32.totalorder %s15, 2
    %p122 = por %p120, %p121
    %p123 = scmp.ne.s32.totalorder %s112, %s113
    %p124 = scmp.eq.s32.totalorder %s15, 0
    %p125 = por %p123, %p124
    %p126 = scmp.ne.s32.totalorder %s112, %s113
    %p127 = scmp.eq.s32.totalorder %s16, 2
    %p128 = por %p126, %p127
    %p130 = scmp.ne.s32.totalorder %s113, %s129
    %p131 = scmp.eq.s32.totalorder %s16, 0
    %p132 = por %p130, %p131
    %p133 = scmp.le.s32.totalorder 1, %s10
    %p134 = scmp.lt.s32.totalorder %s10, 4
    %p135 = pnand %p133, %p134
    %p136 = pneg %p135
    // Predicated region
    $region9: #{discriminator_forward.5} parent=5 // pred_check
      _
    $region10: #{discriminator_forward.5} parent=5 // pred_check_branch
      %138 = sbr.rel (%p135) target = $region12
    $region11: #{discriminator_forward.5} parent=5 // pred_region
      %s139 = ssub.s32 %s10, 1
      // Predicated region
      $region13: #{discriminator_forward.5} parent=11 // pred_check
        %p140 = pneg %p57
      $region14: #{discriminator_forward.5} parent=11 // pred_check_branch
        %142 = sbr.rel (%p140) target = $region16
      $region15: #{discriminator_forward.5} parent=11 // pred_region
        _
      $region16: #{discriminator_forward.5} parent=11 // pred_fallthru
        _
      // Predicated region
      $region17: #{discriminator_forward.5} parent=11 // pred_check
        %p143 = pneg %p78
      $region18: #{discriminator_forward.5} parent=11 // pred_check_branch
        %145 = sbr.rel (%p143) target = $region20
      $region19: #{discriminator_forward.5} parent=11 // pred_region
        _
      $region20: #{discriminator_forward.5} parent=11 // pred_fallthru
        _
      // Predicated region
      $region21: #{discriminator_forward.5} parent=11 // pred_check
        %p146 = pneg %p99
      $region22: #{discriminator_forward.5} parent=11 // pred_check_branch
        %148 = sbr.rel (%p146) target = $region24
      $region23: #{discriminator_forward.5} parent=11 // pred_region
        _
      $region24: #{discriminator_forward.5} parent=11 // pred_fallthru
        _
    $region12: #{discriminator_forward.5} parent=5 // pred_fallthru
      _
    %p149 = scmp.lt.s32.totalorder %s10, 3
    // Predicated region
    $region25: #{discriminator_forward.5} parent=5 // pred_check
      %p150 = pneg %p149
    $region26: #{discriminator_forward.5} parent=5 // pred_check_branch
      %152 = sbr.rel (%p150) target = $region28
    $region27: #{discriminator_forward.5} parent=5 // pred_region
      // Predicated region
      $region29: #{discriminator_forward.5} parent=27 // pred_check
        %p153 = pneg %p30
      $region30: #{discriminator_forward.5} parent=27 // pred_check_branch
        %155 = sbr.rel (%p153) target = $region32
      $region31: #{discriminator_forward.5} parent=27 // pred_region
        %s156 = smul.u32 8, %s10
        %p157 = scmp.lt.s32.totalorder %s156, 23
        %s158 = scalar_select %p157, %s156, 23
        %s159 = smul.addr %s158, 2
        %s160 = scalar_lea.vmem %s0, %s159
        %s161 = smul.u32 8, %s10
      $region32: #{discriminator_forward.5} parent=27 // pred_fallthru
        _
    $region28: #{discriminator_forward.5} parent=5 // pred_fallthru
      _
    %p162 = scmp.le.s32.totalorder 1, %s10
    %p163 = scmp.lt.s32.totalorder %s10, 4
    %p164 = pnand %p162, %p163
    %p165 = pneg %p164
    // Predicated region
    $region33: #{discriminator_forward.5} parent=5 // pred_check
      _
    $region34: #{discriminator_forward.5} parent=5 // pred_check_branch
      %167 = sbr.rel (%p164) target = $region36
    $region35: #{discriminator_forward.5} parent=5 // pred_region
      %s168 = ssub.s32 %s10, 1
      %s169 = smul.u32 8, %s15
      %p170 = scmp.lt.s32.totalorder %s169, 23
      %s171 = scalar_select %p170, %s169, 23
      %s172 = smul.addr %s171, 2
      %s173 = scalar_lea.vmem %s0, %s172
      %p174 = pneg %p36
      %p175 = pneg %p33
      %p176 = pneg %p57
      %p177 = pneg %p54
      %p178 = pneg %p78
      %p179 = pneg %p75
      %p180 = pneg %p99
      %p181 = pneg %p96
      %p182 = pneg %p125
      %p183 = pneg %p122
      %s184 = smul.u32 8, %s15
      %p185 = scmp.lt.s32.totalorder %s184, 23
      %s186 = scalar_select %p185, %s184, 23
      %s187 = smul.addr %s186, 2
      %s188 = scalar_lea.vmem %s4, %s187
      %s189 = smul.u32 8, %s15
      %p190 = scmp.lt.s32.totalorder %s189, 23
      %s191 = scalar_select %p190, %s189, 23
      %s192 = smul.addr %s191, 2
      %s193 = scalar_lea.vmem %s0, %s192
      %s194 = smul.u32 8, %s15
      %s195 = smul.u32 8, %s15
      %p196 = scmp.lt.s32.totalorder %s195, 23
      %s197 = scalar_select %p196, %s195, 23
      %s198 = smul.addr %s197, 2
      %s199 = scalar_lea.vmem %s4, %s198
      %s200 = smul.u32 8, %s15
      %p202 = scmp.eq.s32.totalorder %s15, 0
      // Predicated region
      $region37: #{discriminator_forward.5} parent=35 // pred_check
        %p203 = pneg %p202
      $region38: #{discriminator_forward.5} parent=35 // pred_check_branch
        %205 = sbr.rel (%p203) target = $region40
      $region39: #{discriminator_forward.5} parent=35 // pred_region
        %vm206 = vcmask 254976
        %207 = vst.msk [vmem:[#allocation2] sm:$0x3] %vm206, 0.0
        %208 = vst.msk [vmem:[#allocation3] sm:$0x3] %vm206, 0.0
        %209 = vst.msk [vmem:[#allocation4] sm:$0x3] %vm206, 0.0
        %210 = vst.msk [vmem:[#allocation5] sm:$0x3] %vm206, 0.0
      $region40: #{discriminator_forward.5} parent=35 // pred_fallthru
        _
      %v211 = vld [vmem:[%s1] sm:$0xf]
      %v212 = vld [vmem:[%s1 + $0x4] sm:$0xf]
      %v213 = vld [vmem:[%s1 + $0x8] sm:$0xf]
      %v214 = vld [vmem:[%s1 + $0xc] sm:$0xf]
      %v215 = vld [vmem:[%s2] sm:$0xf]
      %v216 = vld [vmem:[%s2 + $0x4] sm:$0xf]
      %v217 = vld [vmem:[%s2 + $0x8] sm:$0xf]
      %v218 = vld [vmem:[%s2 + $0xc] sm:$0xf]
      %v219 = vld [vmem:[%s2 + $0x10] sm:$0xf]
      %v220 = vld [vmem:[%s2 + $0x14] sm:$0xf]
      %v221 = vld [vmem:[%s2 + $0x18] sm:$0xf]
      %v222 = vld [vmem:[%s2 + $0x1c] sm:$0xf]
      %v223 = vld [vmem:[%s3] sm:$0x1]
      %v224 = vld [vmem:[#allocation2] sm:$0x3]
      %v225 = vld [vmem:[#allocation3] sm:$0x3]
      %v226 = vld [vmem:[#allocation4] sm:$0x3]
      %v227 = vld [vmem:[#allocation5] sm:$0x3]
      %v228 = vld [vmem:[%s193] sm:$0x3]
      %v229 = vpack.c.bf16 %v224, %v224
      %v234 = vunpack.c.l.b16 %v211
      %v235 = vunpack.c.l.b16 %v212
      %v236 = vunpack.c.l.b16 %v213
      %v237 = vunpack.c.l.b16 %v214
      %v238 = vpack.c.b16 %v235, %v234
      %v239 = vpack.c.b16 %v237, %v236
      %vm242 = vcmask 261120
      %v244 = vsel %vm242, %v229, 0
      %246 = vmatprep.subr.bf16.mxu0 0
      %247 = vmatpush1.bf16.msra.mxu0 %v238
      %248 = vmatprep.subr.bf16.mxu0 0
      %249 = vmatpush1.bf16.msra.mxu0 %v239
      %250 = vmatprep.subr.bf16.mxu0 0
      %251 = vmatpush1.bf16.msra.mxu0 0
      %252 = vmatprep.subr.bf16.mxu0 0
      %253 = vmatpush1.bf16.msra.mxu0 0
      %254 = vmatprep.subr.bf16.mxu0 0
      %255 = vmatpush1.bf16.msra.mxu0 0
      %256 = vmatprep.subr.bf16.mxu0 0
      %257 = vmatpush1.bf16.msra.mxu0 0
      %258 = vmatprep.subr.bf16.mxu0 0
      %259 = vmatpush1.bf16.msra.mxu0 0
      %260 = vmatprep.subr.bf16.mxu0 0
      %261 = vmatpush1.bf16.msra.mxu0 0
      %262 = vmatprep.subr.bf16.mxu0 0
      %263 = vmatpush1.bf16.msra.mxu0 0
      %264 = vmatprep.subr.bf16.mxu0 0
      %265 = vmatpush1.bf16.msra.mxu0 0
      %266 = vmatprep.subr.bf16.mxu0 0
      %267 = vmatpush1.bf16.msra.mxu0 0
      %268 = vmatprep.subr.bf16.mxu0 0
      %269 = vmatpush1.bf16.msra.mxu0 0
      %270 = vmatprep.subr.bf16.mxu0 0
      %271 = vmatpush1.bf16.msra.mxu0 0
      %272 = vmatprep.subr.bf16.mxu0 0
      %273 = vmatpush1.bf16.msra.mxu0 0
      %274 = vmatprep.subr.bf16.mxu0 0
      %275 = vmatpush1.bf16.msra.mxu0 0
      %276 = vmatprep.subr.bf16.mxu0 0
      %277 = vmatpush1.bf16.msra.mxu0 0
      %278 = vmatprep.mubr.bf16.mxu0 0
      %279 = vmatmul.mubr.bf16.gmra.mrb[0].mxu0 %v244
      %v280 = vpop.f32.mrb[0].mxu0
      %v281 = vadd.f32 0.0, %v280
      %v282 = vpop.f32.mrb[0].mxu0
      %v283 = vpop.f32.mrb[0].mxu0
      %v284 = vpop.f32.mrb[0].mxu0
      %285 = vdwg.mxu0
      %v286 = vadd.f32 %v228, %v281
      %v287 = vxor.u32 %v286, 2147483648
      %v288 = vmul.f32 %v287, 1.442695
      %v289 = vpow.pop %v288
      %v290 = vadd.f32 %v289, 1.0
      %v291 = vrcp.pop %v290
      %v292 = vmul.f32 1.0, %v291
      %v293 = vtanh.pop %v286
      %295 = vrot.lane.b32.xlu0 %v225, 32
      %v296 = vpop.permute.xlu0 %295
      %v298 = vmul.f32 %v292, %v296
      %300 = vrot.lane.b32.xlu0 %v293, 64
      %v301 = vpop.permute.xlu0 %300
      %v303 = vmul.f32 %v292, %v301
      %305 = vrot.lane.b32.xlu0 %v303, 32
      %v306 = vpop.permute.xlu0 %305
      %v308 = vadd.f32 %v298, %v306
      %v309 = vtanh.pop %v308
      %311 = vrot.lane.b32.xlu0 %v309, 64
      %v312 = vpop.permute.xlu0 %311
      %v314 = vmul.f32 %v292, %v312
      %316 = vrot.lane.b32.xlu0 %v314, 32
      %v317 = vpop.permute.xlu0 %316
      %320 = vrot.lane.b32.xlu0 %v226, 32
      %v321 = vpop.permute.xlu0 %320
      %v323 = vsel %vm242, %v317, %v321
      %v324 = vpack.c.bf16 %v323, %v323
      %v326 = vlaneseq
      %v327 = vshrl.u32 %v326, 7
      %v328 = vsub.s32 0, %v327
      %v329 = vrot.slane %v223, %v328
      %v339 = vunpack.c.l.b16 %v215
      %v340 = vunpack.c.l.b16 %v216
      %v341 = vunpack.c.l.b16 %v217
      %v342 = vunpack.c.l.b16 %v218
      %v343 = vunpack.c.l.b16 %v219
      %v344 = vunpack.c.l.b16 %v220
      %v345 = vunpack.c.l.b16 %v221
      %v346 = vunpack.c.l.b16 %v222
      %v347 = vpack.c.b16 %v340, %v339
      %v348 = vpack.c.b16 %v342, %v341
      %v349 = vpack.c.b16 %v344, %v343
      %v350 = vpack.c.b16 %v346, %v345
      %vm355 = vcmask 523264
      %v357 = vsel %vm355, %v324, 0
      %359 = vmatprep.subr.bf16.mxu0 0
      %360 = vmatpush1.bf16.msra.mxu0 %v347
      %361 = vmatprep.subr.bf16.mxu0 0
      %362 = vmatpush1.bf16.msra.mxu0 %v348
      %363 = vmatprep.subr.bf16.mxu0 0
      %364 = vmatpush1.bf16.msra.mxu0 %v349
      %365 = vmatprep.subr.bf16.mxu0 0
      %366 = vmatpush1.bf16.msra.mxu0 %v350
      %367 = vmatprep.subr.bf16.mxu0 0
      %368 = vmatpush1.bf16.msra.mxu0 0
      %369 = vmatprep.subr.bf16.mxu0 0
      %370 = vmatpush1.bf16.msra.mxu0 0
      %371 = vmatprep.subr.bf16.mxu0 0
      %372 = vmatpush1.bf16.msra.mxu0 0
      %373 = vmatprep.subr.bf16.mxu0 0
      %374 = vmatpush1.bf16.msra.mxu0 0
      %375 = vmatprep.subr.bf16.mxu0 0
      %376 = vmatpush1.bf16.msra.mxu0 0
      %377 = vmatprep.subr.bf16.mxu0 0
      %378 = vmatpush1.bf16.msra.mxu0 0
      %379 = vmatprep.subr.bf16.mxu0 0
      %380 = vmatpush1.bf16.msra.mxu0 0
      %381 = vmatprep.subr.bf16.mxu0 0
      %382 = vmatpush1.bf16.msra.mxu0 0
      %383 = vmatprep.subr.bf16.mxu0 0
      %384 = vmatpush1.bf16.msra.mxu0 0
      %385 = vmatprep.subr.bf16.mxu0 0
      %386 = vmatpush1.bf16.msra.mxu0 0
      %387 = vmatprep.subr.bf16.mxu0 0
      %388 = vmatpush1.bf16.msra.mxu0 0
      %389 = vmatprep.subr.bf16.mxu0 0
      %390 = vmatpush1.bf16.msra.mxu0 0
      %391 = vmatprep.mubr.bf16.mxu0 0
      %392 = vmatmul.mubr.bf16.gmra.mrb[0].mxu0 %v357
      %v393 = vpop.f32.mrb[0].mxu0
      %v394 = vadd.f32 %v329, %v393
      %v395 = vpop.f32.mrb[0].mxu0
      %v396 = vpop.f32.mrb[0].mxu0
      %v397 = vpop.f32.mrb[0].mxu0
      %398 = vdwg.mxu0
      %v399 = vxor.u32 %v394, 2147483648
      %v400 = vmul.f32 %v399, 1.442695
      %v401 = vpow.pop %v400
      %v402 = vadd.f32 %v401, 1.0
      %v403 = vrcp.pop %v402
      %v404 = vmul.f32 1.0, %v403
      %v405 = vtanh.pop %v394
      %407 = vrot.lane.b32.xlu0 %v227, 32
      %v408 = vpop.permute.xlu0 %407
      %v410 = vmul.f32 %v404, %v408
      %412 = vrot.lane.b32.xlu0 %v405, 64
      %v413 = vpop.permute.xlu0 %412
      %v415 = vmul.f32 %v404, %v413
      %417 = vrot.lane.b32.xlu0 %v415, 32
      %v418 = vpop.permute.xlu0 %417
      %v420 = vadd.f32 %v410, %v418
      %v421 = vtanh.pop %v420
      %423 = vrot.lane.b32.xlu0 %v421, 64
      %v424 = vpop.permute.xlu0 %423
      %v426 = vmul.f32 %v404, %v424
      %428 = vrot.lane.b32.xlu0 %v426, 32
      %v429 = vpop.permute.xlu0 %428
      %vm431 = vcmask 254976
      %432 = vst.msk [vmem:[%s199] sm:$0x3] %vm431, %v429
      %s433 = scalar_lea.vmem %s193, 2
      %v434 = vld [vmem:[%s433] sm:$0x3]
      %v435 = vpack.c.bf16 %v314, %v314
      %437 = vrot.lane.b32.xlu0 %v435, 32
      %v438 = vpop.permute.xlu0 %437
      %v440 = vsel %vm242, %v438, 0
      %442 = vmatprep.subr.bf16.mxu0 0
      %443 = vmatpush1.bf16.msra.mxu0 %v238
      %444 = vmatprep.subr.bf16.mxu0 0
      %445 = vmatpush1.bf16.msra.mxu0 %v239
      %446 = vmatprep.subr.bf16.mxu0 0
      %447 = vmatpush1.bf16.msra.mxu0 0
      %448 = vmatprep.subr.bf16.mxu0 0
      %449 = vmatpush1.bf16.msra.mxu0 0
      %450 = vmatprep.subr.bf16.mxu0 0
      %451 = vmatpush1.bf16.msra.mxu0 0
      %452 = vmatprep.subr.bf16.mxu0 0
      %453 = vmatpush1.bf16.msra.mxu0 0
      %454 = vmatprep.subr.bf16.mxu0 0
      %455 = vmatpush1.bf16.msra.mxu0 0
      %456 = vmatprep.subr.bf16.mxu0 0
      %457 = vmatpush1.bf16.msra.mxu0 0
      %458 = vmatprep.subr.bf16.mxu0 0
      %459 = vmatpush1.bf16.msra.mxu0 0
      %460 = vmatprep.subr.bf16.mxu0 0
      %461 = vmatpush1.bf16.msra.mxu0 0
      %462 = vmatprep.subr.bf16.mxu0 0
      %463 = vmatpush1.bf16.msra.mxu0 0
      %464 = vmatprep.subr.bf16.mxu0 0
      %465 = vmatpush1.bf16.msra.mxu0 0
      %466 = vmatprep.subr.bf16.mxu0 0
      %467 = vmatpush1.bf16.msra.mxu0 0
      %468 = vmatprep.subr.bf16.mxu0 0
      %469 = vmatpush1.bf16.msra.mxu0 0
      %470 = vmatprep.subr.bf16.mxu0 0
      %471 = vmatpush1.bf16.msra.mxu0 0
      %472 = vmatprep.subr.bf16.mxu0 0
      %473 = vmatpush1.bf16.msra.mxu0 0
      %474 = vmatprep.mubr.bf16.mxu0 0
      %475 = vmatmul.mubr.bf16.gmra.mrb[0].mxu0 %v440
      %v476 = vpop.f32.mrb[0].mxu0
      %v477 = vadd.f32 0.0, %v476
      %v478 = vpop.f32.mrb[0].mxu0
      %v479 = vpop.f32.mrb[0].mxu0
      %v480 = vpop.f32.mrb[0].mxu0
      %481 = vdwg.mxu0
      %v482 = vadd.f32 %v434, %v477
      %v483 = vxor.u32 %v482, 2147483648
      %v484 = vmul.f32 %v483, 1.442695
      %v485 = vpow.pop %v484
      %v486 = vadd.f32 %v485, 1.0
      %v487 = vrcp.pop %v486
      %v488 = vmul.f32 1.0, %v487
      %v489 = vtanh.pop %v482
      %v490 = vmul.f32 %v488, %v308
      %492 = vrot.lane.b32.xlu0 %v489, 64
      %v493 = vpop.permute.xlu0 %492
      %v495 = vmul.f32 %v488, %v493
      %497 = vrot.lane.b32.xlu0 %v495, 32
      %v498 = vpop.permute.xlu0 %497
      %v500 = vadd.f32 %v490, %v498
      %v501 = vtanh.pop %v500
      %503 = vrot.lane.b32.xlu0 %v501, 64
      %v504 = vpop.permute.xlu0 %503
      %v506 = vmul.f32 %v488, %v504
      %508 = vrot.lane.b32.xlu0 %v506, 32
      %v509 = vpop.permute.xlu0 %508
      %511 = vrot.lane.b32.xlu0 %v426, 64
      %v512 = vpop.permute.xlu0 %511
      %v514 = vsel %vm242, %v509, %v512
      %v515 = vpack.c.bf16 %v514, %v514
      %v517 = vsel %vm355, %v515, 0
      %519 = vmatprep.subr.bf16.mxu0 0
      %520 = vmatpush1.bf16.msra.mxu0 %v347
      %521 = vmatprep.subr.bf16.mxu0 0
      %522 = vmatpush1.bf16.msra.mxu0 %v348
      %523 = vmatprep.subr.bf16.mxu0 0
      %524 = vmatpush1.bf16.msra.mxu0 %v349
      %525 = vmatprep.subr.bf16.mxu0 0
      %526 = vmatpush1.bf16.msra.mxu0 %v350
      %527 = vmatprep.subr.bf16.mxu0 0
      %528 = vmatpush1.bf16.msra.mxu0 0
      %529 = vmatprep.subr.bf16.mxu0 0
      %530 = vmatpush1.bf16.msra.mxu0 0
      %531 = vmatprep.subr.bf16.mxu0 0
      %532 = vmatpush1.bf16.msra.mxu0 0
      %533 = vmatprep.subr.bf16.mxu0 0
      %534 = vmatpush1.bf16.msra.mxu0 0
      %535 = vmatprep.subr.bf16.mxu0 0
      %536 = vmatpush1.bf16.msra.mxu0 0
      %537 = vmatprep.subr.bf16.mxu0 0
      %538 = vmatpush1.bf16.msra.mxu0 0
      %539 = vmatprep.subr.bf16.mxu0 0
      %540 = vmatpush1.bf16.msra.mxu0 0
      %541 = vmatprep.subr.bf16.mxu0 0
      %542 = vmatpush1.bf16.msra.mxu0 0
      %543 = vmatprep.subr.bf16.mxu0 0
      %544 = vmatpush1.bf16.msra.mxu0 0
      %545 = vmatprep.subr.bf16.mxu0 0
      %546 = vmatpush1.bf16.msra.mxu0 0
      %547 = vmatprep.subr.bf16.mxu0 0
      %548 = vmatpush1.bf16.msra.mxu0 0
      %549 = vmatprep.subr.bf16.mxu0 0
      %550 = vmatpush1.bf16.msra.mxu0 0
      %551 = vmatprep.mubr.bf16.mxu0 0
      %552 = vmatmul.mubr.bf16.gmra.mrb[0].mxu0 %v517
      %v553 = vpop.f32.mrb[0].mxu0
      %v554 = vadd.f32 %v329, %v553
      %v555 = vpop.f32.mrb[0].mxu0
      %v556 = vpop.f32.mrb[0].mxu0
      %v557 = vpop.f32.mrb[0].mxu0
      %558 = vdwg.mxu0
      %v559 = vxor.u32 %v554, 2147483648
      %v560 = vmul.f32 %v559, 1.442695
      %v561 = vpow.pop %v560
      %v562 = vadd.f32 %v561, 1.0
      %v563 = vrcp.pop %v562
      %v564 = vmul.f32 1.0, %v563
      %v565 = vtanh.pop %v554
      %v566 = vmul.f32 %v564, %v420
      %568 = vrot.lane.b32.xlu0 %v565, 64
      %v569 = vpop.permute.xlu0 %568
      %v571 = vmul.f32 %v564, %v569
      %573 = vrot.lane.b32.xlu0 %v571, 32
      %v574 = vpop.permute.xlu0 %573
      %v576 = vadd.f32 %v566, %v574
      %v577 = vtanh.pop %v576
      %579 = vrot.lane.b32.xlu0 %v577, 64
      %v580 = vpop.permute.xlu0 %579
      %v582 = vmul.f32 %v564, %v580
      %584 = vrot.lane.b32.xlu0 %v582, 32
      %v585 = vpop.permute.xlu0 %584
      %s587 = scalar_lea.vmem %s199, 2
      %588 = vst.msk [vmem:[%s587] sm:$0x3] %vm431, %v585
      %s589 = scalar_lea.vmem %s193, 4
      %v590 = vld [vmem:[%s589] sm:$0x3]
      %v591 = vpack.c.bf16 %v506, %v506
      %593 = vrot.lane.b32.xlu0 %v591, 32
      %v594 = vpop.permute.xlu0 %593
      %v596 = vsel %vm242, %v594, 0
      %598 = vmatprep.subr.bf16.mxu0 0
      %599 = vmatpush1.bf16.msra.mxu0 %v238
      %600 = vmatprep.subr.bf16.mxu0 0
      %601 = vmatpush1.bf16.msra.mxu0 %v239
      %602 = vmatprep.subr.bf16.mxu0 0
      %603 = vmatpush1.bf16.msra.mxu0 0
      %604 = vmatprep.subr.bf16.mxu0 0
      %605 = vmatpush1.bf16.msra.mxu0 0
      %606 = vmatprep.subr.bf16.mxu0 0
      %607 = vmatpush1.bf16.msra.mxu0 0
      %608 = vmatprep.subr.bf16.mxu0 0
      %609 = vmatpush1.bf16.msra.mxu0 0
      %610 = vmatprep.subr.bf16.mxu0 0
      %611 = vmatpush1.bf16.msra.mxu0 0
      %612 = vmatprep.subr.bf16.mxu0 0
      %613 = vmatpush1.bf16.msra.mxu0 0
      %614 = vmatprep.subr.bf16.mxu0 0
      %615 = vmatpush1.bf16.msra.mxu0 0
      %616 = vmatprep.subr.bf16.mxu0 0
      %617 = vmatpush1.bf16.msra.mxu0 0
      %618 = vmatprep.subr.bf16.mxu0 0
      %619 = vmatpush1.bf16.msra.mxu0 0
      %620 = vmatprep.subr.bf16.mxu0 0
      %621 = vmatpush1.bf16.msra.mxu0 0
      %622 = vmatprep.subr.bf16.mxu0 0
      %623 = vmatpush1.bf16.msra.mxu0 0
      %624 = vmatprep.subr.bf16.mxu0 0
      %625 = vmatpush1.bf16.msra.mxu0 0
      %626 = vmatprep.subr.bf16.mxu0 0
      %627 = vmatpush1.bf16.msra.mxu0 0
      %628 = vmatprep.subr.bf16.mxu0 0
      %629 = vmatpush1.bf16.msra.mxu0 0
      %630 = vmatprep.mubr.bf16.mxu0 0
      %631 = vmatmul.mubr.bf16.gmra.mrb[0].mxu0 %v596
      %v632 = vpop.f32.mrb[0].mxu0
      %v633 = vadd.f32 0.0, %v632
      %v634 = vpop.f32.mrb[0].mxu0
      %v635 = vpop.f32.mrb[0].mxu0
      %v636 = vpop.f32.mrb[0].mxu0
      %637 = vdwg.mxu0
      %v638 = vadd.f32 %v590, %v633
      %v639 = vxor.u32 %v638, 2147483648
      %v640 = vmul.f32 %v639, 1.442695
      %v641 = vpow.pop %v640
      %v642 = vadd.f32 %v641, 1.0
      %v643 = vrcp.pop %v642
      %v644 = vmul.f32 1.0, %v643
      %v645 = vtanh.pop %v638
      %v646 = vmul.f32 %v644, %v500
      %648 = vrot.lane.b32.xlu0 %v645, 64
      %v649 = vpop.permute.xlu0 %648
      %v651 = vmul.f32 %v644, %v649
      %653 = vrot.lane.b32.xlu0 %v651, 32
      %v654 = vpop.permute.xlu0 %653
      %v656 = vadd.f32 %v646, %v654
      %v657 = vtanh.pop %v656
      %659 = vrot.lane.b32.xlu0 %v657, 64
      %v660 = vpop.permute.xlu0 %659
      %v662 = vmul.f32 %v644, %v660
      %664 = vrot.lane.b32.xlu0 %v662, 32
      %v665 = vpop.permute.xlu0 %664
      %667 = vrot.lane.b32.xlu0 %v582, 64
      %v668 = vpop.permute.xlu0 %667
      %v670 = vsel %vm242, %v665, %v668
      %v671 = vpack.c.bf16 %v670, %v670
      %v673 = vsel %vm355, %v671, 0
      %675 = vmatprep.subr.bf16.mxu0 0
      %676 = vmatpush1.bf16.msra.mxu0 %v347
      %677 = vmatprep.subr.bf16.mxu0 0
      %678 = vmatpush1.bf16.msra.mxu0 %v348
      %679 = vmatprep.subr.bf16.mxu0 0
      %680 = vmatpush1.bf16.msra.mxu0 %v349
      %681 = vmatprep.subr.bf16.mxu0 0
      %682 = vmatpush1.bf16.msra.mxu0 %v350
      %683 = vmatprep.subr.bf16.mxu0 0
      %684 = vmatpush1.bf16.msra.mxu0 0
      %685 = vmatprep.subr.bf16.mxu0 0
      %686 = vmatpush1.bf16.msra.mxu0 0
      %687 = vmatprep.subr.bf16.mxu0 0
      %688 = vmatpush1.bf16.msra.mxu0 0
      %689 = vmatprep.subr.bf16.mxu0 0
      %690 = vmatpush1.bf16.msra.mxu0 0
      %691 = vmatprep.subr.bf16.mxu0 0
      %692 = vmatpush1.bf16.msra.mxu0 0
      %693 = vmatprep.subr.bf16.mxu0 0
      %694 = vmatpush1.bf16.msra.mxu0 0
      %695 = vmatprep.subr.bf16.mxu0 0
      %696 = vmatpush1.bf16.msra.mxu0 0
      %697 = vmatprep.subr.bf16.mxu0 0
      %698 = vmatpush1.bf16.msra.mxu0 0
      %699 = vmatprep.subr.bf16.mxu0 0
      %700 = vmatpush1.bf16.msra.mxu0 0
      %701 = vmatprep.subr.bf16.mxu0 0
      %702 = vmatpush1.bf16.msra.mxu0 0
      %703 = vmatprep.subr.bf16.mxu0 0
      %704 = vmatpush1.bf16.msra.mxu0 0
      %705 = vmatprep.subr.bf16.mxu0 0
      %706 = vmatpush1.bf16.msra.mxu0 0
      %707 = vmatprep.mubr.bf16.mxu0 0
      %708 = vmatmul.mubr.bf16.gmra.mrb[0].mxu0 %v673
      %v709 = vpop.f32.mrb[0].mxu0
      %v710 = vadd.f32 %v329, %v709
      %v711 = vpop.f32.mrb[0].mxu0
      %v712 = vpop.f32.mrb[0].mxu0
      %v713 = vpop.f32.mrb[0].mxu0
      %714 = vdwg.mxu0
      %v715 = vxor.u32 %v710, 2147483648
      %v716 = vmul.f32 %v715, 1.442695
      %v717 = vpow.pop %v716
      %v718 = vadd.f32 %v717, 1.0
      %v719 = vrcp.pop %v718
      %v720 = vmul.f32 1.0, %v719
      %v721 = vtanh.pop %v710
      %v722 = vmul.f32 %v720, %v576
      %724 = vrot.lane.b32.xlu0 %v721, 64
      %v725 = vpop.permute.xlu0 %724
      %v727 = vmul.f32 %v720, %v725
      %729 = vrot.lane.b32.xlu0 %v727, 32
      %v730 = vpop.permute.xlu0 %729
      %v732 = vadd.f32 %v722, %v730
      %v733 = vtanh.pop %v732
      %735 = vrot.lane.b32.xlu0 %v733, 64
      %v736 = vpop.permute.xlu0 %735
      %v738 = vmul.f32 %v720, %v736
      %740 = vrot.lane.b32.xlu0 %v738, 32
      %v741 = vpop.permute.xlu0 %740
      %s743 = scalar_lea.vmem %s199, 4
      %744 = vst.msk [vmem:[%s743] sm:$0x3] %vm431, %v741
      %s745 = scalar_lea.vmem %s193, 6
      %v746 = vld [vmem:[%s745] sm:$0x3]
      %v747 = vpack.c.bf16 %v662, %v662
      %749 = vrot.lane.b32.xlu0 %v747, 32
      %v750 = vpop.permute.xlu0 %749
      %v752 = vsel %vm242, %v750, 0
      %754 = vmatprep.subr.bf16.mxu0 0
      %755 = vmatpush1.bf16.msra.mxu0 %v238
      %756 = vmatprep.subr.bf16.mxu0 0
      %757 = vmatpush1.bf16.msra.mxu0 %v239
      %758 = vmatprep.subr.bf16.mxu0 0
      %759 = vmatpush1.bf16.msra.mxu0 0
      %760 = vmatprep.subr.bf16.mxu0 0
      %761 = vmatpush1.bf16.msra.mxu0 0
      %762 = vmatprep.subr.bf16.mxu0 0
      %763 = vmatpush1.bf16.msra.mxu0 0
      %764 = vmatprep.subr.bf16.mxu0 0
      %765 = vmatpush1.bf16.msra.mxu0 0
      %766 = vmatprep.subr.bf16.mxu0 0
      %767 = vmatpush1.bf16.msra.mxu0 0
      %768 = vmatprep.subr.bf16.mxu0 0
      %769 = vmatpush1.bf16.msra.mxu0 0
      %770 = vmatprep.subr.bf16.mxu0 0
      %771 = vmatpush1.bf16.msra.mxu0 0
      %772 = vmatprep.subr.bf16.mxu0 0
      %773 = vmatpush1.bf16.msra.mxu0 0
      %774 = vmatprep.subr.bf16.mxu0 0
      %775 = vmatpush1.bf16.msra.mxu0 0
      %776 = vmatprep.subr.bf16.mxu0 0
      %777 = vmatpush1.bf16.msra.mxu0 0
      %778 = vmatprep.subr.bf16.mxu0 0
      %779 = vmatpush1.bf16.msra.mxu0 0
      %780 = vmatprep.subr.bf16.mxu0 0
      %781 = vmatpush1.bf16.msra.mxu0 0
      %782 = vmatprep.subr.bf16.mxu0 0
      %783 = vmatpush1.bf16.msra.mxu0 0
      %784 = vmatprep.subr.bf16.mxu0 0
      %785 = vmatpush1.bf16.msra.mxu0 0
      %786 = vmatprep.mubr.bf16.mxu0 0
      %787 = vmatmul.mubr.bf16.gmra.mrb[0].mxu0 %v752
      %v788 = vpop.f32.mrb[0].mxu0
      %v789 = vadd.f32 0.0, %v788
      %v790 = vpop.f32.mrb[0].mxu0
      %v791 = vpop.f32.mrb[0].mxu0
      %v792 = vpop.f32.mrb[0].mxu0
      %793 = vdwg.mxu0
      %v794 = vadd.f32 %v746, %v789
      %v795 = vxor.u32 %v794, 2147483648
      %v796 = vmul.f32 %v795, 1.442695
      %v797 = vpow.pop %v796
      %v798 = vadd.f32 %v797, 1.0
      %v799 = vrcp.pop %v798
      %v800 = vmul.f32 1.0, %v799
      %v801 = vtanh.pop %v794
      %v802 = vmul.f32 %v800, %v656
      %804 = vrot.lane.b32.xlu0 %v801, 64
      %v805 = vpop.permute.xlu0 %804
      %v807 = vmul.f32 %v800, %v805
      %809 = vrot.lane.b32.xlu0 %v807, 32
      %v810 = vpop.permute.xlu0 %809
      %v812 = vadd.f32 %v802, %v810
      %v813 = vtanh.pop %v812
      %815 = vrot.lane.b32.xlu0 %v813, 64
      %v816 = vpop.permute.xlu0 %815
      %v818 = vmul.f32 %v800, %v816
      %820 = vrot.lane.b32.xlu0 %v818, 32
      %v821 = vpop.permute.xlu0 %820
      %823 = vrot.lane.b32.xlu0 %v738, 64
      %v824 = vpop.permute.xlu0 %823
      %v826 = vsel %vm242, %v821, %v824
      %v827 = vpack.c.bf16 %v826, %v826
      %v829 = vsel %vm355, %v827, 0
      %831 = vmatprep.subr.bf16.mxu0 0
      %832 = vmatpush1.bf16.msra.mxu0 %v347
      %833 = vmatprep.subr.bf16.mxu0 0
      %834 = vmatpush1.bf16.msra.mxu0 %v348
      %835 = vmatprep.subr.bf16.mxu0 0
      %836 = vmatpush1.bf16.msra.mxu0 %v349
      %837 = vmatprep.subr.bf16.mxu0 0
      %838 = vmatpush1.bf16.msra.mxu0 %v350
      %839 = vmatprep.subr.bf16.mxu0 0
      %840 = vmatpush1.bf16.msra.mxu0 0
      %841 = vmatprep.subr.bf16.mxu0 0
      %842 = vmatpush1.bf16.msra.mxu0 0
      %843 = vmatprep.subr.bf16.mxu0 0
      %844 = vmatpush1.bf16.msra.mxu0 0
      %845 = vmatprep.subr.bf16.mxu0 0
      %846 = vmatpush1.bf16.msra.mxu0 0
      %847 = vmatprep.subr.bf16.mxu0 0
      %848 = vmatpush1.bf16.msra.mxu0 0
      %849 = vmatprep.subr.bf16.mxu0 0
      %850 = vmatpush1.bf16.msra.mxu0 0
      %851 = vmatprep.subr.bf16.mxu0 0
      %852 = vmatpush1.bf16.msra.mxu0 0
      %853 = vmatprep.subr.bf16.mxu0 0
      %854 = vmatpush1.bf16.msra.mxu0 0
      %855 = vmatprep.subr.bf16.mxu0 0
      %856 = vmatpush1.bf16.msra.mxu0 0
      %857 = vmatprep.subr.bf16.mxu0 0
      %858 = vmatpush1.bf16.msra.mxu0 0
      %859 = vmatprep.subr.bf16.mxu0 0
      %860 = vmatpush1.bf16.msra.mxu0 0
      %861 = vmatprep.subr.bf16.mxu0 0
      %862 = vmatpush1.bf16.msra.mxu0 0
      %863 = vmatprep.mubr.bf16.mxu0 0
      %864 = vmatmul.mubr.bf16.gmra.mrb[0].mxu0 %v829
      %v865 = vpop.f32.mrb[0].mxu0
      %v866 = vadd.f32 %v329, %v865
      %v867 = vpop.f32.mrb[0].mxu0
      %v868 = vpop.f32.mrb[0].mxu0
      %v869 = vpop.f32.mrb[0].mxu0
      %870 = vdwg.mxu0
      %v871 = vxor.u32 %v866, 2147483648
      %v872 = vmul.f32 %v871, 1.442695
      %v873 = vpow.pop %v872
      %v874 = vadd.f32 %v873, 1.0
      %v875 = vrcp.pop %v874
      %v876 = vmul.f32 1.0, %v875
      %v877 = vtanh.pop %v866
      %v878 = vmul.f32 %v876, %v732
      %880 = vrot.lane.b32.xlu0 %v877, 64
      %v881 = vpop.permute.xlu0 %880
      %v883 = vmul.f32 %v876, %v881
      %885 = vrot.lane.b32.xlu0 %v883, 32
      %v886 = vpop.permute.xlu0 %885
      %v888 = vadd.f32 %v878, %v886
      %v889 = vtanh.pop %v888
      %891 = vrot.lane.b32.xlu0 %v889, 64
      %v892 = vpop.permute.xlu0 %891
      %v894 = vmul.f32 %v876, %v892
      %896 = vrot.lane.b32.xlu0 %v894, 32
      %v897 = vpop.permute.xlu0 %896
      %s899 = scalar_lea.vmem %s199, 6
      %900 = vst.msk [vmem:[%s899] sm:$0x3] %vm431, %v897
      %s901 = scalar_lea.vmem %s193, 8
      %v902 = vld [vmem:[%s901] sm:$0x3]
      %v903 = vpack.c.bf16 %v818, %v818
      %905 = vrot.lane.b32.xlu0 %v903, 32
      %v906 = vpop.permute.xlu0 %905
      %v908 = vsel %vm242, %v906, 0
      %910 = vmatprep.subr.bf16.mxu0 0
      %911 = vmatpush1.bf16.msra.mxu0 %v238
      %912 = vmatprep.subr.bf16.mxu0 0
      %913 = vmatpush1.bf16.msra.mxu0 %v239
      %914 = vmatprep.subr.bf16.mxu0 0
      %915 = vmatpush1.bf16.msra.mxu0 0
      %916 = vmatprep.subr.bf16.mxu0 0
      %917 = vmatpush1.bf16.msra.mxu0 0
      %918 = vmatprep.subr.bf16.mxu0 0
      %919 = vmatpush1.bf16.msra.mxu0 0
      %920 = vmatprep.subr.bf16.mxu0 0
      %921 = vmatpush1.bf16.msra.mxu0 0
      %922 = vmatprep.subr.bf16.mxu0 0
      %923 = vmatpush1.bf16.msra.mxu0 0
      %924 = vmatprep.subr.bf16.mxu0 0
      %925 = vmatpush1.bf16.msra.mxu0 0
      %926 = vmatprep.subr.bf16.mxu0 0
      %927 = vmatpush1.bf16.msra.mxu0 0
      %928 = vmatprep.subr.bf16.mxu0 0
      %929 = vmatpush1.bf16.msra.mxu0 0
      %930 = vmatprep.subr.bf16.mxu0 0
      %931 = vmatpush1.bf16.msra.mxu0 0
      %932 = vmatprep.subr.bf16.mxu0 0
      %933 = vmatpush1.bf16.msra.mxu0 0
      %934 = vmatprep.subr.bf16.mxu0 0
      %935 = vmatpush1.bf16.msra.mxu0 0
      %936 = vmatprep.subr.bf16.mxu0 0
      %937 = vmatpush1.bf16.msra.mxu0 0
      %938 = vmatprep.subr.bf16.mxu0 0
      %939 = vmatpush1.bf16.msra.mxu0 0
      %940 = vmatprep.subr.bf16.mxu0 0
      %941 = vmatpush1.bf16.msra.mxu0 0
      %942 = vmatprep.mubr.bf16.mxu0 0
      %943 = vmatmul.mubr.bf16.gmra.mrb[0].mxu0 %v908
      %v944 = vpop.f32.mrb[0].mxu0
      %v945 = vadd.f32 0.0, %v944
      %v946 = vpop.f32.mrb[0].mxu0
      %v947 = vpop.f32.mrb[0].mxu0
      %v948 = vpop.f32.mrb[0].mxu0
      %949 = vdwg.mxu0
      %v950 = vadd.f32 %v902, %v945
      %v951 = vxor.u32 %v950, 2147483648
      %v952 = vmul.f32 %v951, 1.442695
      %v953 = vpow.pop %v952
      %v954 = vadd.f32 %v953, 1.0
      %v955 = vrcp.pop %v954
      %v956 = vmul.f32 1.0, %v955
      %v957 = vtanh.pop %v950
      %v958 = vmul.f32 %v956, %v812
      %960 = vrot.lane.b32.xlu0 %v957, 64
      %v961 = vpop.permute.xlu0 %960
      %v963 = vmul.f32 %v956, %v961
      %965 = vrot.lane.b32.xlu0 %v963, 32
      %v966 = vpop.permute.xlu0 %965
      %v968 = vadd.f32 %v958, %v966
      %v969 = vtanh.pop %v968
      %971 = vrot.lane.b32.xlu0 %v969, 64
      %v972 = vpop.permute.xlu0 %971
      %v974 = vmul.f32 %v956, %v972
      %976 = vrot.lane.b32.xlu0 %v974, 32
      %v977 = vpop.permute.xlu0 %976
      %979 = vrot.lane.b32.xlu0 %v894, 64
      %v980 = vpop.permute.xlu0 %979
      %v982 = vsel %vm242, %v977, %v980
      %v983 = vpack.c.bf16 %v982, %v982
      %v985 = vsel %vm355, %v983, 0
      %987 = vmatprep.subr.bf16.mxu0 0
      %988 = vmatpush1.bf16.msra.mxu0 %v347
      %989 = vmatprep.subr.bf16.mxu0 0
      %990 = vmatpush1.bf16.msra.mxu0 %v348
      %991 = vmatprep.subr.bf16.mxu0 0
      %992 = vmatpush1.bf16.msra.mxu0 %v349
      %993 = vmatprep.subr.bf16.mxu0 0
      %994 = vmatpush1.bf16.msra.mxu0 %v350
      %995 = vmatprep.subr.bf16.mxu0 0
      %996 = vmatpush1.bf16.msra.mxu0 0
      %997 = vmatprep.subr.bf16.mxu0 0
      %998 = vmatpush1.bf16.msra.mxu0 0
      %999 = vmatprep.subr.bf16.mxu0 0
      %1000 = vmatpush1.bf16.msra.mxu0 0
      %1001 = vmatprep.subr.bf16.mxu0 0
      %1002 = vmatpush1.bf16.msra.mxu0 0
      %1003 = vmatprep.subr.bf16.mxu0 0
      %1004 = vmatpush1.bf16.msra.mxu0 0
      %1005 = vmatprep.subr.bf16.mxu0 0
      %1006 = vmatpush1.bf16.msra.mxu0 0
      %1007 = vmatprep.subr.bf16.mxu0 0
      %1008 = vmatpush1.bf16.msra.mxu0 0
      %1009 = vmatprep.subr.bf16.mxu0 0
      %1010 = vmatpush1.bf16.msra.mxu0 0
      %1011 = vmatprep.subr.bf16.mxu0 0
      %1012 = vmatpush1.bf16.msra.mxu0 0
      %1013 = vmatprep.subr.bf16.mxu0 0
      %1014 = vmatpush1.bf16.msra.mxu0 0
      %1015 = vmatprep.subr.bf16.mxu0 0
      %1016 = vmatpush1.bf16.msra.mxu0 0
      %1017 = vmatprep.subr.bf16.mxu0 0
      %1018 = vmatpush1.bf16.msra.mxu0 0
      %1019 = vmatprep.mubr.bf16.mxu0 0
      %1020 = vmatmul.mubr.bf16.gmra.mrb[0].mxu0 %v985
      %v1021 = vpop.f32.mrb[0].mxu0
      %v1022 = vadd.f32 %v329, %v1021
      %v1023 = vpop.f32.mrb[0].mxu0
      %v1024 = vpop.f32.mrb[0].mxu0
      %v1025 = vpop.f32.mrb[0].mxu0
      %1026 = vdwg.mxu0
      %v1027 = vxor.u32 %v1022, 2147483648
      %v1028 = vmul.f32 %v1027, 1.442695
      %v1029 = vpow.pop %v1028
      %v1030 = vadd.f32 %v1029, 1.0
      %v1031 = vrcp.pop %v1030
      %v1032 = vmul.f32 1.0, %v1031
      %v1033 = vtanh.pop %v1022
      %v1034 = vmul.f32 %v1032, %v888
      %1036 = vrot.lane.b32.xlu0 %v1033, 64
      %v1037 = vpop.permute.xlu0 %1036
      %v1039 = vmul.f32 %v1032, %v1037
      %1041 = vrot.lane.b32.xlu0 %v1039, 32
      %v1042 = vpop.permute.xlu0 %1041
      %v1044 = vadd.f32 %v1034, %v1042
      %v1045 = vtanh.pop %v1044
      %1047 = vrot.lane.b32.xlu0 %v1045, 64
      %v1048 = vpop.permute.xlu0 %1047
      %v1050 = vmul.f32 %v1032, %v1048
      %1052 = vrot.lane.b32.xlu0 %v1050, 32
      %v1053 = vpop.permute.xlu0 %1052
      %s1055 = scalar_lea.vmem %s199, 8
      %1056 = vst.msk [vmem:[%s1055] sm:$0x3] %vm431, %v1053
      %s1057 = scalar_lea.vmem %s193, 10
      %v1058 = vld [vmem:[%s1057] sm:$0x3]
      %v1059 = vpack.c.bf16 %v974, %v974
      %1061 = vrot.lane.b32.xlu0 %v1059, 32
      %v1062 = vpop.permute.xlu0 %1061
      %v1064 = vsel %vm242, %v1062, 0
      %1066 = vmatprep.subr.bf16.mxu0 0
      %1067 = vmatpush1.bf16.msra.mxu0 %v238
      %1068 = vmatprep.subr.bf16.mxu0 0
      %1069 = vmatpush1.bf16.msra.mxu0 %v239
      %1070 = vmatprep.subr.bf16.mxu0 0
      %1071 = vmatpush1.bf16.msra.mxu0 0
      %1072 = vmatprep.subr.bf16.mxu0 0
      %1073 = vmatpush1.bf16.msra.mxu0 0
      %1074 = vmatprep.subr.bf16.mxu0 0
      %1075 = vmatpush1.bf16.msra.mxu0 0
      %1076 = vmatprep.subr.bf16.mxu0 0
      %1077 = vmatpush1.bf16.msra.mxu0 0
      %1078 = vmatprep.subr.bf16.mxu0 0
      %1079 = vmatpush1.bf16.msra.mxu0 0
      %1080 = vmatprep.subr.bf16.mxu0 0
      %1081 = vmatpush1.bf16.msra.mxu0 0
      %1082 = vmatprep.subr.bf16.mxu0 0
      %1083 = vmatpush1.bf16.msra.mxu0 0
      %1084 = vmatprep.subr.bf16.mxu0 0
      %1085 = vmatpush1.bf16.msra.mxu0 0
      %1086 = vmatprep.subr.bf16.mxu0 0
      %1087 = vmatpush1.bf16.msra.mxu0 0
      %1088 = vmatprep.subr.bf16.mxu0 0
      %1089 = vmatpush1.bf16.msra.mxu0 0
      %1090 = vmatprep.subr.bf16.mxu0 0
      %1091 = vmatpush1.bf16.msra.mxu0 0
      %1092 = vmatprep.subr.bf16.mxu0 0
      %1093 = vmatpush1.bf16.msra.mxu0 0
      %1094 = vmatprep.subr.bf16.mxu0 0
      %1095 = vmatpush1.bf16.msra.mxu0 0
      %1096 = vmatprep.subr.bf16.mxu0 0
      %1097 = vmatpush1.bf16.msra.mxu0 0
      %1098 = vmatprep.mubr.bf16.mxu0 0
      %1099 = vmatmul.mubr.bf16.gmra.mrb[0].mxu0 %v1064
      %v1100 = vpop.f32.mrb[0].mxu0
      %v1101 = vadd.f32 0.0, %v1100
      %v1102 = vpop.f32.mrb[0].mxu0
      %v1103 = vpop.f32.mrb[0].mxu0
      %v1104 = vpop.f32.mrb[0].mxu0
      %1105 = vdwg.mxu0
      %v1106 = vadd.f32 %v1058, %v1101
      %v1107 = vxor.u32 %v1106, 2147483648
      %v1108 = vmul.f32 %v1107, 1.442695
      %v1109 = vpow.pop %v1108
      %v1110 = vadd.f32 %v1109, 1.0
      %v1111 = vrcp.pop %v1110
      %v1112 = vmul.f32 1.0, %v1111
      %v1113 = vtanh.pop %v1106
      %v1114 = vmul.f32 %v1112, %v968
      %1116 = vrot.lane.b32.xlu0 %v1113, 64
      %v1117 = vpop.permute.xlu0 %1116
      %v1119 = vmul.f32 %v1112, %v1117
      %1121 = vrot.lane.b32.xlu0 %v1119, 32
      %v1122 = vpop.permute.xlu0 %1121
      %v1124 = vadd.f32 %v1114, %v1122
      %v1125 = vtanh.pop %v1124
      %1127 = vrot.lane.b32.xlu0 %v1125, 64
      %v1128 = vpop.permute.xlu0 %1127
      %v1130 = vmul.f32 %v1112, %v1128
      %1132 = vrot.lane.b32.xlu0 %v1130, 32
      %v1133 = vpop.permute.xlu0 %1132
      %1135 = vrot.lane.b32.xlu0 %v1050, 64
      %v1136 = vpop.permute.xlu0 %1135
      %v1138 = vsel %vm242, %v1133, %v1136
      %v1139 = vpack.c.bf16 %v1138, %v1138
      %v1141 = vsel %vm355, %v1139, 0
      %1143 = vmatprep.subr.bf16.mxu0 0
      %1144 = vmatpush1.bf16.msra.mxu0 %v347
      %1145 = vmatprep.subr.bf16.mxu0 0
      %1146 = vmatpush1.bf16.msra.mxu0 %v348
      %1147 = vmatprep.subr.bf16.mxu0 0
      %1148 = vmatpush1.bf16.msra.mxu0 %v349
      %1149 = vmatprep.subr.bf16.mxu0 0
      %1150 = vmatpush1.bf16.msra.mxu0 %v350
      %1151 = vmatprep.subr.bf16.mxu0 0
      %1152 = vmatpush1.bf16.msra.mxu0 0
      %1153 = vmatprep.subr.bf16.mxu0 0
      %1154 = vmatpush1.bf16.msra.mxu0 0
      %1155 = vmatprep.subr.bf16.mxu0 0
      %1156 = vmatpush1.bf16.msra.mxu0 0
      %1157 = vmatprep.subr.bf16.mxu0 0
      %1158 = vmatpush1.bf16.msra.mxu0 0
      %1159 = vmatprep.subr.bf16.mxu0 0
      %1160 = vmatpush1.bf16.msra.mxu0 0
      %1161 = vmatprep.subr.bf16.mxu0 0
      %1162 = vmatpush1.bf16.msra.mxu0 0
      %1163 = vmatprep.subr.bf16.mxu0 0
      %1164 = vmatpush1.bf16.msra.mxu0 0
      %1165 = vmatprep.subr.bf16.mxu0 0
      %1166 = vmatpush1.bf16.msra.mxu0 0
      %1167 = vmatprep.subr.bf16.mxu0 0
      %1168 = vmatpush1.bf16.msra.mxu0 0
      %1169 = vmatprep.subr.bf16.mxu0 0
      %1170 = vmatpush1.bf16.msra.mxu0 0
      %1171 = vmatprep.subr.bf16.mxu0 0
      %1172 = vmatpush1.bf16.msra.mxu0 0
      %1173 = vmatprep.subr.bf16.mxu0 0
      %1174 = vmatpush1.bf16.msra.mxu0 0
      %1175 = vmatprep.mubr.bf16.mxu0 0
      %1176 = vmatmul.mubr.bf16.gmra.mrb[0].mxu0 %v1141
      %v1177 = vpop.f32.mrb[0].mxu0
      %v1178 = vadd.f32 %v329, %v1177
      %v1179 = vpop.f32.mrb[0].mxu0
      %v1180 = vpop.f32.mrb[0].mxu0
      %v1181 = vpop.f32.mrb[0].mxu0
      %1182 = vdwg.mxu0
      %v1183 = vxor.u32 %v1178, 2147483648
      %v1184 = vmul.f32 %v1183, 1.442695
      %v1185 = vpow.pop %v1184
      %v1186 = vadd.f32 %v1185, 1.0
      %v1187 = vrcp.pop %v1186
      %v1188 = vmul.f32 1.0, %v1187
      %v1189 = vtanh.pop %v1178
      %v1190 = vmul.f32 %v1188, %v1044
      %1192 = vrot.lane.b32.xlu0 %v1189, 64
      %v1193 = vpop.permute.xlu0 %1192
      %v1195 = vmul.f32 %v1188, %v1193
      %1197 = vrot.lane.b32.xlu0 %v1195, 32
      %v1198 = vpop.permute.xlu0 %1197
      %v1200 = vadd.f32 %v1190, %v1198
      %v1201 = vtanh.pop %v1200
      %1203 = vrot.lane.b32.xlu0 %v1201, 64
      %v1204 = vpop.permute.xlu0 %1203
      %v1206 = vmul.f32 %v1188, %v1204
      %1208 = vrot.lane.b32.xlu0 %v1206, 32
      %v1209 = vpop.permute.xlu0 %1208
      %s1211 = scalar_lea.vmem %s199, 10
      %1212 = vst.msk [vmem:[%s1211] sm:$0x3] %vm431, %v1209
      %s1213 = scalar_lea.vmem %s193, 12
      %v1214 = vld [vmem:[%s1213] sm:$0x3]
      %v1215 = vpack.c.bf16 %v1130, %v1130
      %1217 = vrot.lane.b32.xlu0 %v1215, 32
      %v1218 = vpop.permute.xlu0 %1217
      %v1220 = vsel %vm242, %v1218, 0
      %1222 = vmatprep.subr.bf16.mxu0 0
      %1223 = vmatpush1.bf16.msra.mxu0 %v238
      %1224 = vmatprep.subr.bf16.mxu0 0
      %1225 = vmatpush1.bf16.msra.mxu0 %v239
      %1226 = vmatprep.subr.bf16.mxu0 0
      %1227 = vmatpush1.bf16.msra.mxu0 0
      %1228 = vmatprep.subr.bf16.mxu0 0
      %1229 = vmatpush1.bf16.msra.mxu0 0
      %1230 = vmatprep.subr.bf16.mxu0 0
      %1231 = vmatpush1.bf16.msra.mxu0 0
      %1232 = vmatprep.subr.bf16.mxu0 0
      %1233 = vmatpush1.bf16.msra.mxu0 0
      %1234 = vmatprep.subr.bf16.mxu0 0
      %1235 = vmatpush1.bf16.msra.mxu0 0
      %1236 = vmatprep.subr.bf16.mxu0 0
      %1237 = vmatpush1.bf16.msra.mxu0 0
      %1238 = vmatprep.subr.bf16.mxu0 0
      %1239 = vmatpush1.bf16.msra.mxu0 0
      %1240 = vmatprep.subr.bf16.mxu0 0
      %1241 = vmatpush1.bf16.msra.mxu0 0
      %1242 = vmatprep.subr.bf16.mxu0 0
      %1243 = vmatpush1.bf16.msra.mxu0 0
      %1244 = vmatprep.subr.bf16.mxu0 0
      %1245 = vmatpush1.bf16.msra.mxu0 0
      %1246 = vmatprep.subr.bf16.mxu0 0
      %1247 = vmatpush1.bf16.msra.mxu0 0
      %1248 = vmatprep.subr.bf16.mxu0 0
      %1249 = vmatpush1.bf16.msra.mxu0 0
      %1250 = vmatprep.subr.bf16.mxu0 0
      %1251 = vmatpush1.bf16.msra.mxu0 0
      %1252 = vmatprep.subr.bf16.mxu0 0
      %1253 = vmatpush1.bf16.msra.mxu0 0
      %1254 = vmatprep.mubr.bf16.mxu0 0
      %1255 = vmatmul.mubr.bf16.gmra.mrb[0].mxu0 %v1220
      %v1256 = vpop.f32.mrb[0].mxu0
      %v1257 = vadd.f32 0.0, %v1256
      %v1258 = vpop.f32.mrb[0].mxu0
      %v1259 = vpop.f32.mrb[0].mxu0
      %v1260 = vpop.f32.mrb[0].mxu0
      %1261 = vdwg.mxu0
      %v1262 = vadd.f32 %v1214, %v1257
      %v1263 = vxor.u32 %v1262, 2147483648
      %v1264 = vmul.f32 %v1263, 1.442695
      %v1265 = vpow.pop %v1264
      %v1266 = vadd.f32 %v1265, 1.0
      %v1267 = vrcp.pop %v1266
      %v1268 = vmul.f32 1.0, %v1267
      %v1269 = vtanh.pop %v1262
      %v1270 = vmul.f32 %v1268, %v1124
      %1272 = vrot.lane.b32.xlu0 %v1269, 64
      %v1273 = vpop.permute.xlu0 %1272
      %v1275 = vmul.f32 %v1268, %v1273
      %1277 = vrot.lane.b32.xlu0 %v1275, 32
      %v1278 = vpop.permute.xlu0 %1277
      %v1280 = vadd.f32 %v1270, %v1278
      %v1281 = vtanh.pop %v1280
      %1283 = vrot.lane.b32.xlu0 %v1281, 64
      %v1284 = vpop.permute.xlu0 %1283
      %v1286 = vmul.f32 %v1268, %v1284
      %1288 = vrot.lane.b32.xlu0 %v1286, 32
      %v1289 = vpop.permute.xlu0 %1288
      %1291 = vrot.lane.b32.xlu0 %v1206, 64
      %v1292 = vpop.permute.xlu0 %1291
      %v1294 = vsel %vm242, %v1289, %v1292
      %v1295 = vpack.c.bf16 %v1294, %v1294
      %v1297 = vsel %vm355, %v1295, 0
      %1299 = vmatprep.subr.bf16.mxu0 0
      %1300 = vmatpush1.bf16.msra.mxu0 %v347
      %1301 = vmatprep.subr.bf16.mxu0 0
      %1302 = vmatpush1.bf16.msra.mxu0 %v348
      %1303 = vmatprep.subr.bf16.mxu0 0
      %1304 = vmatpush1.bf16.msra.mxu0 %v349
      %1305 = vmatprep.subr.bf16.mxu0 0
      %1306 = vmatpush1.bf16.msra.mxu0 %v350
      %1307 = vmatprep.subr.bf16.mxu0 0
      %1308 = vmatpush1.bf16.msra.mxu0 0
      %1309 = vmatprep.subr.bf16.mxu0 0
      %1310 = vmatpush1.bf16.msra.mxu0 0
      %1311 = vmatprep.subr.bf16.mxu0 0
      %1312 = vmatpush1.bf16.msra.mxu0 0
      %1313 = vmatprep.subr.bf16.mxu0 0
      %1314 = vmatpush1.bf16.msra.mxu0 0
      %1315 = vmatprep.subr.bf16.mxu0 0
      %1316 = vmatpush1.bf16.msra.mxu0 0
      %1317 = vmatprep.subr.bf16.mxu0 0
      %1318 = vmatpush1.bf16.msra.mxu0 0
      %1319 = vmatprep.subr.bf16.mxu0 0
      %1320 = vmatpush1.bf16.msra.mxu0 0
      %1321 = vmatprep.subr.bf16.mxu0 0
      %1322 = vmatpush1.bf16.msra.mxu0 0
      %1323 = vmatprep.subr.bf16.mxu0 0
      %1324 = vmatpush1.bf16.msra.mxu0 0
      %1325 = vmatprep.subr.bf16.mxu0 0
      %1326 = vmatpush1.bf16.msra.mxu0 0
      %1327 = vmatprep.subr.bf16.mxu0 0
      %1328 = vmatpush1.bf16.msra.mxu0 0
      %1329 = vmatprep.subr.bf16.mxu0 0
      %1330 = vmatpush1.bf16.msra.mxu0 0
      %1331 = vmatprep.mubr.bf16.mxu0 0
      %1332 = vmatmul.mubr.bf16.gmra.mrb[0].mxu0 %v1297
      %v1333 = vpop.f32.mrb[0].mxu0
      %v1334 = vadd.f32 %v329, %v1333
      %v1335 = vpop.f32.mrb[0].mxu0
      %v1336 = vpop.f32.mrb[0].mxu0
      %v1337 = vpop.f32.mrb[0].mxu0
      %1338 = vdwg.mxu0
      %v1339 = vxor.u32 %v1334, 2147483648
      %v1340 = vmul.f32 %v1339, 1.442695
      %v1341 = vpow.pop %v1340
      %v1342 = vadd.f32 %v1341, 1.0
      %v1343 = vrcp.pop %v1342
      %v1344 = vmul.f32 1.0, %v1343
      %v1345 = vtanh.pop %v1334
      %v1346 = vmul.f32 %v1344, %v1200
      %1348 = vrot.lane.b32.xlu0 %v1345, 64
      %v1349 = vpop.permute.xlu0 %1348
      %v1351 = vmul.f32 %v1344, %v1349
      %1353 = vrot.lane.b32.xlu0 %v1351, 32
      %v1354 = vpop.permute.xlu0 %1353
      %v1356 = vadd.f32 %v1346, %v1354
      %v1357 = vtanh.pop %v1356
      %1359 = vrot.lane.b32.xlu0 %v1357, 64
      %v1360 = vpop.permute.xlu0 %1359
      %v1362 = vmul.f32 %v1344, %v1360
      %1364 = vrot.lane.b32.xlu0 %v1362, 32
      %v1365 = vpop.permute.xlu0 %1364
      %s1367 = scalar_lea.vmem %s199, 12
      %1368 = vst.msk [vmem:[%s1367] sm:$0x3] %vm431, %v1365
      %s1369 = scalar_lea.vmem %s193, 14
      %v1370 = vld [vmem:[%s1369] sm:$0x3]
      %v1371 = vpack.c.bf16 %v1286, %v1286
      %1373 = vrot.lane.b32.xlu0 %v1371, 32
      %v1374 = vpop.permute.xlu0 %1373
      %v1376 = vsel %vm242, %v1374, 0
      %1378 = vmatprep.subr.bf16.mxu0 0
      %1379 = vmatpush1.bf16.msra.mxu0 %v238
      %1380 = vmatprep.subr.bf16.mxu0 0
      %1381 = vmatpush1.bf16.msra.mxu0 %v239
      %1382 = vmatprep.subr.bf16.mxu0 0
      %1383 = vmatpush1.bf16.msra.mxu0 0
      %1384 = vmatprep.subr.bf16.mxu0 0
      %1385 = vmatpush1.bf16.msra.mxu0 0
      %1386 = vmatprep.subr.bf16.mxu0 0
      %1387 = vmatpush1.bf16.msra.mxu0 0
      %1388 = vmatprep.subr.bf16.mxu0 0
      %1389 = vmatpush1.bf16.msra.mxu0 0
      %1390 = vmatprep.subr.bf16.mxu0 0
      %1391 = vmatpush1.bf16.msra.mxu0 0
      %1392 = vmatprep.subr.bf16.mxu0 0
      %1393 = vmatpush1.bf16.msra.mxu0 0
      %1394 = vmatprep.subr.bf16.mxu0 0
      %1395 = vmatpush1.bf16.msra.mxu0 0
      %1396 = vmatprep.subr.bf16.mxu0 0
      %1397 = vmatpush1.bf16.msra.mxu0 0
      %1398 = vmatprep.subr.bf16.mxu0 0
      %1399 = vmatpush1.bf16.msra.mxu0 0
      %1400 = vmatprep.subr.bf16.mxu0 0
      %1401 = vmatpush1.bf16.msra.mxu0 0
      %1402 = vmatprep.subr.bf16.mxu0 0
      %1403 = vmatpush1.bf16.msra.mxu0 0
      %1404 = vmatprep.subr.bf16.mxu0 0
      %1405 = vmatpush1.bf16.msra.mxu0 0
      %1406 = vmatprep.subr.bf16.mxu0 0
      %1407 = vmatpush1.bf16.msra.mxu0 0
      %1408 = vmatprep.subr.bf16.mxu0 0
      %1409 = vmatpush1.bf16.msra.mxu0 0
      %1410 = vmatprep.mubr.bf16.mxu0 0
      %1411 = vmatmul.mubr.bf16.gmra.mrb[0].mxu0 %v1376
      %v1412 = vpop.f32.mrb[0].mxu0
      %v1413 = vadd.f32 0.0, %v1412
      %v1414 = vpop.f32.mrb[0].mxu0
      %v1415 = vpop.f32.mrb[0].mxu0
      %v1416 = vpop.f32.mrb[0].mxu0
      %1417 = vdwg.mxu0
      %v1418 = vadd.f32 %v1370, %v1413
      %v1419 = vxor.u32 %v1418, 2147483648
      %v1420 = vmul.f32 %v1419, 1.442695
      %v1421 = vpow.pop %v1420
      %v1422 = vadd.f32 %v1421, 1.0
      %v1423 = vrcp.pop %v1422
      %v1424 = vmul.f32 1.0, %v1423
      %v1425 = vtanh.pop %v1418
      %v1426 = vmul.f32 %v1424, %v1280
      %1428 = vrot.lane.b32.xlu0 %v1425, 64
      %v1429 = vpop.permute.xlu0 %1428
      %v1431 = vmul.f32 %v1424, %v1429
      %1433 = vrot.lane.b32.xlu0 %v1431, 32
      %v1434 = vpop.permute.xlu0 %1433
      %v1436 = vadd.f32 %v1426, %v1434
      %v1437 = vtanh.pop %v1436
      %1439 = vrot.lane.b32.xlu0 %v1437, 64
      %v1440 = vpop.permute.xlu0 %1439
      %v1442 = vmul.f32 %v1424, %v1440
      %1444 = vrot.lane.b32.xlu0 %v1442, 32
      %v1445 = vpop.permute.xlu0 %1444
      %1447 = vrot.lane.b32.xlu0 %v1362, 64
      %v1448 = vpop.permute.xlu0 %1447
      %v1450 = vsel %vm242, %v1445, %v1448
      %v1451 = vpack.c.bf16 %v1450, %v1450
      %v1453 = vsel %vm355, %v1451, 0
      %1455 = vmatprep.subr.bf16.mxu0 0
      %1456 = vmatpush1.bf16.msra.mxu0 %v347
      %1457 = vmatprep.subr.bf16.mxu0 0
      %1458 = vmatpush1.bf16.msra.mxu0 %v348
      %1459 = vmatprep.subr.bf16.mxu0 0
      %1460 = vmatpush1.bf16.msra.mxu0 %v349
      %1461 = vmatprep.subr.bf16.mxu0 0
      %1462 = vmatpush1.bf16.msra.mxu0 %v350
      %1463 = vmatprep.subr.bf16.mxu0 0
      %1464 = vmatpush1.bf16.msra.mxu0 0
      %1465 = vmatprep.subr.bf16.mxu0 0
      %1466 = vmatpush1.bf16.msra.mxu0 0
      %1467 = vmatprep.subr.bf16.mxu0 0
      %1468 = vmatpush1.bf16.msra.mxu0 0
      %1469 = vmatprep.subr.bf16.mxu0 0
      %1470 = vmatpush1.bf16.msra.mxu0 0
      %1471 = vmatprep.subr.bf16.mxu0 0
      %1472 = vmatpush1.bf16.msra.mxu0 0
      %1473 = vmatprep.subr.bf16.mxu0 0
      %1474 = vmatpush1.bf16.msra.mxu0 0
      %1475 = vmatprep.subr.bf16.mxu0 0
      %1476 = vmatpush1.bf16.msra.mxu0 0
      %1477 = vmatprep.subr.bf16.mxu0 0
      %1478 = vmatpush1.bf16.msra.mxu0 0
      %1479 = vmatprep.subr.bf16.mxu0 0
      %1480 = vmatpush1.bf16.msra.mxu0 0
      %1481 = vmatprep.subr.bf16.mxu0 0
      %1482 = vmatpush1.bf16.msra.mxu0 0
      %1483 = vmatprep.subr.bf16.mxu0 0
      %1484 = vmatpush1.bf16.msra.mxu0 0
      %1485 = vmatprep.subr.bf16.mxu0 0
      %1486 = vmatpush1.bf16.msra.mxu0 0
      %1487 = vmatprep.mubr.bf16.mxu0 0
      %1488 = vmatmul.mubr.bf16.gmra.mrb[0].mxu0 %v1453
      %v1489 = vpop.f32.mrb[0].mxu0
      %v1490 = vadd.f32 %v329, %v1489
      %v1491 = vpop.f32.mrb[0].mxu0
      %v1492 = vpop.f32.mrb[0].mxu0
      %v1493 = vpop.f32.mrb[0].mxu0
      %1494 = vdwg.mxu0
      %v1495 = vxor.u32 %v1490, 2147483648
      %v1496 = vmul.f32 %v1495, 1.442695
      %v1497 = vpow.pop %v1496
      %v1498 = vadd.f32 %v1497, 1.0
      %v1499 = vrcp.pop %v1498
      %v1500 = vmul.f32 1.0, %v1499
      %v1501 = vtanh.pop %v1490
      %v1502 = vmul.f32 %v1500, %v1356
      %1504 = vrot.lane.b32.xlu0 %v1501, 64
      %v1505 = vpop.permute.xlu0 %1504
      %v1507 = vmul.f32 %v1500, %v1505
      %1509 = vrot.lane.b32.xlu0 %v1507, 32
      %v1510 = vpop.permute.xlu0 %1509
      %v1512 = vadd.f32 %v1502, %v1510
      %v1513 = vtanh.pop %v1512
      %1515 = vrot.lane.b32.xlu0 %v1513, 64
      %v1516 = vpop.permute.xlu0 %1515
      %v1518 = vmul.f32 %v1500, %v1516
      %1520 = vrot.lane.b32.xlu0 %v1518, 32
      %v1521 = vpop.permute.xlu0 %1520
      %s1523 = scalar_lea.vmem %s199, 14
      %1524 = vst.msk [vmem:[%s1523] sm:$0x3] %vm431, %v1521
      %1525 = vst.msk [vmem:[#allocation2] sm:$0x3] %vm431, %v1445
      %1527 = vrot.lane.b32.xlu0 %v1436, 96
      %v1528 = vpop.permute.xlu0 %1527
      %1530 = vst.msk [vmem:[#allocation3] sm:$0x3] %vm431, %v1528
      %1531 = vst.msk [vmem:[#allocation4] sm:$0x3] %vm431, %v1521
      %1533 = vrot.lane.b32.xlu0 %v1512, 96
      %v1534 = vpop.permute.xlu0 %1533
      %1536 = vst.msk [vmem:[#allocation5] sm:$0x3] %vm431, %v1534
      %s1537 = smul.u32 8, %s15
      %p1538 = scmp.lt.s32.totalorder %s1537, 23
      %s1539 = scalar_select %p1538, %s1537, 23
      %s1540 = smul.addr %s1539, 2
      %s1541 = scalar_lea.vmem %s4, %s1540
      // Predicated region
      $region41: #{discriminator_forward.5} parent=35 // pred_check
        %p1542 = pneg %p122
      $region42: #{discriminator_forward.5} parent=35 // pred_check_branch
        %1544 = sbr.rel (%p1542) target = $region44
      $region43: #{discriminator_forward.5} parent=35 // pred_region
        %s1545 = smul.u32 8, %s15
      $region44: #{discriminator_forward.5} parent=35 // pred_fallthru
        _
    $region36: #{discriminator_forward.5} parent=5 // pred_fallthru
      _
    %p1546 = scmp.le.s32.totalorder 2, %s10
    // Predicated region
    $region45: #{discriminator_forward.5} parent=5 // pred_check
      %p1547 = pneg %p1546
    $region46: #{discriminator_forward.5} parent=5 // pred_check_branch
      %1549 = sbr.rel (%p1547) target = $region48
    $region47: #{discriminator_forward.5} parent=5 // pred_region
      %s1550 = ssub.s32 %s10, 2
      // Predicated region
      $region49: #{discriminator_forward.5} parent=47 // pred_check
        %p1551 = pneg %p128
      $region50: #{discriminator_forward.5} parent=47 // pred_check_branch
        %1553 = sbr.rel (%p1551) target = $region52
      $region51: #{discriminator_forward.5} parent=47 // pred_region
        %s1554 = smul.u32 8, %s16
        %p1555 = scmp.lt.s32.totalorder %s1554, 23
        %s1556 = scalar_select %p1555, %s1554, 23
        %s1557 = smul.addr %s1556, 2
        %s1558 = scalar_lea.vmem %s4, %s1557
      $region52: #{discriminator_forward.5} parent=47 // pred_fallthru
        _
    $region48: #{discriminator_forward.5} parent=5 // pred_fallthru
      _
  $region6: #{discriminator_forward.5} parent=0 // loop_footer
    %s14 = sadd.s32 1, %s10
  $region7: #{discriminator_forward.5} parent=0 // loop_footer_branch
    %9 = sbr.rel target = $region3
  $region8: #{discriminator_forward.5} parent=0 // loop_exit
    _

// kernel: discriminator_forward.7
$region0: #{discriminator_forward.7}
  #allocation0 [shape = 'u32[]', space=smem, size = 0x4, offset = 0x4, fixed_abs, tag = 'smem constant byte address 0x4 - core index']
  #allocation1 [shape = 'u32[144,128]{1,0:T(1,128)}', space=vmem, size = 0x12000, scoped, tag = 'internal scratch']
  #allocation2 [shape = 'f32[1,1]{1,0:T(1,128)S(1)}', space=vmem, size = 0x200, scoped, tag = 'scoped memory for discriminator_forward.7']
  #allocation3 [shape = 'f32[1,1]{1,0:T(1,128)S(1)}', space=vmem, size = 0x200, scoped, tag = 'scoped memory for discriminator_forward.7']
  %s0 = inlined_call_operand.vmem [shape: bf16[4,24], index: 0, kind: input, shape index: {}]
  %s1 = inlined_call_operand.vmem [shape: bf16[24,128], index: 1, kind: input, shape index: {}]
  %s2 = inlined_call_operand.vmem [shape: f32[4,1], index: 2, kind: input, shape index: {}]
  %s3 = inlined_call_operand.<no memory space> [shape: f32[1,1], index: 3, kind: input, shape index: {}]
  %s4 = inlined_call_operand.vmem [shape: f32[4,128], index: 4, kind: input, shape index: {}]
  %s5 = inlined_call_operand.<no memory space> [shape: f32[1,1], index: 5, kind: input, shape index: {}]
  %s6 = inlined_call_operand.vmem [shape: f32[2,1], index: 6, kind: output, shape index: {}]
  %s7 = sld [smem:[#allocation0]]
  $region34: #{discriminator_forward.7} parent=0
    _
  %s9 = ssub.s32 1, %s7
  %s10 = scalar_select 0, %s9, %s7
  %v11 = vstv %s3
  %12 = vst [vmem:[#allocation2] sm:$0x1] %v11
  %v13 = vstv %s5
  %14 = vst [vmem:[#allocation3] sm:$0x1] %v13
  // Predicated region
  $region2: #{discriminator_forward.7} parent=0 // pred_check
    _
  $region3: #{discriminator_forward.7} parent=0 // pred_check_branch
    %16 = sbr.rel (0) target = $region5
  $region4: #{discriminator_forward.7} parent=0 // pred_region
    _
  $region5: #{discriminator_forward.7} parent=0 // pred_fallthru
    _
  // Predicated region
  $region6: #{discriminator_forward.7} parent=0 // pred_check
    _
  $region7: #{discriminator_forward.7} parent=0 // pred_check_branch
    %18 = sbr.rel (0) target = $region9
  $region8: #{discriminator_forward.7} parent=0 // pred_region
    _
  $region9: #{discriminator_forward.7} parent=0 // pred_fallthru
    _
  // Predicated region
  $region10: #{discriminator_forward.7} parent=0 // pred_check
    _
  $region11: #{discriminator_forward.7} parent=0 // pred_check_branch
    %20 = sbr.rel (0) target = $region13
  $region12: #{discriminator_forward.7} parent=0 // pred_region
    _
  $region13: #{discriminator_forward.7} parent=0 // pred_fallthru
    _
  // Predicated region
  $region14: #{discriminator_forward.7} parent=0 // pred_check
    _
  $region15: #{discriminator_forward.7} parent=0 // pred_check_branch
    %22 = sbr.rel (0) target = $region17
  $region16: #{discriminator_forward.7} parent=0 // pred_region
    _
  $region17: #{discriminator_forward.7} parent=0 // pred_fallthru
    _
  // Predicated region
  $region18: #{discriminator_forward.7} parent=0 // pred_check
    _
  $region19: #{discriminator_forward.7} parent=0 // pred_check_branch
    %24 = sbr.rel (0) target = $region21
  $region20: #{discriminator_forward.7} parent=0 // pred_region
    _
  $region21: #{discriminator_forward.7} parent=0 // pred_fallthru
    _
  // Predicated region
  $region22: #{discriminator_forward.7} parent=0 // pred_check
    _
  $region23: #{discriminator_forward.7} parent=0 // pred_check_branch
    %26 = sbr.rel (0) target = $region25
  $region24: #{discriminator_forward.7} parent=0 // pred_region
    _
  $region25: #{discriminator_forward.7} parent=0 // pred_fallthru
    _
  %v28 = vld [vmem:[%s0] sm:$0x3]
  %v29 = vld [vmem:[%s1] sm:$0xf]
  %v30 = vld [vmem:[%s1 + $0x4] sm:$0xf]
  %v31 = vld [vmem:[%s1 + $0x8] sm:$0xf]
  %v32 = vld [vmem:[%s2] sm:$0xf]
  %34 = vset.pattern.permute.xlu0 0
  %35 = vperm.xlu0 %34, %v32
  %v36 = vpop.permute.xlu0 %35
  %v41 = vunpack.c.l.b16 %v29
  %v42 = vunpack.c.l.b16 %v30
  %v43 = vunpack.c.l.b16 %v31
  %v44 = vpack.c.b16 %v42, %v41
  %v45 = vpack.c.b16 %v43, %v43
  %vm47 = vcmask 195584
  %v49 = vsel %vm47, %v28, 0
  %vm51 = vcmask 1043456
  %v53 = vsel %vm51, %v45, 0
  %55 = vmatprep.subr.bf16.mxu0 0
  %56 = vmatpush1.bf16.msra.mxu0 %v44
  %57 = vmatprep.subr.bf16.mxu0 0
  %58 = vmatpush1.bf16.msra.mxu0 %v53
  %59 = vmatprep.subr.bf16.mxu0 0
  %60 = vmatpush1.bf16.msra.mxu0 0
  %61 = vmatprep.subr.bf16.mxu0 0
  %62 = vmatpush1.bf16.msra.mxu0 0
  %63 = vmatprep.subr.bf16.mxu0 0
  %64 = vmatpush1.bf16.msra.mxu0 0
  %65 = vmatprep.subr.bf16.mxu0 0
  %66 = vmatpush1.bf16.msra.mxu0 0
  %67 = vmatprep.subr.bf16.mxu0 0
  %68 = vmatpush1.bf16.msra.mxu0 0
  %69 = vmatprep.subr.bf16.mxu0 0
  %70 = vmatpush1.bf16.msra.mxu0 0
  %71 = vmatprep.subr.bf16.mxu0 0
  %72 = vmatpush1.bf16.msra.mxu0 0
  %73 = vmatprep.subr.bf16.mxu0 0
  %74 = vmatpush1.bf16.msra.mxu0 0
  %75 = vmatprep.subr.bf16.mxu0 0
  %76 = vmatpush1.bf16.msra.mxu0 0
  %77 = vmatprep.subr.bf16.mxu0 0
  %78 = vmatpush1.bf16.msra.mxu0 0
  %79 = vmatprep.subr.bf16.mxu0 0
  %80 = vmatpush1.bf16.msra.mxu0 0
  %81 = vmatprep.subr.bf16.mxu0 0
  %82 = vmatpush1.bf16.msra.mxu0 0
  %83 = vmatprep.subr.bf16.mxu0 0
  %84 = vmatpush1.bf16.msra.mxu0 0
  %85 = vmatprep.subr.bf16.mxu0 0
  %86 = vmatpush1.bf16.msra.mxu0 0
  %87 = vmatprep.mubr.bf16.mxu0 0
  %88 = vmatmul.mubr.bf16.gmra.mrb[0].mxu0 %v49
  %v89 = vpop.f32.mrb[0].mxu0
  %v90 = vadd.f32 %v36, %v89
  %v91 = vpop.f32.mrb[0].mxu0
  %v92 = vpop.f32.mrb[0].mxu0
  %v93 = vpop.f32.mrb[0].mxu0
  %94 = vdwg.mxu0
  %v95 = vmax.f32 %v90, 0.0
  %v96 = vmax.f32 %v95, 0.0
  %v97 = vld [vmem:[#allocation2] sm:$0x1]
  %v98 = vmin.f32 %v95, 0.0
  %v100 = vlaneseq
  %v101 = vshrl.u32 %v100, 7
  %v102 = vsub.s32 0, %v101
  %v103 = vrot.slane %v97, %v102
  %104 = vset.pattern.permute.xlu0 0
  %105 = vperm.xlu0 %104, %v103
  %v106 = vpop.permute.xlu0 %105
  %v108 = vmul.f32 %v106, %v98
  %v109 = vadd.f32 %v96, %v108
  %v110 = vld [vmem:[%s4] sm:$0xf]
  %v111 = vmul.f32 %v109, %v110
  %vm112 = vcmask 257024
  %v113 = vsel %vm112, %v111, 0.0
  %114 = vadd.xlane.f32.xlu0 %v113
  %v115 = vpop.xlane.xlu0 %114
  %v116 = vrot.slane %v115, 4
  %v117 = vadd.f32 %v115, %v116
  %v118 = vrot.slane %v117, 2
  %v119 = vadd.f32 %v117, %v118
  %v120 = vrot.slane %v119, 1
  %v121 = vadd.f32 %v119, %v120
  %s122 = vtos %v121
  %v123 = vstv %s122
  %125 = vrot.lane.b32.xlu0 %v111, 96
  %v126 = vpop.permute.xlu0 %125
  %v128 = vsel %vm112, %v126, 0.0
  %129 = vadd.xlane.f32.xlu0 %v128
  %v130 = vpop.xlane.xlu0 %129
  %v131 = vrot.slane %v130, 4
  %v132 = vadd.f32 %v130, %v131
  %v133 = vrot.slane %v132, 2
  %v134 = vadd.f32 %v132, %v133
  %v135 = vrot.slane %v134, 1
  %v136 = vadd.f32 %v134, %v135
  %s137 = vtos %v136
  %v138 = vstv %s137
  %vm139 = vcmask 1040384
  %v140 = vsel %vm139, %v123, %v138
  %v141 = vld [vmem:[#allocation3] sm:$0x1]
  %v143 = vlaneseq
  %v144 = vshrl.u32 %v143, 7
  %v145 = vsub.s32 0, %v144
  %v146 = vrot.slane %v141, %v145
  %v148 = vadd.f32 %v140, %v146
  %v149 = vxor.u32 %v148, 2147483648
  %v150 = vmul.f32 %v149, 1.442695
  %v151 = vpow.pop %v150
  %v152 = vadd.f32 %v151, 1.0
  %v153 = vrcp.pop %v152
  %v154 = vmul.f32 1.0, %v153
  %vm155 = vcmask 1024
  %156 = vst.msk [vmem:[%s6] sm:$0x3] %vm155, %v154
  // Predicated region
  $region26: #{discriminator_forward.7} parent=0 // pred_check
    _
  $region27: #{discriminator_forward.7} parent=0 // pred_check_branch
    %158 = sbr.rel (0) target = $region29
  $region28: #{discriminator_forward.7} parent=0 // pred_region
    _
  $region29: #{discriminator_forward.7} parent=0 // pred_fallthru
    _
  // Predicated region
  $region30: #{discriminator_forward.7} parent=0 // pred_check
    _
  $region31: #{discriminator_forward.7} parent=0 // pred_check_branch
    %160 = sbr.rel (0) target = $region33
  $region32: #{discriminator_forward.7} parent=0 // pred_region
    _
  $region33: #{discriminator_forward.7} parent=0 // pred_fallthru
    _

</llo_original>
